<compile_context>
chip_gen: v7x
topology: tpu7x:2x2x1
jax: 0.10.0
libtpu: 0.0.40
codegen_flags: <defaults>
</compile_context>

<pallas_src>
import functools
import math

import jax
import jax.numpy as jnp
from jax.experimental import pallas as pl
from jax.experimental.pallas import tpu as pltpu


def _round_up(x, m):
    return ((x + m - 1) // m) * m


# ---------------------------------------------------------------------------
# Kernel: one (row-tile i, visit-step jj) of the streaming masked softmax.
# ---------------------------------------------------------------------------
def _gt_kernel(cnt_ref, ord_ref, xq_ref, xk_ref, w_ref, b_ref, adj_ref,
               sel_ref, gamma_ref, beta_ref, o_ref,
               q_scr, k_scr, v_scr, skip_scr, m_scr, l_scr, acc_scr,
               *, heads, c, cp, hcp, hcc, inv_hc, scale, compute_dtype):
    i = pl.program_id(0)
    jj = pl.program_id(1)
    nj = pl.num_programs(1)
    big = jnp.float32(1e30)
    neg_big = jnp.float32(-1e30)
    del ord_ref  # only used inside the index_maps (scalar prefetch)

    # ---- first visit step of this row tile: project queries + skip, reset state
    @pl.when(jj == 0)
    def _init():
        xq = xq_ref[...]                                          # [TN, FIN]
        q = jnp.dot(xq, w_ref[:, 0:hcp],
                    preferred_element_type=jnp.float32) + b_ref[:, 0:hcp]
        skip = (jnp.dot(xq, w_ref[:, 3 * hcp:3 * hcp + hcc],
                        preferred_element_type=jnp.float32)
                + b_ref[:, 3 * hcp:3 * hcp + hcc])                # compact HCC
        q_scr[...] = (q * scale).astype(compute_dtype)  # fold 1/sqrt(C) into q
        skip_scr[...] = skip
        m_scr[...] = jnp.full(m_scr.shape, neg_big, jnp.float32)
        l_scr[...] = jnp.zeros(l_scr.shape, jnp.float32)
        acc_scr[...] = jnp.zeros(acc_scr.shape, jnp.float32)

    # ---- streaming step: only run for key tiles that actually contain edges
    @pl.when(jj < cnt_ref[i])
    def _step():
        xk = xk_ref[...]                                          # [TK, FIN]
        # K/V projections go straight into VMEM scratch (small live footprint).
        k_scr[...] = (jnp.dot(xk, w_ref[:, hcp:2 * hcp],
                              preferred_element_type=jnp.float32)
                      + b_ref[:, hcp:2 * hcp]).astype(compute_dtype)
        v_scr[...] = (jnp.dot(xk, w_ref[:, 2 * hcp:3 * hcp],
                              preferred_element_type=jnp.float32)
                      + b_ref[:, 2 * hcp:3 * hcp]).astype(compute_dtype)

        adj_f = adj_ref[...].astype(jnp.float32)                  # [TN, TK]
        bias = (adj_f - 1.0) * big          # 0 on edges, -1e30 on non-edges
        has_edge = adj_f > 0.5              # kept only for the empty-row case

        for h in range(heads):              # static unroll, 128-aligned slabs
            lo = h * cp
            hi = lo + cp
            qh = q_scr[:, lo:hi]                                  # [TN, CP]
            kh = k_scr[:, lo:hi]                                  # [TK, CP]
            vh = v_scr[:, lo:hi]                                  # [TK, CP]
            # scores: contract last dims (no transpose), add the mask bias once
            s = jax.lax.dot_general(qh, kh, (((1,), (1,)), ((), ())),
                                    preferred_element_type=jnp.float32) + bias
            m_old = m_scr[h]                                      # [TN, 1]
            m_new = jnp.maximum(m_old, jnp.max(s, axis=-1, keepdims=True))
            corr = jnp.exp(m_old - m_new)                         # finite always
            p = jnp.where(has_edge, jnp.exp(s - m_new), 0.0)      # [TN, TK]
            l_scr[h] = corr * l_scr[h] + jnp.sum(p, axis=-1, keepdims=True)
            acc_scr[h] = corr * acc_scr[h] + jnp.dot(
                p.astype(compute_dtype), vh, preferred_element_type=jnp.float32)
            m_scr[h] = m_new

    # ---- last step: normalize, compact heads, skip, GELU, LayerNorm, store
    @pl.when(jj == nj - 1)
    def _fin():
        parts = []
        for h in range(heads):
            d = l_scr[h] + 1e-16                      # matches PyG softmax eps
            inv_l = pl.reciprocal(d, approx=True)     # EUP slot
            inv_l = inv_l * (2.0 - d * inv_l)         # one Newton step -> ~f32
            parts.append(acc_scr[h] * inv_l)          # [TN, CP]
        att = jnp.concatenate(parts, axis=-1) if heads > 1 else parts[0]
        if cp != c:
            # Compact per-head lane padding [TN, H*CP] -> [TN, HCC] with one
            # tiny, fully lane-aligned selection matmul (MXU has slack here).
            att = jnp.dot(att.astype(compute_dtype), sel_ref[...],
                          preferred_element_type=jnp.float32)
        out = att + skip_scr[...]                                  # [TN, HCC]
        # exact (erf) GELU, as F.gelu default
        out = 0.5 * out * (1.0 + jax.lax.erf(out * jnp.float32(0.7071067811865476)))
        # LayerNorm over the HC *valid* features; padded lanes are exactly 0,
        # so sum / sum-of-squares only see real features (E[x^2]-E[x]^2 form).
        mean = jnp.sum(out, axis=-1, keepdims=True) * inv_hc
        ex2 = jnp.sum(out * out, axis=-1, keepdims=True) * inv_hc
        var = jnp.maximum(ex2 - mean * mean, 0.0)
        normed = (out - mean) * jax.lax.rsqrt(var + 1e-5)
        o_ref[...] = (normed * gamma_ref[...] + beta_ref[...]).astype(o_ref.dtype)


# ---------------------------------------------------------------------------
# Wrapper: pad / pack operands, build the visit-order table, launch, un-pad.
# ---------------------------------------------------------------------------
def graph_transformer_layer(x, edge_index, params, *, heads, c_per_head,
                            compute_dtype=jnp.bfloat16, out_dtype=None,
                            tile_n=256, tile_k=512):
    n, fin = x.shape
    c = c_per_head
    hc = heads * c
    cp = _round_up(c, 128)          # per-head width padded to a 128-lane slab
    hcp = heads * cp                # padded Q/K/V width
    hcc = _round_up(hc, 128)        # compact skip/output width
    out_dtype = compute_dtype if out_dtype is None else out_dtype
    f32 = jnp.float32

    # Clamp tiles for small graphs; keep multiples of 128.
    # (v7x: keep np_//tile_n >= 2 and even so the "parallel" axis shards across
    #  both TensorCores; v5e: tile_n=128 already fills its 128x128 MXU.)
    n128 = _round_up(n, 128)
    tile_n = min(tile_n, n128)
    tile_k = min(tile_k, n128)
    np_ = _round_up(n, (tile_n * tile_k) // math.gcd(tile_n, tile_k))
    gi, gj = np_ // tile_n, np_ // tile_k

    def pad_heads(w):
        # [*, H*C] -> [*, H*CP]; head h's C real columns land at h*CP..h*CP+C.
        if cp == c:
            return w.astype(f32)
        out = jnp.zeros((w.shape[0], hcp), f32)
        for h in range(heads):
            out = out.at[:, h * cp:h * cp + c].set(
                w[:, h * c:(h + 1) * c].astype(f32))
        return out

    def pad_cols(w):
        # [*, HC] -> [*, HCC] compact head order, zero-padded lanes.
        out = jnp.zeros((w.shape[0], hcc), f32)
        return out.at[:, :w.shape[1]].set(w.astype(f32))

    # Fused, lane-dense weight [FIN, 3*HCP + HCC] = [Wq | Wk | Wv | Wskip].
    w_fused = jnp.concatenate(
        [pad_heads(params["wq"]), pad_heads(params["wk"]),
         pad_heads(params["wv"]), pad_cols(params["wskip"])],
        axis=1).astype(compute_dtype)
    b_fused = jnp.concatenate(
        [pad_heads(params["bq"]), pad_heads(params["bk"]),
         pad_heads(params["bv"]), pad_cols(params["bskip"])], axis=1)   # f32
    gamma_p = pad_cols(params["gamma"])
    beta_p = pad_cols(params["beta"])

    # Head-compaction selector [HCP, HCC]: sel[h*CP+cc, h*C+cc] = 1 (cc < C).
    sel = jnp.zeros((hcp, hcc), f32)
    for h in range(heads):
        sel = sel.at[h * cp:h * cp + c, h * c:h * c + c].set(jnp.eye(c, dtype=f32))
    sel = sel.astype(compute_dtype)

    # Padded node features (MXU input dtype) and dense int8 adjacency mask.
    # adj[target, source] = 1 iff edge source -> target (PyG edge_index rows 0/1).
    # NOTE: parallel (duplicate) edges collapse to one entry, like before.
    # TODO(synk): pack adjacency to 1 bit/edge for large graphs (8x less DMA).
    x_p = jnp.zeros((np_, fin), f32).at[:n].set(x.astype(f32)).astype(compute_dtype)
    adj = jnp.zeros((np_, np_), jnp.int8).at[edge_index[1], edge_index[0]].set(1)

    # Per-(row tile, key tile) edge counts -> visit order: non-empty key tiles
    # first; padded steps repeat the last visited tile index so Pallas does not
    # re-DMA them and pl.when skips their compute entirely.
    t_cnt = jnp.zeros((gi, gj), jnp.int32).at[
        edge_index[1] // tile_n, edge_index[0] // tile_k].add(1)
    nonempty = t_cnt > 0
    counts = nonempty.sum(axis=1).astype(jnp.int32)                    # [gi]
    col = jnp.arange(gj, dtype=jnp.int32)
    order = jnp.argsort(jnp.where(nonempty, col[None, :], col[None, :] + gj),
                        axis=1).astype(jnp.int32)                      # [gi, gj]
    last = jnp.take_along_axis(order, jnp.maximum(counts - 1, 0)[:, None], axis=1)
    order = jnp.where(col[None, :] < counts[:, None], order, last)
    order_flat = order.reshape(-1)                                     # SMEM 1D

    wtot = 3 * hcp + hcc
    kernel = functools.partial(
        _gt_kernel, heads=heads, c=c, cp=cp, hcp=hcp, hcc=hcc,
        inv_hc=1.0 / hc, scale=1.0 / math.sqrt(c), compute_dtype=compute_dtype)

    out_p = pl.pallas_call(
        kernel,
        out_shape=jax.ShapeDtypeStruct((np_, hcc), out_dtype),
        grid_spec=pltpu.PrefetchScalarGridSpec(
            num_scalar_prefetch=2,                      # counts, order_flat
            grid=(gi, gj),
            in_specs=[
                pl.BlockSpec((tile_n, fin),
                             lambda i, jj, cnt, ordr: (i, 0)),          # x (queries)
                pl.BlockSpec((tile_k, fin),
                             lambda i, jj, cnt, ordr: (ordr[i * gj + jj], 0)),  # x (keys)
                pl.BlockSpec((fin, wtot),
                             lambda i, jj, cnt, ordr: (0, 0)),           # fused W
                pl.BlockSpec((1, wtot),
                             lambda i, jj, cnt, ordr: (0, 0)),           # fused b
                pl.BlockSpec((tile_n, tile_k),
                             lambda i, jj, cnt, ordr: (i, ordr[i * gj + jj])),  # adj
                pl.BlockSpec((hcp, hcc),
                             lambda i, jj, cnt, ordr: (0, 0)),           # head selector
                pl.BlockSpec((1, hcc),
                             lambda i, jj, cnt, ordr: (0, 0)),           # gamma
                pl.BlockSpec((1, hcc),
                             lambda i, jj, cnt, ordr: (0, 0)),           # beta
            ],
            out_specs=pl.BlockSpec((tile_n, hcc),
                                   lambda i, jj, cnt, ordr: (i, 0)),
            scratch_shapes=[
                pltpu.VMEM((tile_n, hcp), compute_dtype),      # q (pre-scaled)
                pltpu.VMEM((tile_k, hcp), compute_dtype),      # k projection
                pltpu.VMEM((tile_k, hcp), compute_dtype),      # v projection
                pltpu.VMEM((tile_n, hcc), jnp.float32),        # skip (compact)
                pltpu.VMEM((heads, tile_n, 1), jnp.float32),   # running max
                pltpu.VMEM((heads, tile_n, 1), jnp.float32),   # running denom
                pltpu.VMEM((heads, tile_n, cp), jnp.float32),  # running numerator
            ]),
        compiler_params=pltpu.CompilerParams(
            dimension_semantics=("parallel", "arbitrary"),
            vmem_limit_bytes=48 * 1024 * 1024),     # fits v7x's 64 MiB VMEM
    )(counts, order_flat, x_p, x_p, w_fused, b_fused, adj, sel, gamma_p, beta_p)

    # Compact head layout: plain contiguous slice, no per-head gather needed.
    return out_p[:n, :hc]


# ---------------------------------------------------------------------------
# Pure-JAX reference (f32, HIGHEST precision) to sanity-check the kernel.
# ---------------------------------------------------------------------------
def reference(x, edge_index, params, *, heads, c_per_head):
    n = x.shape[0]
    hp = jax.lax.Precision.HIGHEST
    q = jnp.dot(x, params["wq"], precision=hp) + params["bq"]
    k = jnp.dot(x, params["wk"], precision=hp) + params["bk"]
    v = jnp.dot(x, params["wv"], precision=hp) + params["bv"]
    adj = jnp.zeros((n, n), jnp.float32).at[edge_index[1], edge_index[0]].set(1.0)
    has_edge = adj > 0
    outs = []
    for h in range(heads):
        lo, hi = h * c_per_head, (h + 1) * c_per_head
        s = jnp.dot(q[:, lo:hi], k[:, lo:hi].T, precision=hp) / math.sqrt(c_per_head)
        s_m = jnp.where(has_edge, s, -1e30)
        m = jnp.max(s_m, axis=-1, keepdims=True)
        p = jnp.where(has_edge, jnp.exp(s_m - m), 0.0)
        alpha = p / (jnp.sum(p, axis=-1, keepdims=True) + 1e-16)
        outs.append(jnp.dot(alpha, v[:, lo:hi], precision=hp))
    out = jnp.concatenate(outs, axis=-1)
    out = out + jnp.dot(x, params["wskip"], precision=hp) + params["bskip"]
    out = 0.5 * out * (1.0 + jax.lax.erf(out / jnp.sqrt(2.0)))
    mean = jnp.mean(out, axis=-1, keepdims=True)
    var = jnp.mean((out - mean) ** 2, axis=-1, keepdims=True)
    out = (out - mean) / jnp.sqrt(var + 1e-5)
    return out * params["gamma"] + params["beta"]


if __name__ == "__main__":
    # N=200 (not a tile multiple: exercises row padding), in=32, out=32, heads=2.
    N, FIN, C, H = 200, 32, 32, 2
    HC = H * C

    key = jax.random.PRNGKey(0)
    ks = jax.random.split(key, 10)
    x = jax.random.normal(ks[0], (N, FIN), dtype=jnp.float32)

    def lin_init(k, fan_in, shape):
        bound = 1.0 / math.sqrt(fan_in)
        return jax.random.uniform(k, shape, jnp.float32, -bound, bound)

    params = {
        "wq": lin_init(ks[1], FIN, (FIN, HC)),
        "wk": lin_init(ks[2], FIN, (FIN, HC)),
        "wv": lin_init(ks[3], FIN, (FIN, HC)),
        "bq": lin_init(ks[4], FIN, (1, HC)),
        "bk": lin_init(ks[5], FIN, (1, HC)),
        "bv": lin_init(ks[6], FIN, (1, HC)),
        "wskip": lin_init(ks[7], FIN, (FIN, HC)),
        "bskip": lin_init(ks[8], FIN, (1, HC)),
        "gamma": jnp.ones((1, HC), jnp.float32),   # nn.LayerNorm default weight
        "beta": jnp.zeros((1, HC), jnp.float32),   # nn.LayerNorm default bias
    }

    # Deterministic edge_index [2, E]: open ring (node 0 has ZERO incoming edges
    # -> exercises the empty-neighborhood path) plus a few long-range edges.
    src = list(range(N - 1)) + [0, 3, 7, 11, 50, 123]
    dst = [i + 1 for i in range(N - 1)] + [8, 12, 2, 5, 100, 60]
    edge_index = jnp.array([src, dst], dtype=jnp.int32)
    # edge_weight would go here but is ignored (TransformerConv has no edge_dim).
    # TODO(synk): wire edge_weight through lin_edge if TransformerConv had edge_dim.

    ref = reference(x, edge_index, params, heads=H, c_per_head=C)

    # f32 compute path, 128x128 tiles: exercises the 2x2 grid, streaming online
    # softmax across key tiles, the empty-tile skip, and the padded-visit steps.
    out_f32 = graph_transformer_layer(x, edge_index, params, heads=H,
                                      c_per_head=C, compute_dtype=jnp.float32,
                                      tile_n=128, tile_k=128)
    out_f32 = jax.block_until_ready(out_f32)
    assert out_f32.shape == (N, HC)
    err32 = float(jnp.max(jnp.abs(out_f32 - ref)))
    assert jnp.allclose(out_f32, ref, atol=2e-3, rtol=2e-3), f"f32 mismatch: {err32}"

    # Default path: bf16 MXU inputs, bf16 compact output, big (clamped) tiles.
    out_bf16 = graph_transformer_layer(x, edge_index, params, heads=H, c_per_head=C)
    out_bf16 = jax.block_until_ready(out_bf16)
    assert out_bf16.shape == (N, HC)
    err16 = float(jnp.max(jnp.abs(out_bf16.astype(jnp.float32) - ref)))
    assert jnp.allclose(out_bf16.astype(jnp.float32), ref,
                        atol=5e-2, rtol=5e-2), f"bf16 mismatch: {err16}"

    print("KERNEL_OK")
</pallas_src>

<mosaic_0001>
module attributes {stable_mosaic.version = 11 : i64} {
  func.func @_gt_kernel(%arg0: i32, %arg1: i32, %arg2: memref<2xi32, #tpu.memory_space<smem>>, %arg3: memref<4xi32, #tpu.memory_space<smem>>, %arg4: memref<128x32xf32, #tpu.memory_space<vmem>>, %arg5: memref<128x32xf32, #tpu.memory_space<vmem>>, %arg6: memref<32x896xf32, #tpu.memory_space<vmem>>, %arg7: memref<1x896xf32, #tpu.memory_space<vmem>>, %arg8: memref<128x128xi8, #tpu.memory_space<vmem>>, %arg9: memref<256x128xf32, #tpu.memory_space<vmem>>, %arg10: memref<1x128xf32, #tpu.memory_space<vmem>>, %arg11: memref<1x128xf32, #tpu.memory_space<vmem>>, %arg12: memref<128x128xf32, #tpu.memory_space<vmem>>, %arg13: memref<128x256xf32, #tpu.memory_space<vmem>>, %arg14: memref<128x256xf32, #tpu.memory_space<vmem>>, %arg15: memref<128x256xf32, #tpu.memory_space<vmem>>, %arg16: memref<128x128xf32, #tpu.memory_space<vmem>>, %arg17: memref<2x128x1xf32, #tpu.memory_space<vmem>>, %arg18: memref<2x128x1xf32, #tpu.memory_space<vmem>>, %arg19: memref<2x128x128xf32, #tpu.memory_space<vmem>>) attributes {dimension_semantics = [#tpu.dimension_semantics<parallel>, #tpu.dimension_semantics<arbitrary>], iteration_bounds = array<i64: 2, 2>, scalar_prefetch = 2 : i64, scratch_operands = 7 : i64, tpu.core_type = #tpu.core_type<tc>, window_params = [{transform_indices = @transform_0, window_bounds = array<i64: 128, 32>}, {transform_indices = @transform_1, window_bounds = array<i64: 128, 32>}, {pipeline_mode = #tpu.pipeline_mode<synchronous>, transform_indices = @transform_2, window_bounds = array<i64: 32, 896>}, {pipeline_mode = #tpu.pipeline_mode<synchronous>, transform_indices = @transform_3, window_bounds = array<i64: 1, 896>}, {transform_indices = @transform_4, window_bounds = array<i64: 128, 128>}, {pipeline_mode = #tpu.pipeline_mode<synchronous>, transform_indices = @transform_5, window_bounds = array<i64: 256, 128>}, {pipeline_mode = #tpu.pipeline_mode<synchronous>, transform_indices = @transform_6, window_bounds = array<i64: 1, 128>}, {pipeline_mode = #tpu.pipeline_mode<synchronous>, transform_indices = @transform_7, window_bounds = array<i64: 1, 128>}, {transform_indices = @transform_8, window_bounds = array<i64: 128, 128>}]} {
    %c0_i32 = arith.constant 0 : i32
    %0 = arith.cmpi eq, %arg1, %c0_i32 : i32
    %1 = arith.extui %0 : i1 to i32
    %cst = arith.constant -1.000000e+30 : f32
    %c0_i32_0 = arith.constant 0 : i32
    %2 = arith.cmpi ne, %1, %c0_i32_0 : i32
    scf.if %2 {
      %c0 = arith.constant 0 : index
      %c0_4 = arith.constant 0 : index
      %11 = vector.load %arg4[%c0, %c0_4] : memref<128x32xf32, #tpu.memory_space<vmem>>, vector<128x32xf32>
      %c0_5 = arith.constant 0 : index
      %c0_6 = arith.constant 0 : index
      %12 = vector.load %arg6[%c0_5, %c0_6] : memref<32x896xf32, #tpu.memory_space<vmem>>, vector<32x256xf32>
      %cst_7 = arith.constant dense<0.000000e+00> : vector<128x256xf32>
      %13 = tpu.matmul %11, %12, %cst_7 {dimension_numbers = #tpu.dot_dimension_numbers<[1], [0], [0], [1], [0, 0, 1, 1], [], []>} : vector<128x32xf32>, vector<32x256xf32>, vector<128x256xf32> -> vector<128x256xf32>
      %c0_8 = arith.constant 0 : index
      %c0_9 = arith.constant 0 : index
      %14 = vector.load %arg7[%c0_8, %c0_9] : memref<1x896xf32, #tpu.memory_space<vmem>>, vector<1x256xf32>
      %15 = vector.broadcast %14 : vector<1x256xf32> to vector<128x256xf32>
      %16 = arith.addf %13, %15 : vector<128x256xf32>
      %c0_10 = arith.constant 0 : index
      %c768 = arith.constant 768 : index
      %17 = vector.load %arg6[%c0_10, %c768] : memref<32x896xf32, #tpu.memory_space<vmem>>, vector<32x128xf32>
      %cst_11 = arith.constant dense<0.000000e+00> : vector<128x128xf32>
      %18 = tpu.matmul %11, %17, %cst_11 {dimension_numbers = #tpu.dot_dimension_numbers<[1], [0], [0], [1], [0, 0, 1, 1], [], []>} : vector<128x32xf32>, vector<32x128xf32>, vector<128x128xf32> -> vector<128x128xf32>
      %c0_12 = arith.constant 0 : index
      %c768_13 = arith.constant 768 : index
      %19 = vector.load %arg7[%c0_12, %c768_13] : memref<1x896xf32, #tpu.memory_space<vmem>>, vector<1x128xf32>
      %20 = vector.broadcast %19 : vector<1x128xf32> to vector<128x128xf32>
      %21 = arith.addf %18, %20 : vector<128x128xf32>
      %cst_14 = arith.constant 0.176776692 : f32
      %22 = vector.broadcast %cst_14 : f32 to vector<128x256xf32>
      %23 = arith.mulf %16, %22 : vector<128x256xf32>
      %c0_15 = arith.constant 0 : index
      %c0_16 = arith.constant 0 : index
      %24 = vector.load %arg13[%c0_15, %c0_16] : memref<128x256xf32, #tpu.memory_space<vmem>>, vector<128x256xf32>
      tpu.vector_store %arg13[%c0_15, %c0_16], %23 {strides = array<i32>} : memref<128x256xf32, #tpu.memory_space<vmem>>, vector<128x256xf32>,
      %c0_17 = arith.constant 0 : index
      %c0_18 = arith.constant 0 : index
      %25 = vector.load %arg16[%c0_17, %c0_18] : memref<128x128xf32, #tpu.memory_space<vmem>>, vector<128x128xf32>
      tpu.vector_store %arg16[%c0_17, %c0_18], %21 {strides = array<i32>} : memref<128x128xf32, #tpu.memory_space<vmem>>, vector<128x128xf32>,
      %26 = vector.broadcast %cst : f32 to vector<2x128x1xf32>
      %c0_19 = arith.constant 0 : index
      %c0_20 = arith.constant 0 : index
      %c0_21 = arith.constant 0 : index
      %27 = vector.load %arg17[%c0_19, %c0_20, %c0_21] : memref<2x128x1xf32, #tpu.memory_space<vmem>>, vector<2x128x1xf32>
      tpu.vector_store %arg17[%c0_19, %c0_20, %c0_21], %26 {strides = array<i32>} : memref<2x128x1xf32, #tpu.memory_space<vmem>>, vector<2x128x1xf32>,
      %cst_22 = arith.constant 0.000000e+00 : f32
      %28 = vector.broadcast %cst_22 : f32 to vector<2x128x1xf32>
      %c0_23 = arith.constant 0 : index
      %c0_24 = arith.constant 0 : index
      %c0_25 = arith.constant 0 : index
      %29 = vector.load %arg18[%c0_23, %c0_24, %c0_25] : memref<2x128x1xf32, #tpu.memory_space<vmem>>, vector<2x128x1xf32>
      tpu.vector_store %arg18[%c0_23, %c0_24, %c0_25], %28 {strides = array<i32>} : memref<2x128x1xf32, #tpu.memory_space<vmem>>, vector<2x128x1xf32>,
      %cst_26 = arith.constant 0.000000e+00 : f32
      %30 = vector.broadcast %cst_26 : f32 to vector<2x128x128xf32>
      %c0_27 = arith.constant 0 : index
      %c0_28 = arith.constant 0 : index
      %c0_29 = arith.constant 0 : index
      %31 = vector.load %arg19[%c0_27, %c0_28, %c0_29] : memref<2x128x128xf32, #tpu.memory_space<vmem>>, vector<2x128x128xf32>
      tpu.vector_store %arg19[%c0_27, %c0_28, %c0_29], %30 {strides = array<i32>} : memref<2x128x128xf32, #tpu.memory_space<vmem>>, vector<2x128x128xf32>,
    } else {
    }
    %3 = arith.index_cast %arg0 : i32 to index
    %4 = memref.load %arg2[%3] : memref<2xi32, #tpu.memory_space<smem>>
    %5 = arith.cmpi slt, %arg1, %4 : i32
    %6 = arith.extui %5 : i1 to i32
    %cst_1 = arith.constant 1.000000e+30 : f32
    %c0_i32_2 = arith.constant 0 : i32
    %7 = arith.cmpi ne, %6, %c0_i32_2 : i32
    scf.if %7 {
      %c0 = arith.constant 0 : index
      %c0_4 = arith.constant 0 : index
      %11 = vector.load %arg5[%c0, %c0_4] : memref<128x32xf32, #tpu.memory_space<vmem>>, vector<128x32xf32>
      %c0_5 = arith.constant 0 : index
      %c256 = arith.constant 256 : index
      %12 = vector.load %arg6[%c0_5, %c256] : memref<32x896xf32, #tpu.memory_space<vmem>>, vector<32x256xf32>
      %cst_6 = arith.constant dense<0.000000e+00> : vector<128x256xf32>
      %13 = tpu.matmul %11, %12, %cst_6 {dimension_numbers = #tpu.dot_dimension_numbers<[1], [0], [0], [1], [0, 0, 1, 1], [], []>} : vector<128x32xf32>, vector<32x256xf32>, vector<128x256xf32> -> vector<128x256xf32>
      %c0_7 = arith.constant 0 : index
      %c256_8 = arith.constant 256 : index
      %14 = vector.load %arg7[%c0_7, %c256_8] : memref<1x896xf32, #tpu.memory_space<vmem>>, vector<1x256xf32>
      %15 = vector.broadcast %14 : vector<1x256xf32> to vector<128x256xf32>
      %16 = arith.addf %13, %15 : vector<128x256xf32>
      %c0_9 = arith.constant 0 : index
      %c0_10 = arith.constant 0 : index
      %17 = vector.load %arg14[%c0_9, %c0_10] : memref<128x256xf32, #tpu.memory_space<vmem>>, vector<128x256xf32>
      tpu.vector_store %arg14[%c0_9, %c0_10], %16 {strides = array<i32>} : memref<128x256xf32, #tpu.memory_space<vmem>>, vector<128x256xf32>,
      %c0_11 = arith.constant 0 : index
      %c512 = arith.constant 512 : index
      %18 = vector.load %arg6[%c0_11, %c512] : memref<32x896xf32, #tpu.memory_space<vmem>>, vector<32x256xf32>
      %cst_12 = arith.constant dense<0.000000e+00> : vector<128x256xf32>
      %19 = tpu.matmul %11, %18, %cst_12 {dimension_numbers = #tpu.dot_dimension_numbers<[1], [0], [0], [1], [0, 0, 1, 1], [], []>} : vector<128x32xf32>, vector<32x256xf32>, vector<128x256xf32> -> vector<128x256xf32>
      %c0_13 = arith.constant 0 : index
      %c512_14 = arith.constant 512 : index
      %20 = vector.load %arg7[%c0_13, %c512_14] : memref<1x896xf32, #tpu.memory_space<vmem>>, vector<1x256xf32>
      %21 = vector.broadcast %20 : vector<1x256xf32> to vector<128x256xf32>
      %22 = arith.addf %19, %21 : vector<128x256xf32>
      %c0_15 = arith.constant 0 : index
      %c0_16 = arith.constant 0 : index
      %23 = vector.load %arg15[%c0_15, %c0_16] : memref<128x256xf32, #tpu.memory_space<vmem>>, vector<128x256xf32>
      tpu.vector_store %arg15[%c0_15, %c0_16], %22 {strides = array<i32>} : memref<128x256xf32, #tpu.memory_space<vmem>>, vector<128x256xf32>,
      %c0_17 = arith.constant 0 : index
      %c0_18 = arith.constant 0 : index
      %24 = vector.load %arg8[%c0_17, %c0_18] : memref<128x128xi8, #tpu.memory_space<vmem>>, vector<128x128xi8>
      %25 = arith.sitofp %24 : vector<128x128xi8> to vector<128x128xf32>
      %cst_19 = arith.constant 1.000000e+00 : f32
      %26 = vector.broadcast %cst_19 : f32 to vector<128x128xf32>
      %27 = arith.subf %25, %26 : vector<128x128xf32>
      %28 = vector.broadcast %cst_1 : f32 to vector<128x128xf32>
      %29 = arith.mulf %27, %28 : vector<128x128xf32>
      %cst_20 = arith.constant 5.000000e-01 : f32
      %30 = vector.broadcast %cst_20 : f32 to vector<128x128xf32>
      %31 = arith.cmpf ogt, %25, %30 : vector<128x128xf32>
      %c0_21 = arith.constant 0 : index
      %c0_22 = arith.constant 0 : index
      %32 = vector.load %arg13[%c0_21, %c0_22] : memref<128x256xf32, #tpu.memory_space<vmem>>, vector<128x128xf32>
      %c0_23 = arith.constant 0 : index
      %c0_24 = arith.constant 0 : index
      %33 = vector.load %arg14[%c0_23, %c0_24] : memref<128x256xf32, #tpu.memory_space<vmem>>, vector<128x128xf32>
      %c0_25 = arith.constant 0 : index
      %c0_26 = arith.constant 0 : index
      %34 = vector.load %arg15[%c0_25, %c0_26] : memref<128x256xf32, #tpu.memory_space<vmem>>, vector<128x128xf32>
      %cst_27 = arith.constant dense<0.000000e+00> : vector<128x128xf32>
      %35 = tpu.matmul %32, %33, %cst_27 {dimension_numbers = #tpu.dot_dimension_numbers<[1], [1], [0], [0], [0, 0, 1, 0], [], []>} : vector<128x128xf32>, vector<128x128xf32>, vector<128x128xf32> -> vector<128x128xf32>
      %36 = arith.addf %35, %29 : vector<128x128xf32>
      %c0_28 = arith.constant 0 : index
      %c0_29 = arith.constant 0 : index
      %c0_30 = arith.constant 0 : index
      %37 = vector.load %arg17[%c0_28, %c0_29, %c0_30] : memref<2x128x1xf32, #tpu.memory_space<vmem>>, vector<1x128x1xf32>
      %38 = vector.shape_cast %37 : vector<1x128x1xf32> to vector<128x1xf32>
      %cst_31 = arith.constant dense<0xFF800000> : vector<128xf32>
      %39 = vector.multi_reduction <maximumf>, %36, %cst_31 [1] : vector<128x128xf32> to vector<128xf32>
      %40 = vector.shape_cast %39 : vector<128xf32> to vector<128x1xf32>
      %41 = arith.maximumf %38, %40 : vector<128x1xf32>
      %42 = arith.subf %38, %41 : vector<128x1xf32>
      %43 = math.exp %42 : vector<128x1xf32>
      %44 = vector.broadcast %41 : vector<128x1xf32> to vector<128x128xf32>
      %45 = arith.subf %36, %44 : vector<128x128xf32>
      %46 = math.exp %45 : vector<128x128xf32>
      %cst_32 = arith.constant 0.000000e+00 : f32
      %47 = vector.broadcast %cst_32 : f32 to vector<128x128xf32>
      %48 = arith.select %31, %46, %47 : vector<128x128xi1>, vector<128x128xf32>
      %c0_33 = arith.constant 0 : index
      %c0_34 = arith.constant 0 : index
      %c0_35 = arith.constant 0 : index
      %49 = vector.load %arg18[%c0_33, %c0_34, %c0_35] : memref<2x128x1xf32, #tpu.memory_space<vmem>>, vector<1x128x1xf32>
      %50 = vector.shape_cast %49 : vector<1x128x1xf32> to vector<128x1xf32>
      %51 = arith.mulf %43, %50 : vector<128x1xf32>
      %cst_36 = arith.constant dense<0.000000e+00> : vector<128xf32>
      %52 = vector.multi_reduction <add>, %48, %cst_36 [1] : vector<128x128xf32> to vector<128xf32>
      %53 = vector.shape_cast %52 : vector<128xf32> to vector<128x1xf32>
      %54 = arith.addf %51, %53 : vector<128x1xf32>
      %c0_37 = arith.constant 0 : index
      %c0_38 = arith.constant 0 : index
      %c0_39 = arith.constant 0 : index
      %55 = vector.load %arg18[%c0_37, %c0_38, %c0_39] : memref<2x128x1xf32, #tpu.memory_space<vmem>>, vector<1x128x1xf32>
      %56 = vector.shape_cast %55 : vector<1x128x1xf32> to vector<128x1xf32>
      %57 = vector.shape_cast %54 : vector<128x1xf32> to vector<1x128x1xf32>
      tpu.vector_store %arg18[%c0_37, %c0_38, %c0_39], %57 {strides = array<i32>} : memref<2x128x1xf32, #tpu.memory_space<vmem>>, vector<1x128x1xf32>,
      %c0_40 = arith.constant 0 : index
      %c0_41 = arith.constant 0 : index
      %c0_42 = arith.constant 0 : index
      %58 = vector.load %arg19[%c0_40, %c0_41, %c0_42] : memref<2x128x128xf32, #tpu.memory_space<vmem>>, vector<1x128x128xf32>
      %59 = vector.shape_cast %58 : vector<1x128x128xf32> to vector<128x128xf32>
      %60 = vector.broadcast %43 : vector<128x1xf32> to vector<128x128xf32>
      %61 = arith.mulf %60, %59 : vector<128x128xf32>
      %cst_43 = arith.constant dense<0.000000e+00> : vector<128x128xf32>
      %62 = tpu.matmul %48, %34, %cst_43 {dimension_numbers = #tpu.dot_dimension_numbers<[1], [0], [0], [1], [0, 0, 1, 1], [], []>} : vector<128x128xf32>, vector<128x128xf32>, vector<128x128xf32> -> vector<128x128xf32>
      %63 = arith.addf %61, %62 : vector<128x128xf32>
      %c0_44 = arith.constant 0 : index
      %c0_45 = arith.constant 0 : index
      %c0_46 = arith.constant 0 : index
      %64 = vector.load %arg19[%c0_44, %c0_45, %c0_46] : memref<2x128x128xf32, #tpu.memory_space<vmem>>, vector<1x128x128xf32>
      %65 = vector.shape_cast %64 : vector<1x128x128xf32> to vector<128x128xf32>
      %66 = vector.shape_cast %63 : vector<128x128xf32> to vector<1x128x128xf32>
      tpu.vector_store %arg19[%c0_44, %c0_45, %c0_46], %66 {strides = array<i32>} : memref<2x128x128xf32, #tpu.memory_space<vmem>>, vector<1x128x128xf32>,
      %c0_47 = arith.constant 0 : index
      %c0_48 = arith.constant 0 : index
      %c0_49 = arith.constant 0 : index
      %67 = vector.load %arg17[%c0_47, %c0_48, %c0_49] : memref<2x128x1xf32, #tpu.memory_space<vmem>>, vector<1x128x1xf32>
      %68 = vector.shape_cast %67 : vector<1x128x1xf32> to vector<128x1xf32>
      %69 = vector.shape_cast %41 : vector<128x1xf32> to vector<1x128x1xf32>
      tpu.vector_store %arg17[%c0_47, %c0_48, %c0_49], %69 {strides = array<i32>} : memref<2x128x1xf32, #tpu.memory_space<vmem>>, vector<1x128x1xf32>,
      %c0_50 = arith.constant 0 : index
      %c128 = arith.constant 128 : index
      %70 = vector.load %arg13[%c0_50, %c128] : memref<128x256xf32, #tpu.memory_space<vmem>>, vector<128x128xf32>
      %c0_51 = arith.constant 0 : index
      %c128_52 = arith.constant 128 : index
      %71 = vector.load %arg14[%c0_51, %c128_52] : memref<128x256xf32, #tpu.memory_space<vmem>>, vector<128x128xf32>
      %c0_53 = arith.constant 0 : index
      %c128_54 = arith.constant 128 : index
      %72 = vector.load %arg15[%c0_53, %c128_54] : memref<128x256xf32, #tpu.memory_space<vmem>>, vector<128x128xf32>
      %cst_55 = arith.constant dense<0.000000e+00> : vector<128x128xf32>
      %73 = tpu.matmul %70, %71, %cst_55 {dimension_numbers = #tpu.dot_dimension_numbers<[1], [1], [0], [0], [0, 0, 1, 0], [], []>} : vector<128x128xf32>, vector<128x128xf32>, vector<128x128xf32> -> vector<128x128xf32>
      %74 = arith.addf %73, %29 : vector<128x128xf32>
      %c1 = arith.constant 1 : index
      %c0_56 = arith.constant 0 : index
      %c0_57 = arith.constant 0 : index
      %75 = vector.load %arg17[%c1, %c0_56, %c0_57] : memref<2x128x1xf32, #tpu.memory_space<vmem>>, vector<1x128x1xf32>
      %76 = vector.shape_cast %75 : vector<1x128x1xf32> to vector<128x1xf32>
      %cst_58 = arith.constant dense<0xFF800000> : vector<128xf32>
      %77 = vector.multi_reduction <maximumf>, %74, %cst_58 [1] : vector<128x128xf32> to vector<128xf32>
      %78 = vector.shape_cast %77 : vector<128xf32> to vector<128x1xf32>
      %79 = arith.maximumf %76, %78 : vector<128x1xf32>
      %80 = arith.subf %76, %79 : vector<128x1xf32>
      %81 = math.exp %80 : vector<128x1xf32>
      %82 = vector.broadcast %79 : vector<128x1xf32> to vector<128x128xf32>
      %83 = arith.subf %74, %82 : vector<128x128xf32>
      %84 = math.exp %83 : vector<128x128xf32>
      %cst_59 = arith.constant 0.000000e+00 : f32
      %85 = vector.broadcast %cst_59 : f32 to vector<128x128xf32>
      %86 = arith.select %31, %84, %85 : vector<128x128xi1>, vector<128x128xf32>
      %c1_60 = arith.constant 1 : index
      %c0_61 = arith.constant 0 : index
      %c0_62 = arith.constant 0 : index
      %87 = vector.load %arg18[%c1_60, %c0_61, %c0_62] : memref<2x128x1xf32, #tpu.memory_space<vmem>>, vector<1x128x1xf32>
      %88 = vector.shape_cast %87 : vector<1x128x1xf32> to vector<128x1xf32>
      %89 = arith.mulf %81, %88 : vector<128x1xf32>
      %cst_63 = arith.constant dense<0.000000e+00> : vector<128xf32>
      %90 = vector.multi_reduction <add>, %86, %cst_63 [1] : vector<128x128xf32> to vector<128xf32>
      %91 = vector.shape_cast %90 : vector<128xf32> to vector<128x1xf32>
      %92 = arith.addf %89, %91 : vector<128x1xf32>
      %c1_64 = arith.constant 1 : index
      %c0_65 = arith.constant 0 : index
      %c0_66 = arith.constant 0 : index
      %93 = vector.load %arg18[%c1_64, %c0_65, %c0_66] : memref<2x128x1xf32, #tpu.memory_space<vmem>>, vector<1x128x1xf32>
      %94 = vector.shape_cast %93 : vector<1x128x1xf32> to vector<128x1xf32>
      %95 = vector.shape_cast %92 : vector<128x1xf32> to vector<1x128x1xf32>
      tpu.vector_store %arg18[%c1_64, %c0_65, %c0_66], %95 {strides = array<i32>} : memref<2x128x1xf32, #tpu.memory_space<vmem>>, vector<1x128x1xf32>,
      %c1_67 = arith.constant 1 : index
      %c0_68 = arith.constant 0 : index
      %c0_69 = arith.constant 0 : index
      %96 = vector.load %arg19[%c1_67, %c0_68, %c0_69] : memref<2x128x128xf32, #tpu.memory_space<vmem>>, vector<1x128x128xf32>
      %97 = vector.shape_cast %96 : vector<1x128x128xf32> to vector<128x128xf32>
      %98 = vector.broadcast %81 : vector<128x1xf32> to vector<128x128xf32>
      %99 = arith.mulf %98, %97 : vector<128x128xf32>
      %cst_70 = arith.constant dense<0.000000e+00> : vector<128x128xf32>
      %100 = tpu.matmul %86, %72, %cst_70 {dimension_numbers = #tpu.dot_dimension_numbers<[1], [0], [0], [1], [0, 0, 1, 1], [], []>} : vector<128x128xf32>, vector<128x128xf32>, vector<128x128xf32> -> vector<128x128xf32>
      %101 = arith.addf %99, %100 : vector<128x128xf32>
      %c1_71 = arith.constant 1 : index
      %c0_72 = arith.constant 0 : index
      %c0_73 = arith.constant 0 : index
      %102 = vector.load %arg19[%c1_71, %c0_72, %c0_73] : memref<2x128x128xf32, #tpu.memory_space<vmem>>, vector<1x128x128xf32>
      %103 = vector.shape_cast %102 : vector<1x128x128xf32> to vector<128x128xf32>
      %104 = vector.shape_cast %101 : vector<128x128xf32> to vector<1x128x128xf32>
      tpu.vector_store %arg19[%c1_71, %c0_72, %c0_73], %104 {strides = array<i32>} : memref<2x128x128xf32, #tpu.memory_space<vmem>>, vector<1x128x128xf32>,
      %c1_74 = arith.constant 1 : index
      %c0_75 = arith.constant 0 : index
      %c0_76 = arith.constant 0 : index
      %105 = vector.load %arg17[%c1_74, %c0_75, %c0_76] : memref<2x128x1xf32, #tpu.memory_space<vmem>>, vector<1x128x1xf32>
      %106 = vector.shape_cast %105 : vector<1x128x1xf32> to vector<128x1xf32>
      %107 = vector.shape_cast %79 : vector<128x1xf32> to vector<1x128x1xf32>
      tpu.vector_store %arg17[%c1_74, %c0_75, %c0_76], %107 {strides = array<i32>} : memref<2x128x1xf32, #tpu.memory_space<vmem>>, vector<1x128x1xf32>,
    } else {
    }
    %c1_i32 = arith.constant 1 : i32
    %8 = arith.cmpi eq, %arg1, %c1_i32 : i32
    %9 = arith.extui %8 : i1 to i32
    %c0_i32_3 = arith.constant 0 : i32
    %10 = arith.cmpi ne, %9, %c0_i32_3 : i32
    scf.if %10 {
      %c0 = arith.constant 0 : index
      %c0_4 = arith.constant 0 : index
      %c0_5 = arith.constant 0 : index
      %11 = vector.load %arg18[%c0, %c0_4, %c0_5] : memref<2x128x1xf32, #tpu.memory_space<vmem>>, vector<1x128x1xf32>
      %12 = vector.shape_cast %11 : vector<1x128x1xf32> to vector<128x1xf32>
      %cst_6 = arith.constant 1.000000e-16 : f32
      %13 = vector.broadcast %cst_6 : f32 to vector<128x1xf32>
      %14 = arith.addf %12, %13 : vector<128x1xf32>
      %15 = tpu.reciprocal %14 {approx = true} : vector<128x1xf32> -> vector<128x1xf32>
      %16 = arith.mulf %14, %15 : vector<128x1xf32>
      %cst_7 = arith.constant 2.000000e+00 : f32
      %17 = vector.broadcast %cst_7 : f32 to vector<128x1xf32>
      %18 = arith.subf %17, %16 : vector<128x1xf32>
      %19 = arith.mulf %15, %18 : vector<128x1xf32>
      %c0_8 = arith.constant 0 : index
      %c0_9 = arith.constant 0 : index
      %c0_10 = arith.constant 0 : index
      %20 = vector.load %arg19[%c0_8, %c0_9, %c0_10] : memref<2x128x128xf32, #tpu.memory_space<vmem>>, vector<1x128x128xf32>
      %21 = vector.shape_cast %20 : vector<1x128x128xf32> to vector<128x128xf32>
      %22 = vector.broadcast %19 : vector<128x1xf32> to vector<128x128xf32>
      %23 = arith.mulf %21, %22 : vector<128x128xf32>
      %c1 = arith.constant 1 : index
      %c0_11 = arith.constant 0 : index
      %c0_12 = arith.constant 0 : index
      %24 = vector.load %arg18[%c1, %c0_11, %c0_12] : memref<2x128x1xf32, #tpu.memory_space<vmem>>, vector<1x128x1xf32>
      %25 = vector.shape_cast %24 : vector<1x128x1xf32> to vector<128x1xf32>
      %cst_13 = arith.constant 1.000000e-16 : f32
      %26 = vector.broadcast %cst_13 : f32 to vector<128x1xf32>
      %27 = arith.addf %25, %26 : vector<128x1xf32>
      %28 = tpu.reciprocal %27 {approx = true} : vector<128x1xf32> -> vector<128x1xf32>
      %29 = arith.mulf %27, %28 : vector<128x1xf32>
      %cst_14 = arith.constant 2.000000e+00 : f32
      %30 = vector.broadcast %cst_14 : f32 to vector<128x1xf32>
      %31 = arith.subf %30, %29 : vector<128x1xf32>
      %32 = arith.mulf %28, %31 : vector<128x1xf32>
      %c1_15 = arith.constant 1 : index
      %c0_16 = arith.constant 0 : index
      %c0_17 = arith.constant 0 : index
      %33 = vector.load %arg19[%c1_15, %c0_16, %c0_17] : memref<2x128x128xf32, #tpu.memory_space<vmem>>, vector<1x128x128xf32>
      %34 = vector.shape_cast %33 : vector<1x128x128xf32> to vector<128x128xf32>
      %35 = vector.broadcast %32 : vector<128x1xf32> to vector<128x128xf32>
      %36 = arith.mulf %34, %35 : vector<128x128xf32>
      %37 = tpu.concatenate %23, %36 in 1 : vector<128x128xf32>, vector<128x128xf32> -> vector<128x256xf32>
      %c0_18 = arith.constant 0 : index
      %c0_19 = arith.constant 0 : index
      %38 = vector.load %arg9[%c0_18, %c0_19] : memref<256x128xf32, #tpu.memory_space<vmem>>, vector<256x128xf32>
      %cst_20 = arith.constant dense<0.000000e+00> : vector<128x128xf32>
      %39 = tpu.matmul %37, %38, %cst_20 {dimension_numbers = #tpu.dot_dimension_numbers<[1], [0], [0], [1], [0, 0, 1, 1], [], []>} : vector<128x256xf32>, vector<256x128xf32>, vector<128x128xf32> -> vector<128x128xf32>
      %c0_21 = arith.constant 0 : index
      %c0_22 = arith.constant 0 : index
      %40 = vector.load %arg16[%c0_21, %c0_22] : memref<128x128xf32, #tpu.memory_space<vmem>>, vector<128x128xf32>
      %41 = arith.addf %39, %40 : vector<128x128xf32>
      %cst_23 = arith.constant 5.000000e-01 : f32
      %42 = vector.broadcast %cst_23 : f32 to vector<128x128xf32>
      %43 = arith.mulf %42, %41 : vector<128x128xf32>
      %cst_24 = arith.constant 0.707106769 : f32
      %44 = vector.broadcast %cst_24 : f32 to vector<128x128xf32>
      %45 = arith.mulf %41, %44 : vector<128x128xf32>
      %46 = math.erf %45 : vector<128x128xf32>
      %cst_25 = arith.constant 1.000000e+00 : f32
      %47 = vector.broadcast %cst_25 : f32 to vector<128x128xf32>
      %48 = arith.addf %47, %46 : vector<128x128xf32>
      %49 = arith.mulf %43, %48 : vector<128x128xf32>
      %cst_26 = arith.constant dense<0.000000e+00> : vector<128xf32>
      %50 = vector.multi_reduction <add>, %49, %cst_26 [1] : vector<128x128xf32> to vector<128xf32>
      %51 = vector.shape_cast %50 : vector<128xf32> to vector<128x1xf32>
      %cst_27 = arith.constant 1.562500e-02 : f32
      %52 = vector.broadcast %cst_27 : f32 to vector<128x1xf32>
      %53 = arith.mulf %51, %52 : vector<128x1xf32>
      %54 = arith.mulf %49, %49 : vector<128x128xf32>
      %cst_28 = arith.constant dense<0.000000e+00> : vector<128xf32>
      %55 = vector.multi_reduction <add>, %54, %cst_28 [1] : vector<128x128xf32> to vector<128xf32>
      %56 = vector.shape_cast %55 : vector<128xf32> to vector<128x1xf32>
      %cst_29 = arith.constant 1.562500e-02 : f32
      %57 = vector.broadcast %cst_29 : f32 to vector<128x1xf32>
      %58 = arith.mulf %56, %57 : vector<128x1xf32>
      %59 = arith.mulf %53, %53 : vector<128x1xf32>
      %60 = arith.subf %58, %59 : vector<128x1xf32>
      %cst_30 = arith.constant 0.000000e+00 : f32
      %61 = vector.broadcast %cst_30 : f32 to vector<128x1xf32>
      %62 = arith.maximumf %60, %61 : vector<128x1xf32>
      %63 = vector.broadcast %53 : vector<128x1xf32> to vector<128x128xf32>
      %64 = arith.subf %49, %63 : vector<128x128xf32>
      %cst_31 = arith.constant 9.99999974E-6 : f32
      %65 = vector.broadcast %cst_31 : f32 to vector<128x1xf32>
      %66 = arith.addf %62, %65 : vector<128x1xf32>
      %67 = math.rsqrt %66 : vector<128x1xf32>
      %68 = vector.broadcast %67 : vector<128x1xf32> to vector<128x128xf32>
      %69 = arith.mulf %64, %68 : vector<128x128xf32>
      %c0_32 = arith.constant 0 : index
      %c0_33 = arith.constant 0 : index
      %70 = vector.load %arg10[%c0_32, %c0_33] : memref<1x128xf32, #tpu.memory_space<vmem>>, vector<1x128xf32>
      %71 = vector.broadcast %70 : vector<1x128xf32> to vector<128x128xf32>
      %72 = arith.mulf %69, %71 : vector<128x128xf32>
      %c0_34 = arith.constant 0 : index
      %c0_35 = arith.constant 0 : index
      %73 = vector.load %arg11[%c0_34, %c0_35] : memref<1x128xf32, #tpu.memory_space<vmem>>, vector<1x128xf32>
      %74 = vector.broadcast %73 : vector<1x128xf32> to vector<128x128xf32>
      %75 = arith.addf %72, %74 : vector<128x128xf32>
      %c0_36 = arith.constant 0 : index
      %c0_37 = arith.constant 0 : index
      %76 = vector.load %arg12[%c0_36, %c0_37] : memref<128x128xf32, #tpu.memory_space<vmem>>, vector<128x128xf32>
      tpu.vector_store %arg12[%c0_36, %c0_37], %75 {strides = array<i32>} : memref<128x128xf32, #tpu.memory_space<vmem>>, vector<128x128xf32>,
    } else {
    }
    return
  }
  func.func @transform_0(%arg0: i32, %arg1: i32, %arg2: memref<2xi32, #tpu.memory_space<smem>>, %arg3: memref<4xi32, #tpu.memory_space<smem>>) -> (i32, i32) {
    %c0_i32 = arith.constant 0 : i32
    %c0_i32_0 = arith.constant 0 : i32
    return %arg0, %c0_i32 : i32, i32
  }
  func.func @transform_1(%arg0: i32, %arg1: i32, %arg2: memref<2xi32, #tpu.memory_space<smem>>, %arg3: memref<4xi32, #tpu.memory_space<smem>>) -> (i32, i32) {
    %c2_i32 = arith.constant 2 : i32
    %0 = arith.muli %arg0, %c2_i32 : i32
    %1 = arith.addi %0, %arg1 : i32
    %2 = arith.index_cast %1 : i32 to index
    %3 = memref.load %arg3[%2] : memref<4xi32, #tpu.memory_space<smem>>
    %c0_i32 = arith.constant 0 : i32
    %c0_i32_0 = arith.constant 0 : i32
    return %3, %c0_i32 : i32, i32
  }
  func.func @transform_2(%arg0: i32, %arg1: i32, %arg2: memref<2xi32, #tpu.memory_space<smem>>, %arg3: memref<4xi32, #tpu.memory_space<smem>>) -> (i32, i32) {
    %c0_i32 = arith.constant 0 : i32
    %c0_i32_0 = arith.constant 0 : i32
    %c0_i32_1 = arith.constant 0 : i32
    return %c0_i32, %c0_i32_0 : i32, i32
  }
  func.func @transform_3(%arg0: i32, %arg1: i32, %arg2: memref<2xi32, #tpu.memory_space<smem>>, %arg3: memref<4xi32, #tpu.memory_space<smem>>) -> (i32, i32) {
    %c0_i32 = arith.constant 0 : i32
    %c0_i32_0 = arith.constant 0 : i32
    %c0_i32_1 = arith.constant 0 : i32
    return %c0_i32, %c0_i32_0 : i32, i32
  }
  func.func @transform_4(%arg0: i32, %arg1: i32, %arg2: memref<2xi32, #tpu.memory_space<smem>>, %arg3: memref<4xi32, #tpu.memory_space<smem>>) -> (i32, i32) {
    %c2_i32 = arith.constant 2 : i32
    %0 = arith.muli %arg0, %c2_i32 : i32
    %1 = arith.addi %0, %arg1 : i32
    %2 = arith.index_cast %1 : i32 to index
    %3 = memref.load %arg3[%2] : memref<4xi32, #tpu.memory_space<smem>>
    %c0_i32 = arith.constant 0 : i32
    return %arg0, %3 : i32, i32
  }
  func.func @transform_5(%arg0: i32, %arg1: i32, %arg2: memref<2xi32, #tpu.memory_space<smem>>, %arg3: memref<4xi32, #tpu.memory_space<smem>>) -> (i32, i32) {
    %c0_i32 = arith.constant 0 : i32
    %c0_i32_0 = arith.constant 0 : i32
    %c0_i32_1 = arith.constant 0 : i32
    return %c0_i32, %c0_i32_0 : i32, i32
  }
  func.func @transform_6(%arg0: i32, %arg1: i32, %arg2: memref<2xi32, #tpu.memory_space<smem>>, %arg3: memref<4xi32, #tpu.memory_space<smem>>) -> (i32, i32) {
    %c0_i32 = arith.constant 0 : i32
    %c0_i32_0 = arith.constant 0 : i32
    %c0_i32_1 = arith.constant 0 : i32
    return %c0_i32, %c0_i32_0 : i32, i32
  }
  func.func @transform_7(%arg0: i32, %arg1: i32, %arg2: memref<2xi32, #tpu.memory_space<smem>>, %arg3: memref<4xi32, #tpu.memory_space<smem>>) -> (i32, i32) {
    %c0_i32 = arith.constant 0 : i32
    %c0_i32_0 = arith.constant 0 : i32
    %c0_i32_1 = arith.constant 0 : i32
    return %c0_i32, %c0_i32_0 : i32, i32
  }
  func.func @transform_8(%arg0: i32, %arg1: i32, %arg2: memref<2xi32, #tpu.memory_space<smem>>, %arg3: memref<4xi32, #tpu.memory_space<smem>>) -> (i32, i32) {
    %c0_i32 = arith.constant 0 : i32
    %c0_i32_0 = arith.constant 0 : i32
    return %arg0, %c0_i32 : i32, i32
  }
}

</mosaic_0001>

<llo_original>
// kernel: tpu_custom_call.1
$region0: #{tpu_custom_call.1}
  #allocation0 [shape = 'u32[]', space=smem, size = 0x4, offset = 0x4, fixed_abs, tag = 'smem constant byte address 0x4 - core index']
  #allocation1 [shape = 'u32[144,128]{1,0:T(1,128)}', space=vmem, size = 0x12000, scoped, tag = 'internal scratch']
  #allocation2 [shape = 'f32[128,256]{1,0:T(8,128)}', space=vmem, size = 0x20000, scoped, tag = 'scratch operand']
  #allocation3 [shape = 'f32[128,256]{1,0:T(8,128)}', space=vmem, size = 0x20000, scoped, tag = 'scratch operand']
  #allocation4 [shape = 'f32[128,256]{1,0:T(8,128)}', space=vmem, size = 0x20000, scoped, tag = 'scratch operand']
  #allocation5 [shape = 'f32[128,128]{1,0:T(8,128)}', space=vmem, size = 0x10000, scoped, tag = 'scratch operand']
  #allocation6 [shape = 'f32[2,128,1]{2,1,0:T(8,128)}', space=vmem, size = 0x20000, scoped, tag = 'scratch operand']
  #allocation7 [shape = 'f32[2,128,1]{2,1,0:T(8,128)}', space=vmem, size = 0x20000, scoped, tag = 'scratch operand']
  #allocation8 [shape = 'f32[2,128,128]{2,1,0:T(8,128)}', space=vmem, size = 0x20000, scoped, tag = 'scratch operand']
  #allocation9 [shape = 's32[1]{0}', space=sflag, size = 0x4, scoped, tag = 'scoped memory for tpu_custom_call.1']
  #allocation10 [shape = 'u8[512]{0}', space=smem, size = 0x200, scoped, tag = 'prefetched SMEM operand 0']
  #allocation11 [shape = 'u8[512]{0}', space=smem, size = 0x200, scoped, tag = 'prefetched SMEM operand 1']
  %s0 = inlined_call_operand.vmem [shape: s32[2], index: 0, kind: input, shape index: {}]
  %s1 = inlined_call_operand.vmem [shape: s32[4], index: 1, kind: input, shape index: {}]
  %s2 = inlined_call_operand.vmem [shape: f32[256,32], index: 2, kind: input, shape index: {}]
  %s3 = inlined_call_operand.vmem [shape: f32[256,32], index: 3, kind: input, shape index: {}]
  %s4 = inlined_call_operand.vmem [shape: f32[32,896], index: 4, kind: input, shape index: {}]
  %s5 = inlined_call_operand.vmem [shape: f32[1,896], index: 5, kind: input, shape index: {}]
  %s6 = inlined_call_operand.vmem [shape: s8[256,256], index: 6, kind: input, shape index: {}]
  %s7 = inlined_call_operand.vmem [shape: f32[256,128], index: 7, kind: input, shape index: {}]
  %s8 = inlined_call_operand.vmem [shape: f32[1,128], index: 8, kind: input, shape index: {}]
  %s9 = inlined_call_operand.vmem [shape: f32[1,128], index: 9, kind: input, shape index: {}]
  %s10 = inlined_call_operand.hbm [shape: f32[256,128], index: 10, kind: output, shape index: {}]
  %s11 = sld [smem:[#allocation0]]
  $region115: #{tpu_custom_call.1} parent=0
    _
  %s13 = ssub.s32 1, %s11
  %s14 = scalar_select 0, %s13, %s11
  %s15 = sshll.u32 %s0, 4
  %s16 = int_to_ptr.vmem [resolvable:$true] %s15
  %18 = dma.vmem_to_smem %s16, 16, [#allocation10], [#allocation9]
  %s19 = sshll.u32 %s1, 4
  %s20 = int_to_ptr.vmem [resolvable:$true] %s19
  %22 = dma.vmem_to_smem %s20, 16, [#allocation11], [#allocation9]
  %23 = dma.done [#allocation9], 32
  %24 = sfence
  $region1: #{tpu_custom_call.1} parent=0
    #allocation12 [shape = 'u8[32768]{0}', space=vmem, size = 0x8000, scoped, tag = 'input window, operand 6']
    #allocation13 [shape = 'u8[131072]{0}', space=vmem, size = 0x20000, scoped, tag = 'output window, operand 0']
    #allocation14 [shape = 's32[2]{0}', space=sflag, size = 0x8, scoped, tag = 'scoped memory for tpu_custom_call.1']
    %25 = vsyncpa [#allocation14], 0
    %s26 = scalar_lea.sflag [#allocation14], 1
    %27 = vsyncpa %s26, 0
    loop: start=0, step=1, limit=6
    $region2: #{tpu_custom_call.1} parent=1 // loop_pre_header
      _
    $region3: #{tpu_custom_call.1} parent=1 // loop_header
      %s29 = sphi 0, %s33
      %p30 = scmp.ge.s32.totalorder %s29, 6
      %s36 = sphi 0, %s48
      %s37 = sphi 0, %s44
      %s38 = sphi 0, %s36
      %s39 = sphi 0, %s37
      %s40 = sphi 0, %s38
      %s41 = sphi 0, %s39
      %s51 = sphi 0, %s53
      %s54 = sphi 0, %s51
      %s55 = sphi 0, %s54
      %s71 = sphi 0, %s55
      %s83 = sphi 0, %s85
      %s86 = sphi 0, %s83
      %s87 = sphi 0, %s86
      %s103 = sphi 0, %s87
      %s107 = sphi 0, %s107
      %s109 = sphi 0, %s107
      %s110 = sphi 0, %s109
      %s124 = sphi 0, %s110
      %s128 = sphi 0, %s128
      %s130 = sphi 0, %s128
      %s131 = sphi 0, %s130
      %s145 = sphi 0, %s131
      %s159 = sphi 0, %s161
      %s162 = sphi 0, %s159
      %s163 = sphi 0, %s162
      %s179 = sphi 0, %s163
      %s183 = sphi 0, %s183
      %s185 = sphi 0, %s183
      %s186 = sphi 0, %s185
      %s200 = sphi 0, %s186
      %s204 = sphi 0, %s204
      %s206 = sphi 0, %s204
      %s207 = sphi 0, %s206
      %s221 = sphi 0, %s207
      %s225 = sphi 0, %s225
      %s227 = sphi 0, %s225
      %s228 = sphi 0, %s227
      %s242 = sphi 0, %s228
      %s248 = sphi 0, %s250
      %s251 = sphi 0, %s248
      %s252 = sphi 0, %s251
      %s268 = sphi 0, %s252
    $region4: #{tpu_custom_call.1} parent=1 // loop_header_branch
      %32 = sbr.rel (%p30) target = $region8
    $region5: #{tpu_custom_call.1} parent=1 // loop_body
      %s34 = ssub.s32 %s29, 1
      %s35 = ssub.s32 %s29, 2
      %s42 = sadd.s32 1, %s37
      %p43 = scmp.ge.s32.totalorder %s42, 2
      %s44 = scalar_select %p43, 0, %s42
      %s45 = sadd.s32 1, %s36
      %s46 = scalar_select %p43, %s45, %s36
      %p47 = scmp.ge.s32.totalorder %s46, 2
      %s48 = scalar_select %p47, 0, %s46
      %s49 = ssub.s32 %s36, %s48
      %p50 = scmp.eq.s32.totalorder %s49, 0
      %s52 = sadd.s32 %s51, 1
      %s53 = scalar_select %p50, %s51, %s52
      %p56 = pneg %p50
      %p57 = scmp.eq.s32.totalorder %s29, 3
      %p58 = por %p56, %p57
      %p59 = scmp.ne.s32.totalorder %s51, %s54
      %p60 = scmp.eq.s32.totalorder %s29, 0
      %p61 = por %p59, %p60
      %p62 = scmp.ne.s32.totalorder %s51, %s54
      %p63 = scmp.eq.s32.totalorder %s34, 3
      %p64 = por %p62, %p63
      %p65 = scmp.ne.s32.totalorder %s54, %s55
      %p66 = scmp.eq.s32.totalorder %s34, 0
      %p67 = por %p65, %p66
      %p68 = scmp.ne.s32.totalorder %s54, %s55
      %p69 = scmp.eq.s32.totalorder %s35, 3
      %p70 = por %p68, %p69
      %p72 = scmp.ne.s32.totalorder %s55, %s71
      %p73 = scmp.eq.s32.totalorder %s35, 0
      %p74 = por %p72, %p73
      %s75 = smul.u32 %s36, 2
      %s76 = sadd.s32 %s75, %s37
      %s77 = sld [smem:[#allocation11 + %s76]]
      %s78 = smul.u32 %s48, 2
      %s79 = sadd.s32 %s78, %s44
      %s80 = sld [smem:[#allocation11 + %s79]]
      %s81 = ssub.s32 %s77, %s80
      %p82 = scmp.eq.s32.totalorder %s81, 0
      %s84 = sadd.s32 %s83, 1
      %s85 = scalar_select %p82, %s83, %s84
      %p88 = pneg %p82
      %p89 = scmp.eq.s32.totalorder %s29, 3
      %p90 = por %p88, %p89
      %p91 = scmp.ne.s32.totalorder %s83, %s86
      %p92 = scmp.eq.s32.totalorder %s29, 0
      %p93 = por %p91, %p92
      %p94 = scmp.ne.s32.totalorder %s83, %s86
      %p95 = scmp.eq.s32.totalorder %s34, 3
      %p96 = por %p94, %p95
      %p97 = scmp.ne.s32.totalorder %s86, %s87
      %p98 = scmp.eq.s32.totalorder %s34, 0
      %p99 = por %p97, %p98
      %p100 = scmp.ne.s32.totalorder %s86, %s87
      %p101 = scmp.eq.s32.totalorder %s35, 3
      %p102 = por %p100, %p101
      %p104 = scmp.ne.s32.totalorder %s87, %s103
      %p105 = scmp.eq.s32.totalorder %s35, 0
      %p106 = por %p104, %p105
      %s108 = sadd.s32 %s107, 1
      %p111 = scmp.eq.s32.totalorder %s29, 3
      %p112 = scmp.ne.s32.totalorder %s107, %s109
      %p113 = scmp.eq.s32.totalorder %s29, 0
      %p114 = por %p112, %p113
      %p115 = scmp.ne.s32.totalorder %s107, %s109
      %p116 = scmp.eq.s32.totalorder %s34, 3
      %p117 = por %p115, %p116
      %p118 = scmp.ne.s32.totalorder %s109, %s110
      %p119 = scmp.eq.s32.totalorder %s34, 0
      %p120 = por %p118, %p119
      %p121 = scmp.ne.s32.totalorder %s109, %s110
      %p122 = scmp.eq.s32.totalorder %s35, 3
      %p123 = por %p121, %p122
      %p125 = scmp.ne.s32.totalorder %s110, %s124
      %p126 = scmp.eq.s32.totalorder %s35, 0
      %p127 = por %p125, %p126
      %s129 = sadd.s32 %s128, 1
      %p132 = scmp.eq.s32.totalorder %s29, 3
      %p133 = scmp.ne.s32.totalorder %s128, %s130
      %p134 = scmp.eq.s32.totalorder %s29, 0
      %p135 = por %p133, %p134
      %p136 = scmp.ne.s32.totalorder %s128, %s130
      %p137 = scmp.eq.s32.totalorder %s34, 3
      %p138 = por %p136, %p137
      %p139 = scmp.ne.s32.totalorder %s130, %s131
      %p140 = scmp.eq.s32.totalorder %s34, 0
      %p141 = por %p139, %p140
      %p142 = scmp.ne.s32.totalorder %s130, %s131
      %p143 = scmp.eq.s32.totalorder %s35, 3
      %p144 = por %p142, %p143
      %p146 = scmp.ne.s32.totalorder %s131, %s145
      %p147 = scmp.eq.s32.totalorder %s35, 0
      %p148 = por %p146, %p147
      %s149 = smul.u32 %s36, 2
      %s150 = sadd.s32 %s149, %s37
      %s151 = sld [smem:[#allocation11 + %s150]]
      %s152 = smul.u32 %s48, 2
      %s153 = sadd.s32 %s152, %s44
      %s154 = sld [smem:[#allocation11 + %s153]]
      %s155 = ssub.s32 %s36, %s48
      %s156 = ssub.s32 %s151, %s154
      %s157 = sor.u32 %s155, %s156
      %p158 = scmp.eq.s32.totalorder %s157, 0
      %s160 = sadd.s32 %s159, 1
      %s161 = scalar_select %p158, %s159, %s160
      %p164 = pneg %p158
      %p165 = scmp.eq.s32.totalorder %s29, 3
      %p166 = por %p164, %p165
      %p167 = scmp.ne.s32.totalorder %s159, %s162
      %p168 = scmp.eq.s32.totalorder %s29, 0
      %p169 = por %p167, %p168
      %p170 = scmp.ne.s32.totalorder %s159, %s162
      %p171 = scmp.eq.s32.totalorder %s34, 3
      %p172 = por %p170, %p171
      %p173 = scmp.ne.s32.totalorder %s162, %s163
      %p174 = scmp.eq.s32.totalorder %s34, 0
      %p175 = por %p173, %p174
      %p176 = scmp.ne.s32.totalorder %s162, %s163
      %p177 = scmp.eq.s32.totalorder %s35, 3
      %p178 = por %p176, %p177
      %p180 = scmp.ne.s32.totalorder %s163, %s179
      %p181 = scmp.eq.s32.totalorder %s35, 0
      %p182 = por %p180, %p181
      %s184 = sadd.s32 %s183, 1
      %p187 = scmp.eq.s32.totalorder %s29, 3
      %p188 = scmp.ne.s32.totalorder %s183, %s185
      %p189 = scmp.eq.s32.totalorder %s29, 0
      %p190 = por %p188, %p189
      %p191 = scmp.ne.s32.totalorder %s183, %s185
      %p192 = scmp.eq.s32.totalorder %s34, 3
      %p193 = por %p191, %p192
      %p194 = scmp.ne.s32.totalorder %s185, %s186
      %p195 = scmp.eq.s32.totalorder %s34, 0
      %p196 = por %p194, %p195
      %p197 = scmp.ne.s32.totalorder %s185, %s186
      %p198 = scmp.eq.s32.totalorder %s35, 3
      %p199 = por %p197, %p198
      %p201 = scmp.ne.s32.totalorder %s186, %s200
      %p202 = scmp.eq.s32.totalorder %s35, 0
      %p203 = por %p201, %p202
      %s205 = sadd.s32 %s204, 1
      %p208 = scmp.eq.s32.totalorder %s29, 3
      %p209 = scmp.ne.s32.totalorder %s204, %s206
      %p210 = scmp.eq.s32.totalorder %s29, 0
      %p211 = por %p209, %p210
      %p212 = scmp.ne.s32.totalorder %s204, %s206
      %p213 = scmp.eq.s32.totalorder %s34, 3
      %p214 = por %p212, %p213
      %p215 = scmp.ne.s32.totalorder %s206, %s207
      %p216 = scmp.eq.s32.totalorder %s34, 0
      %p217 = por %p215, %p216
      %p218 = scmp.ne.s32.totalorder %s206, %s207
      %p219 = scmp.eq.s32.totalorder %s35, 3
      %p220 = por %p218, %p219
      %p222 = scmp.ne.s32.totalorder %s207, %s221
      %p223 = scmp.eq.s32.totalorder %s35, 0
      %p224 = por %p222, %p223
      %s226 = sadd.s32 %s225, 1
      %p229 = scmp.eq.s32.totalorder %s29, 3
      %p230 = scmp.ne.s32.totalorder %s225, %s227
      %p231 = scmp.eq.s32.totalorder %s29, 0
      %p232 = por %p230, %p231
      %p233 = scmp.ne.s32.totalorder %s225, %s227
      %p234 = scmp.eq.s32.totalorder %s34, 3
      %p235 = por %p233, %p234
      %p236 = scmp.ne.s32.totalorder %s227, %s228
      %p237 = scmp.eq.s32.totalorder %s34, 0
      %p238 = por %p236, %p237
      %p239 = scmp.ne.s32.totalorder %s227, %s228
      %p240 = scmp.eq.s32.totalorder %s35, 3
      %p241 = por %p239, %p240
      %p243 = scmp.ne.s32.totalorder %s228, %s242
      %p244 = scmp.eq.s32.totalorder %s35, 0
      %p245 = por %p243, %p244
      %s246 = ssub.s32 %s36, %s48
      %p247 = scmp.eq.s32.totalorder %s246, 0
      %s249 = sadd.s32 %s248, 1
      %s250 = scalar_select %p247, %s248, %s249
      %p253 = pneg %p247
      %p254 = scmp.eq.s32.totalorder %s29, 3
      %p255 = por %p253, %p254
      %p256 = scmp.ne.s32.totalorder %s248, %s251
      %p257 = scmp.eq.s32.totalorder %s29, 0
      %p258 = por %p256, %p257
      %p259 = scmp.ne.s32.totalorder %s248, %s251
      %p260 = scmp.eq.s32.totalorder %s34, 3
      %p261 = por %p259, %p260
      %p262 = scmp.ne.s32.totalorder %s251, %s252
      %p263 = scmp.eq.s32.totalorder %s34, 0
      %p264 = por %p262, %p263
      %p265 = scmp.ne.s32.totalorder %s251, %s252
      %p266 = scmp.eq.s32.totalorder %s35, 3
      %p267 = por %p265, %p266
      %p269 = scmp.ne.s32.totalorder %s252, %s268
      %p270 = scmp.eq.s32.totalorder %s35, 0
      %p271 = por %p269, %p270
      %p272 = scmp.le.s32.totalorder 1, %s29
      %p273 = scmp.lt.s32.totalorder %s29, 5
      %p274 = pnand %p272, %p273
      %p275 = pneg %p274
      // Predicated region
      $region9: #{tpu_custom_call.1} parent=5 // pred_check
        _
      $region10: #{tpu_custom_call.1} parent=5 // pred_check_branch
        %277 = sbr.rel (%p274) target = $region12
      $region11: #{tpu_custom_call.1} parent=5 // pred_region
        %s278 = ssub.s32 %s29, 1
        // Predicated region
        $region13: #{tpu_custom_call.1} parent=11 // pred_check
          %p279 = pneg %p120
        $region14: #{tpu_custom_call.1} parent=11 // pred_check_branch
          %281 = sbr.rel (%p279) target = $region16
        $region15: #{tpu_custom_call.1} parent=11 // pred_region
          _
        $region16: #{tpu_custom_call.1} parent=11 // pred_fallthru
          _
        // Predicated region
        $region17: #{tpu_custom_call.1} parent=11 // pred_check
          %p282 = pneg %p141
        $region18: #{tpu_custom_call.1} parent=11 // pred_check_branch
          %284 = sbr.rel (%p282) target = $region20
        $region19: #{tpu_custom_call.1} parent=11 // pred_region
          _
        $region20: #{tpu_custom_call.1} parent=11 // pred_fallthru
          _
        // Predicated region
        $region21: #{tpu_custom_call.1} parent=11 // pred_check
          %p285 = pneg %p196
        $region22: #{tpu_custom_call.1} parent=11 // pred_check_branch
          %287 = sbr.rel (%p285) target = $region24
        $region23: #{tpu_custom_call.1} parent=11 // pred_region
          _
        $region24: #{tpu_custom_call.1} parent=11 // pred_fallthru
          _
        // Predicated region
        $region25: #{tpu_custom_call.1} parent=11 // pred_check
          %p288 = pneg %p217
        $region26: #{tpu_custom_call.1} parent=11 // pred_check_branch
          %290 = sbr.rel (%p288) target = $region28
        $region27: #{tpu_custom_call.1} parent=11 // pred_region
          _
        $region28: #{tpu_custom_call.1} parent=11 // pred_fallthru
          _
        // Predicated region
        $region29: #{tpu_custom_call.1} parent=11 // pred_check
          %p291 = pneg %p238
        $region30: #{tpu_custom_call.1} parent=11 // pred_check_branch
          %293 = sbr.rel (%p291) target = $region32
        $region31: #{tpu_custom_call.1} parent=11 // pred_region
          _
        $region32: #{tpu_custom_call.1} parent=11 // pred_fallthru
          _
      $region12: #{tpu_custom_call.1} parent=5 // pred_fallthru
        _
      %p294 = scmp.lt.s32.totalorder %s29, 4
      // Predicated region
      $region33: #{tpu_custom_call.1} parent=5 // pred_check
        %p295 = pneg %p294
      $region34: #{tpu_custom_call.1} parent=5 // pred_check_branch
        %297 = sbr.rel (%p295) target = $region36
      $region35: #{tpu_custom_call.1} parent=5 // pred_region
        // Predicated region
        $region37: #{tpu_custom_call.1} parent=35 // pred_check
          %p298 = pneg %p61
        $region38: #{tpu_custom_call.1} parent=35 // pred_check_branch
          %300 = sbr.rel (%p298) target = $region40
        $region39: #{tpu_custom_call.1} parent=35 // pred_region
          %s301 = smul.u32 16, %s36
          %p302 = scmp.lt.s32.totalorder %s301, 31
          %s303 = scalar_select %p302, %s301, 31
          %s304 = smul.addr %s303, 8
          %s305 = scalar_lea.vmem %s2, %s304
          %s306 = smul.u32 16, %s36
        $region40: #{tpu_custom_call.1} parent=35 // pred_fallthru
          _
        // Predicated region
        $region41: #{tpu_custom_call.1} parent=35 // pred_check
          %p307 = pneg %p93
        $region42: #{tpu_custom_call.1} parent=35 // pred_check_branch
          %309 = sbr.rel (%p307) target = $region44
        $region43: #{tpu_custom_call.1} parent=35 // pred_region
          %s310 = smul.u32 %s36, 2
          %s311 = sadd.s32 %s310, %s37
          %s312 = sld [smem:[#allocation11 + %s311]]
          %s313 = smul.u32 16, %s312
          %p314 = scmp.lt.s32.totalorder %s313, 31
          %s315 = scalar_select %p314, %s313, 31
          %s316 = smul.addr %s315, 8
          %s317 = scalar_lea.vmem %s3, %s316
          %s318 = smul.u32 %s36, 2
          %s319 = sadd.s32 %s318, %s37
          %s320 = sld [smem:[#allocation11 + %s319]]
          %s321 = smul.u32 16, %s320
        $region44: #{tpu_custom_call.1} parent=35 // pred_fallthru
          _
        // Predicated region
        $region45: #{tpu_custom_call.1} parent=35 // pred_check
          %p322 = pneg %p169
        $region46: #{tpu_custom_call.1} parent=35 // pred_check_branch
          %324 = sbr.rel (%p322) target = $region48
        $region47: #{tpu_custom_call.1} parent=35 // pred_region
          %s325 = sand.u32 %s159, 1
          %s326 = sand.u32 %s159, 1
          %s327 = smul.addr %s326, 32
          %s328 = scalar_lea.vmem [#allocation12], %s327
          %s329 = smul.u32 %s36, 2
          %s330 = sadd.s32 %s329, %s37
          %s331 = sld [smem:[#allocation11 + %s330]]
          %s332 = smul.u32 4, %s36
          %s333 = smul.addr %s332, 2
          %s334 = sadd.s32 %s331, %s333
          %s335 = smul.addr %s334, 8
          %s336 = scalar_lea.vmem %s6, %s335
          // Predicated region
          $region49: #{tpu_custom_call.1} parent=47 // pred_check
            _
          $region50: #{tpu_custom_call.1} parent=47 // pred_check_branch
            %338 = sbr.rel (0) target = $region52
          $region51: #{tpu_custom_call.1} parent=47 // pred_region
            // Predicated region
            $region53: #{tpu_custom_call.1} parent=51 // pred_check
              _
            $region54: #{tpu_custom_call.1} parent=51 // pred_check_branch
              %340 = sbr.rel (0) target = $region56
            $region55: #{tpu_custom_call.1} parent=51 // pred_region
              // Predicated region
              $region68: #{tpu_custom_call.1} parent=55 // pred_check
                _
              $region69: #{tpu_custom_call.1} parent=55 // pred_check_branch
                %361 = sbr.rel (0) target = $region71
              $region70: #{tpu_custom_call.1} parent=55 // pred_region
                loop: start=0, step=1, limit=1
                $region72: #{tpu_custom_call.1} parent=70 // loop_pre_header
                  _
                $region73: #{tpu_custom_call.1} parent=70 // loop_header
                  %s363 = sphi 0, %s367
                  %p364 = scmp.ge.s32.totalorder %s363, 1
                  %s368 = sphi %s336, %s336
                  %s369 = sphi %s328, %s328
                $region74: #{tpu_custom_call.1} parent=70 // loop_header_branch
                  %366 = sbr.rel (%p364) target = $region78
                $region75: #{tpu_custom_call.1} parent=70 // loop_body
                  %v370 = vld [vmem:[%s368] sm:$0xff]
                  %371 = vst [vmem:[%s369] sm:$0xff] %v370
                  %v372 = vld [vmem:[%s368 + $0x10] sm:$0xff]
                  %373 = vst [vmem:[%s369 + $0x8] sm:$0xff] %v372
                  %v374 = vld [vmem:[%s368 + $0x20] sm:$0xff]
                  %375 = vst [vmem:[%s369 + $0x10] sm:$0xff] %v374
                  %v376 = vld [vmem:[%s368 + $0x30] sm:$0xff]
                  %377 = vst [vmem:[%s369 + $0x18] sm:$0xff] %v376
                $region76: #{tpu_custom_call.1} parent=70 // loop_footer
                  %s367 = sadd.s32 1, %s363
                $region77: #{tpu_custom_call.1} parent=70 // loop_footer_branch
                  %362 = sbr.rel target = $region73
                $region78: #{tpu_custom_call.1} parent=70 // loop_exit
                  _
              $region71: #{tpu_custom_call.1} parent=55 // pred_fallthru
                _
              // Predicated region
              $region79: #{tpu_custom_call.1} parent=55 // pred_check
                _
              $region80: #{tpu_custom_call.1} parent=55 // pred_check_branch
                %379 = sbr.rel target = $region82
              $region81: #{tpu_custom_call.1} parent=55 // pred_region
                _
              $region82: #{tpu_custom_call.1} parent=55 // pred_fallthru
                _
            $region56: #{tpu_custom_call.1} parent=51 // pred_fallthru
              _
            // Predicated region
            $region57: #{tpu_custom_call.1} parent=51 // pred_check
              _
            $region58: #{tpu_custom_call.1} parent=51 // pred_check_branch
              %342 = sbr.rel target = $region60
            $region59: #{tpu_custom_call.1} parent=51 // pred_region
              loop: start=0, step=1, limit=1
              $region61: #{tpu_custom_call.1} parent=59 // loop_pre_header
                _
              $region62: #{tpu_custom_call.1} parent=59 // loop_header
                %s345 = sphi 0, %s349
                %p346 = scmp.ge.s32.totalorder %s345, 1
                %s350 = sphi %s336, %s336
                %s351 = sphi %s328, %s328
              $region63: #{tpu_custom_call.1} parent=59 // loop_header_branch
                %348 = sbr.rel (%p346) target = $region67
              $region64: #{tpu_custom_call.1} parent=59 // loop_body
                %v352 = vld [vmem:[%s350] sm:$0xff]
                %353 = vst [vmem:[%s351] sm:$0xff] %v352
                %v354 = vld [vmem:[%s350 + $0x10] sm:$0xff]
                %355 = vst [vmem:[%s351 + $0x8] sm:$0xff] %v354
                %v356 = vld [vmem:[%s350 + $0x20] sm:$0xff]
                %357 = vst [vmem:[%s351 + $0x10] sm:$0xff] %v356
                %v358 = vld [vmem:[%s350 + $0x30] sm:$0xff]
                %359 = vst [vmem:[%s351 + $0x18] sm:$0xff] %v358
              $region65: #{tpu_custom_call.1} parent=59 // loop_footer
                %s349 = sadd.s32 1, %s345
              $region66: #{tpu_custom_call.1} parent=59 // loop_footer_branch
                %344 = sbr.rel target = $region62
              $region67: #{tpu_custom_call.1} parent=59 // loop_exit
                _
            $region60: #{tpu_custom_call.1} parent=51 // pred_fallthru
              _
          $region52: #{tpu_custom_call.1} parent=47 // pred_fallthru
            _
          %380 = vnop
        $region48: #{tpu_custom_call.1} parent=35 // pred_fallthru
          _
      $region36: #{tpu_custom_call.1} parent=5 // pred_fallthru
        _
      %p381 = scmp.le.s32.totalorder 1, %s29
      %p382 = scmp.lt.s32.totalorder %s29, 5
      %p383 = pnand %p381, %p382
      %p384 = pneg %p383
      // Predicated region
      $region83: #{tpu_custom_call.1} parent=5 // pred_check
        _
      $region84: #{tpu_custom_call.1} parent=5 // pred_check_branch
        %386 = sbr.rel (%p383) target = $region86
      $region85: #{tpu_custom_call.1} parent=5 // pred_region
        %s387 = ssub.s32 %s29, 1
        %s388 = sand.u32 %s162, 1
        %s389 = sand.u32 %s162, 1
        %s390 = smul.addr %s389, 32
        %s391 = scalar_lea.vmem [#allocation12], %s390
        // Predicated region
        $region87: #{tpu_custom_call.1} parent=85 // pred_check
          %p392 = pneg %p175
        $region88: #{tpu_custom_call.1} parent=85 // pred_check_branch
          %394 = sbr.rel (%p392) target = $region90
        $region89: #{tpu_custom_call.1} parent=85 // pred_region
          _
        $region90: #{tpu_custom_call.1} parent=85 // pred_fallthru
          _
        %s395 = smul.u32 16, %s38
        %p396 = scmp.lt.s32.totalorder %s395, 31
        %s397 = scalar_select %p396, %s395, 31
        %s398 = smul.addr %s397, 8
        %s399 = scalar_lea.vmem %s2, %s398
        %p400 = pneg %p67
        %p401 = pneg %p64
        %s402 = smul.u32 %s38, 2
        %s403 = sadd.s32 %s402, %s39
        %s404 = sld [smem:[#allocation11 + %s403]]
        %s405 = smul.u32 16, %s404
        %p406 = scmp.lt.s32.totalorder %s405, 31
        %s407 = scalar_select %p406, %s405, 31
        %s408 = smul.addr %s407, 8
        %s409 = scalar_lea.vmem %s3, %s408
        %p410 = pneg %p99
        %p411 = pneg %p96
        %p412 = pneg %p120
        %p413 = pneg %p117
        %p414 = pneg %p141
        %p415 = pneg %p138
        %s416 = sand.u32 %s162, 1
        %s417 = sand.u32 %s162, 1
        %s418 = smul.addr %s417, 32
        %s419 = scalar_lea.vmem [#allocation12], %s418
        %p420 = pneg %p175
        %p421 = pneg %p172
        %p422 = pneg %p196
        %p423 = pneg %p193
        %p424 = pneg %p217
        %p425 = pneg %p214
        %p426 = pneg %p238
        %p427 = pneg %p235
        %p428 = pneg %p264
        %p429 = pneg %p261
        %s430 = sand.u32 %s251, 1
        %s431 = scalar_lea.sflag [#allocation14], %s430
        %s432 = sand.u32 %s251, 1
        %s433 = smul.addr %s432, 128
        %s434 = scalar_lea.vmem [#allocation13], %s433
        %s435 = smul.u32 16, %s38
        %p436 = scmp.lt.s32.totalorder %s435, 31
        %s437 = scalar_select %p436, %s435, 31
        %s438 = smul.addr %s437, 8
        %s439 = scalar_lea.vmem %s2, %s438
        %s440 = smul.u32 16, %s38
        %s441 = smul.u32 %s38, 2
        %s442 = sadd.s32 %s441, %s39
        %s443 = sld [smem:[#allocation11 + %s442]]
        %s444 = smul.u32 16, %s443
        %p445 = scmp.lt.s32.totalorder %s444, 31
        %s446 = scalar_select %p445, %s444, 31
        %s447 = smul.addr %s446, 8
        %s448 = scalar_lea.vmem %s3, %s447
        %s449 = smul.u32 %s38, 2
        %s450 = sadd.s32 %s449, %s39
        %s451 = sld [smem:[#allocation11 + %s450]]
        %s452 = smul.u32 16, %s451
        %s453 = smul.u32 %s38, 2
        %s454 = sadd.s32 %s453, %s39
        %s455 = sld [smem:[#allocation11 + %s454]]
        %s456 = smul.u32 4, %s38
        %s457 = smul.u32 16, %s38
        %p458 = scmp.eq.s32.totalorder %s39, 0
        // Predicated region
        $region91: #{tpu_custom_call.1} parent=85 // pred_check
          %p459 = pneg %p458
        $region92: #{tpu_custom_call.1} parent=85 // pred_check_branch
          %461 = sbr.rel (%p459) target = $region94
        $region93: #{tpu_custom_call.1} parent=85 // pred_region
          %v462 = vld [vmem:[%s439] sm:$0xff]
          %v463 = vld [vmem:[%s439 + $0x8] sm:$0xff]
          %v464 = vld [vmem:[%s439 + $0x10] sm:$0xff]
          %v465 = vld [vmem:[%s439 + $0x18] sm:$0xff]
          %v466 = vld [vmem:[%s439 + $0x20] sm:$0xff]
          %v467 = vld [vmem:[%s439 + $0x28] sm:$0xff]
          %v468 = vld [vmem:[%s439 + $0x30] sm:$0xff]
          %v469 = vld [vmem:[%s439 + $0x38] sm:$0xff]
          %v470 = vld [vmem:[%s439 + $0x40] sm:$0xff]
          %v471 = vld [vmem:[%s439 + $0x48] sm:$0xff]
          %v472 = vld [vmem:[%s439 + $0x50] sm:$0xff]
          %v473 = vld [vmem:[%s439 + $0x58] sm:$0xff]
          %v474 = vld [vmem:[%s439 + $0x60] sm:$0xff]
          %v475 = vld [vmem:[%s439 + $0x68] sm:$0xff]
          %v476 = vld [vmem:[%s439 + $0x70] sm:$0xff]
          %v477 = vld [vmem:[%s439 + $0x78] sm:$0xff]
          %v478 = vld [vmem:[%s4] sm:$0xff]
          %v479 = vld [vmem:[%s4 + $0x8] sm:$0xff]
          %v480 = vld [vmem:[%s4 + $0x38] sm:$0xff]
          %v481 = vld [vmem:[%s4 + $0x40] sm:$0xff]
          %v482 = vld [vmem:[%s4 + $0x70] sm:$0xff]
          %v483 = vld [vmem:[%s4 + $0x78] sm:$0xff]
          %v484 = vld [vmem:[%s4 + $0xa8] sm:$0xff]
          %v485 = vld [vmem:[%s4 + $0xb0] sm:$0xff]
          %v486 = vld [vmem:[%s5] sm:$0x3]
          %v488 = vlaneseq
          %v489 = vshrl.u32 %v488, 7
          %v490 = vsub.s32 0, %v489
          %v491 = vrot.slane %v486, %v490
          %v492 = vlaneseq
          %v493 = vshrl.u32 %v492, 7
          %v494 = vsub.s32 1, %v493
          %v495 = vrot.slane %v486, %v494
          %vm498 = vcmask 261120
          %v500 = vsel %vm498, %v462, 0
          %v503 = vsel %vm498, %v463, 0
          %v506 = vsel %vm498, %v464, 0
          %v509 = vsel %vm498, %v465, 0
          %v512 = vsel %vm498, %v466, 0
          %v515 = vsel %vm498, %v467, 0
          %v518 = vsel %vm498, %v468, 0
          %v521 = vsel %vm498, %v469, 0
          %v524 = vsel %vm498, %v470, 0
          %v527 = vsel %vm498, %v471, 0
          %v530 = vsel %vm498, %v472, 0
          %v533 = vsel %vm498, %v473, 0
          %v536 = vsel %vm498, %v474, 0
          %v539 = vsel %vm498, %v475, 0
          %v542 = vsel %vm498, %v476, 0
          %v545 = vsel %vm498, %v477, 0
          %547 = vmatprep.subr.mxu0 %v479
          %548 = vmatpush1.msra.mxu0 %v478
          %549 = vmatprep.subr.mxu0 %v481
          %550 = vmatpush1.msra.mxu0 %v480
          %551 = vmatprep.subr.mxu0 %v483
          %552 = vmatpush1.msra.mxu0 %v482
          %553 = vmatprep.subr.mxu0 %v485
          %554 = vmatpush1.msra.mxu0 %v484
          %555 = vmatprep.subr.mxu0 0.0
          %556 = vmatpush1.msra.mxu0 0.0
          %557 = vmatprep.subr.mxu0 0.0
          %558 = vmatpush1.msra.mxu0 0.0
          %559 = vmatprep.subr.mxu0 0.0
          %560 = vmatpush1.msra.mxu0 0.0
          %561 = vmatprep.subr.mxu0 0.0
          %562 = vmatpush1.msra.mxu0 0.0
          %563 = vmatprep.subr.mxu0 0.0
          %564 = vmatpush1.msra.mxu0 0.0
          %565 = vmatprep.subr.mxu0 0.0
          %566 = vmatpush1.msra.mxu0 0.0
          %567 = vmatprep.subr.mxu0 0.0
          %568 = vmatpush1.msra.mxu0 0.0
          %569 = vmatprep.subr.mxu0 0.0
          %570 = vmatpush1.msra.mxu0 0.0
          %571 = vmatprep.subr.mxu0 0.0
          %572 = vmatpush1.msra.mxu0 0.0
          %573 = vmatprep.subr.mxu0 0.0
          %574 = vmatpush1.msra.mxu0 0.0
          %575 = vmatprep.subr.mxu0 0.0
          %576 = vmatpush1.msra.mxu0 0.0
          %577 = vmatprep.subr.mxu0 0.0
          %578 = vmatpush1.msra.mxu0 0.0
          %579 = vmatprep.subr.mxu0 0.0
          %580 = vmatpush1.msra.mxu0 0.0
          %581 = vmatprep.subr.mxu0 0.0
          %582 = vmatpush1.msra.mxu0 0.0
          %583 = vmatprep.subr.mxu0 0.0
          %584 = vmatpush1.msra.mxu0 0.0
          %585 = vmatprep.subr.mxu0 0.0
          %586 = vmatpush1.msra.mxu0 0.0
          %587 = vmatprep.subr.mxu0 0.0
          %588 = vmatpush1.msra.mxu0 0.0
          %589 = vmatprep.subr.mxu0 0.0
          %590 = vmatpush1.msra.mxu0 0.0
          %591 = vmatprep.subr.mxu0 0.0
          %592 = vmatpush1.msra.mxu0 0.0
          %593 = vmatprep.subr.mxu0 0.0
          %594 = vmatpush1.msra.mxu0 0.0
          %595 = vmatprep.subr.mxu0 0.0
          %596 = vmatpush1.msra.mxu0 0.0
          %597 = vmatprep.subr.mxu0 0.0
          %598 = vmatpush1.msra.mxu0 0.0
          %599 = vmatprep.subr.mxu0 0.0
          %600 = vmatpush1.msra.mxu0 0.0
          %601 = vmatprep.subr.mxu0 0.0
          %602 = vmatpush1.msra.mxu0 0.0
          %603 = vmatprep.subr.mxu0 0.0
          %604 = vmatpush1.msra.mxu0 0.0
          %605 = vmatprep.subr.mxu0 0.0
          %606 = vmatpush1.msra.mxu0 0.0
          %607 = vmatprep.subr.mxu0 0.0
          %608 = vmatpush1.msra.mxu0 0.0
          %609 = vmatprep.subr.mxu0 0.0
          %610 = vmatpush1.msra.mxu0 0.0
          %611 = vmatprep.mubr.f32.mxu0 0.0
          %612 = vmatmul.mubr.f32.gmra.mrb[0].mxu0 %v500
          %v613 = vpop.f32.mrb[0].mxu0
          %v614 = vadd.f32 %v491, %v613
          %v615 = vpop.f32.mrb[0].mxu0
          %v616 = vadd.f32 %v495, %v615
          %617 = vmatprep.mubr.f32.mxu0 0.0
          %618 = vmatmul.mubr.f32.gmra.mrb[0].mxu0 %v503
          %v619 = vpop.f32.mrb[0].mxu0
          %v620 = vadd.f32 %v491, %v619
          %v621 = vpop.f32.mrb[0].mxu0
          %v622 = vadd.f32 %v495, %v621
          %623 = vmatprep.mubr.f32.mxu0 0.0
          %624 = vmatmul.mubr.f32.gmra.mrb[0].mxu0 %v506
          %v625 = vpop.f32.mrb[0].mxu0
          %v626 = vadd.f32 %v491, %v625
          %v627 = vpop.f32.mrb[0].mxu0
          %v628 = vadd.f32 %v495, %v627
          %629 = vmatprep.mubr.f32.mxu0 0.0
          %630 = vmatmul.mubr.f32.gmra.mrb[0].mxu0 %v509
          %v631 = vpop.f32.mrb[0].mxu0
          %v632 = vadd.f32 %v491, %v631
          %v633 = vpop.f32.mrb[0].mxu0
          %v634 = vadd.f32 %v495, %v633
          %635 = vmatprep.mubr.f32.mxu0 0.0
          %636 = vmatmul.mubr.f32.gmra.mrb[0].mxu0 %v512
          %v637 = vpop.f32.mrb[0].mxu0
          %v638 = vadd.f32 %v491, %v637
          %v639 = vpop.f32.mrb[0].mxu0
          %v640 = vadd.f32 %v495, %v639
          %641 = vmatprep.mubr.f32.mxu0 0.0
          %642 = vmatmul.mubr.f32.gmra.mrb[0].mxu0 %v515
          %v643 = vpop.f32.mrb[0].mxu0
          %v644 = vadd.f32 %v491, %v643
          %v645 = vpop.f32.mrb[0].mxu0
          %v646 = vadd.f32 %v495, %v645
          %647 = vmatprep.mubr.f32.mxu0 0.0
          %648 = vmatmul.mubr.f32.gmra.mrb[0].mxu0 %v518
          %v649 = vpop.f32.mrb[0].mxu0
          %v650 = vadd.f32 %v491, %v649
          %v651 = vpop.f32.mrb[0].mxu0
          %v652 = vadd.f32 %v495, %v651
          %653 = vmatprep.mubr.f32.mxu0 0.0
          %654 = vmatmul.mubr.f32.gmra.mrb[0].mxu0 %v521
          %v655 = vpop.f32.mrb[0].mxu0
          %v656 = vadd.f32 %v491, %v655
          %v657 = vpop.f32.mrb[0].mxu0
          %v658 = vadd.f32 %v495, %v657
          %659 = vmatprep.mubr.f32.mxu0 0.0
          %660 = vmatmul.mubr.f32.gmra.mrb[0].mxu0 %v524
          %v661 = vpop.f32.mrb[0].mxu0
          %v662 = vadd.f32 %v491, %v661
          %v663 = vpop.f32.mrb[0].mxu0
          %v664 = vadd.f32 %v495, %v663
          %665 = vmatprep.mubr.f32.mxu0 0.0
          %666 = vmatmul.mubr.f32.gmra.mrb[0].mxu0 %v527
          %v667 = vpop.f32.mrb[0].mxu0
          %v668 = vadd.f32 %v491, %v667
          %v669 = vpop.f32.mrb[0].mxu0
          %v670 = vadd.f32 %v495, %v669
          %671 = vmatprep.mubr.f32.mxu0 0.0
          %672 = vmatmul.mubr.f32.gmra.mrb[0].mxu0 %v530
          %v673 = vpop.f32.mrb[0].mxu0
          %v674 = vadd.f32 %v491, %v673
          %v675 = vpop.f32.mrb[0].mxu0
          %v676 = vadd.f32 %v495, %v675
          %677 = vmatprep.mubr.f32.mxu0 0.0
          %678 = vmatmul.mubr.f32.gmra.mrb[0].mxu0 %v533
          %v679 = vpop.f32.mrb[0].mxu0
          %v680 = vadd.f32 %v491, %v679
          %v681 = vpop.f32.mrb[0].mxu0
          %v682 = vadd.f32 %v495, %v681
          %683 = vmatprep.mubr.f32.mxu0 0.0
          %684 = vmatmul.mubr.f32.gmra.mrb[0].mxu0 %v536
          %v685 = vpop.f32.mrb[0].mxu0
          %v686 = vadd.f32 %v491, %v685
          %v687 = vpop.f32.mrb[0].mxu0
          %v688 = vadd.f32 %v495, %v687
          %689 = vmatprep.mubr.f32.mxu0 0.0
          %690 = vmatmul.mubr.f32.gmra.mrb[0].mxu0 %v539
          %v691 = vpop.f32.mrb[0].mxu0
          %v692 = vadd.f32 %v491, %v691
          %v693 = vpop.f32.mrb[0].mxu0
          %v694 = vadd.f32 %v495, %v693
          %695 = vmatprep.mubr.f32.mxu0 0.0
          %696 = vmatmul.mubr.f32.gmra.mrb[0].mxu0 %v542
          %v697 = vpop.f32.mrb[0].mxu0
          %v698 = vadd.f32 %v491, %v697
          %v699 = vpop.f32.mrb[0].mxu0
          %v700 = vadd.f32 %v495, %v699
          %701 = vmatprep.mubr.f32.mxu0 0.0
          %702 = vmatmul.mubr.f32.gmra.mrb[0].mxu0 %v545
          %v703 = vpop.f32.mrb[0].mxu0
          %v704 = vadd.f32 %v491, %v703
          %v705 = vpop.f32.mrb[0].mxu0
          %v706 = vadd.f32 %v495, %v705
          %707 = vdwg.mxu0
          %v708 = vld [vmem:[%s4 + $0x30] sm:$0xff]
          %v709 = vld [vmem:[%s4 + $0x68] sm:$0xff]
          %v710 = vld [vmem:[%s4 + $0xa0] sm:$0xff]
          %v711 = vld [vmem:[%s4 + $0xd8] sm:$0xff]
          %v712 = vld [vmem:[%s5 + $0x6] sm:$0x1]
          %v714 = vlaneseq
          %v715 = vshrl.u32 %v714, 7
          %v716 = vsub.s32 0, %v715
          %v717 = vrot.slane %v712, %v716
          %719 = vmatprep.subr.mxu0 0.0
          %720 = vmatpush1.msra.mxu0 %v708
          %721 = vmatprep.subr.mxu0 0.0
          %722 = vmatpush1.msra.mxu0 %v709
          %723 = vmatprep.subr.mxu0 0.0
          %724 = vmatpush1.msra.mxu0 %v710
          %725 = vmatprep.subr.mxu0 0.0
          %726 = vmatpush1.msra.mxu0 %v711
          %727 = vmatprep.subr.mxu0 0.0
          %728 = vmatpush1.msra.mxu0 0.0
          %729 = vmatprep.subr.mxu0 0.0
          %730 = vmatpush1.msra.mxu0 0.0
          %731 = vmatprep.subr.mxu0 0.0
          %732 = vmatpush1.msra.mxu0 0.0
          %733 = vmatprep.subr.mxu0 0.0
          %734 = vmatpush1.msra.mxu0 0.0
          %735 = vmatprep.subr.mxu0 0.0
          %736 = vmatpush1.msra.mxu0 0.0
          %737 = vmatprep.subr.mxu0 0.0
          %738 = vmatpush1.msra.mxu0 0.0
          %739 = vmatprep.subr.mxu0 0.0
          %740 = vmatpush1.msra.mxu0 0.0
          %741 = vmatprep.subr.mxu0 0.0
          %742 = vmatpush1.msra.mxu0 0.0
          %743 = vmatprep.subr.mxu0 0.0
          %744 = vmatpush1.msra.mxu0 0.0
          %745 = vmatprep.subr.mxu0 0.0
          %746 = vmatpush1.msra.mxu0 0.0
          %747 = vmatprep.subr.mxu0 0.0
          %748 = vmatpush1.msra.mxu0 0.0
          %749 = vmatprep.subr.mxu0 0.0
          %750 = vmatpush1.msra.mxu0 0.0
          %751 = vmatprep.subr.mxu0 0.0
          %752 = vmatpush1.msra.mxu0 0.0
          %753 = vmatprep.subr.mxu0 0.0
          %754 = vmatpush1.msra.mxu0 0.0
          %755 = vmatprep.subr.mxu0 0.0
          %756 = vmatpush1.msra.mxu0 0.0
          %757 = vmatprep.subr.mxu0 0.0
          %758 = vmatpush1.msra.mxu0 0.0
          %759 = vmatprep.subr.mxu0 0.0
          %760 = vmatpush1.msra.mxu0 0.0
          %761 = vmatprep.subr.mxu0 0.0
          %762 = vmatpush1.msra.mxu0 0.0
          %763 = vmatprep.subr.mxu0 0.0
          %764 = vmatpush1.msra.mxu0 0.0
          %765 = vmatprep.subr.mxu0 0.0
          %766 = vmatpush1.msra.mxu0 0.0
          %767 = vmatprep.subr.mxu0 0.0
          %768 = vmatpush1.msra.mxu0 0.0
          %769 = vmatprep.subr.mxu0 0.0
          %770 = vmatpush1.msra.mxu0 0.0
          %771 = vmatprep.subr.mxu0 0.0
          %772 = vmatpush1.msra.mxu0 0.0
          %773 = vmatprep.subr.mxu0 0.0
          %774 = vmatpush1.msra.mxu0 0.0
          %775 = vmatprep.subr.mxu0 0.0
          %776 = vmatpush1.msra.mxu0 0.0
          %777 = vmatprep.subr.mxu0 0.0
          %778 = vmatpush1.msra.mxu0 0.0
          %779 = vmatprep.subr.mxu0 0.0
          %780 = vmatpush1.msra.mxu0 0.0
          %781 = vmatprep.subr.mxu0 0.0
          %782 = vmatpush1.msra.mxu0 0.0
          %783 = vmatprep.mubr.f32.mxu0 0.0
          %784 = vmatmul.mubr.f32.gmra.mrb[0].mxu0 %v500
          %v785 = vpop.f32.mrb[0].mxu0
          %v786 = vadd.f32 %v717, %v785
          %v787 = vpop.f32.mrb[0].mxu0
          %788 = vmatprep.mubr.f32.mxu0 0.0
          %789 = vmatmul.mubr.f32.gmra.mrb[0].mxu0 %v503
          %v790 = vpop.f32.mrb[0].mxu0
          %v791 = vadd.f32 %v717, %v790
          %v792 = vpop.f32.mrb[0].mxu0
          %793 = vmatprep.mubr.f32.mxu0 0.0
          %794 = vmatmul.mubr.f32.gmra.mrb[0].mxu0 %v506
          %v795 = vpop.f32.mrb[0].mxu0
          %v796 = vadd.f32 %v717, %v795
          %v797 = vpop.f32.mrb[0].mxu0
          %798 = vmatprep.mubr.f32.mxu0 0.0
          %799 = vmatmul.mubr.f32.gmra.mrb[0].mxu0 %v509
          %v800 = vpop.f32.mrb[0].mxu0
          %v801 = vadd.f32 %v717, %v800
          %v802 = vpop.f32.mrb[0].mxu0
          %803 = vmatprep.mubr.f32.mxu0 0.0
          %804 = vmatmul.mubr.f32.gmra.mrb[0].mxu0 %v512
          %v805 = vpop.f32.mrb[0].mxu0
          %v806 = vadd.f32 %v717, %v805
          %v807 = vpop.f32.mrb[0].mxu0
          %808 = vmatprep.mubr.f32.mxu0 0.0
          %809 = vmatmul.mubr.f32.gmra.mrb[0].mxu0 %v515
          %v810 = vpop.f32.mrb[0].mxu0
          %v811 = vadd.f32 %v717, %v810
          %v812 = vpop.f32.mrb[0].mxu0
          %813 = vmatprep.mubr.f32.mxu0 0.0
          %814 = vmatmul.mubr.f32.gmra.mrb[0].mxu0 %v518
          %v815 = vpop.f32.mrb[0].mxu0
          %v816 = vadd.f32 %v717, %v815
          %v817 = vpop.f32.mrb[0].mxu0
          %818 = vmatprep.mubr.f32.mxu0 0.0
          %819 = vmatmul.mubr.f32.gmra.mrb[0].mxu0 %v521
          %v820 = vpop.f32.mrb[0].mxu0
          %v821 = vadd.f32 %v717, %v820
          %v822 = vpop.f32.mrb[0].mxu0
          %823 = vmatprep.mubr.f32.mxu0 0.0
          %824 = vmatmul.mubr.f32.gmra.mrb[0].mxu0 %v524
          %v825 = vpop.f32.mrb[0].mxu0
          %v826 = vadd.f32 %v717, %v825
          %v827 = vpop.f32.mrb[0].mxu0
          %828 = vmatprep.mubr.f32.mxu0 0.0
          %829 = vmatmul.mubr.f32.gmra.mrb[0].mxu0 %v527
          %v830 = vpop.f32.mrb[0].mxu0
          %v831 = vadd.f32 %v717, %v830
          %v832 = vpop.f32.mrb[0].mxu0
          %833 = vmatprep.mubr.f32.mxu0 0.0
          %834 = vmatmul.mubr.f32.gmra.mrb[0].mxu0 %v530
          %v835 = vpop.f32.mrb[0].mxu0
          %v836 = vadd.f32 %v717, %v835
          %v837 = vpop.f32.mrb[0].mxu0
          %838 = vmatprep.mubr.f32.mxu0 0.0
          %839 = vmatmul.mubr.f32.gmra.mrb[0].mxu0 %v533
          %v840 = vpop.f32.mrb[0].mxu0
          %v841 = vadd.f32 %v717, %v840
          %v842 = vpop.f32.mrb[0].mxu0
          %843 = vmatprep.mubr.f32.mxu0 0.0
          %844 = vmatmul.mubr.f32.gmra.mrb[0].mxu0 %v536
          %v845 = vpop.f32.mrb[0].mxu0
          %v846 = vadd.f32 %v717, %v845
          %v847 = vpop.f32.mrb[0].mxu0
          %848 = vmatprep.mubr.f32.mxu0 0.0
          %849 = vmatmul.mubr.f32.gmra.mrb[0].mxu0 %v539
          %v850 = vpop.f32.mrb[0].mxu0
          %v851 = vadd.f32 %v717, %v850
          %v852 = vpop.f32.mrb[0].mxu0
          %853 = vmatprep.mubr.f32.mxu0 0.0
          %854 = vmatmul.mubr.f32.gmra.mrb[0].mxu0 %v542
          %v855 = vpop.f32.mrb[0].mxu0
          %v856 = vadd.f32 %v717, %v855
          %v857 = vpop.f32.mrb[0].mxu0
          %858 = vmatprep.mubr.f32.mxu0 0.0
          %859 = vmatmul.mubr.f32.gmra.mrb[0].mxu0 %v545
          %v860 = vpop.f32.mrb[0].mxu0
          %v861 = vadd.f32 %v717, %v860
          %v862 = vpop.f32.mrb[0].mxu0
          %863 = vdwg.mxu0
          %v864 = vmul.f32 %v614, 0.17677669
          %v865 = vmul.f32 %v616, 0.17677669
          %v866 = vmul.f32 %v620, 0.17677669
          %v867 = vmul.f32 %v622, 0.17677669
          %v868 = vmul.f32 %v626, 0.17677669
          %v869 = vmul.f32 %v628, 0.17677669
          %v870 = vmul.f32 %v632, 0.17677669
          %v871 = vmul.f32 %v634, 0.17677669
          %v872 = vmul.f32 %v638, 0.17677669
          %v873 = vmul.f32 %v640, 0.17677669
          %v874 = vmul.f32 %v644, 0.17677669
          %v875 = vmul.f32 %v646, 0.17677669
          %v876 = vmul.f32 %v650, 0.17677669
          %v877 = vmul.f32 %v652, 0.17677669
          %v878 = vmul.f32 %v656, 0.17677669
          %v879 = vmul.f32 %v658, 0.17677669
          %v880 = vmul.f32 %v662, 0.17677669
          %v881 = vmul.f32 %v664, 0.17677669
          %v882 = vmul.f32 %v668, 0.17677669
          %v883 = vmul.f32 %v670, 0.17677669
          %v884 = vmul.f32 %v674, 0.17677669
          %v885 = vmul.f32 %v676, 0.17677669
          %v886 = vmul.f32 %v680, 0.17677669
          %v887 = vmul.f32 %v682, 0.17677669
          %v888 = vmul.f32 %v686, 0.17677669
          %v889 = vmul.f32 %v688, 0.17677669
          %v890 = vmul.f32 %v692, 0.17677669
          %v891 = vmul.f32 %v694, 0.17677669
          %v892 = vmul.f32 %v698, 0.17677669
          %v893 = vmul.f32 %v700, 0.17677669
          %v894 = vmul.f32 %v704, 0.17677669
          %v895 = vmul.f32 %v706, 0.17677669
          %896 = vst [vmem:[#allocation2] sm:$0xff] %v864
          %897 = vst [vmem:[#allocation2 + $0x8] sm:$0xff] %v865
          %898 = vst [vmem:[#allocation2 + $0x10] sm:$0xff] %v866
          %899 = vst [vmem:[#allocation2 + $0x18] sm:$0xff] %v867
          %900 = vst [vmem:[#allocation2 + $0x20] sm:$0xff] %v868
          %901 = vst [vmem:[#allocation2 + $0x28] sm:$0xff] %v869
          %902 = vst [vmem:[#allocation2 + $0x30] sm:$0xff] %v870
          %903 = vst [vmem:[#allocation2 + $0x38] sm:$0xff] %v871
          %904 = vst [vmem:[#allocation2 + $0x40] sm:$0xff] %v872
          %905 = vst [vmem:[#allocation2 + $0x48] sm:$0xff] %v873
          %906 = vst [vmem:[#allocation2 + $0x50] sm:$0xff] %v874
          %907 = vst [vmem:[#allocation2 + $0x58] sm:$0xff] %v875
          %908 = vst [vmem:[#allocation2 + $0x60] sm:$0xff] %v876
          %909 = vst [vmem:[#allocation2 + $0x68] sm:$0xff] %v877
          %910 = vst [vmem:[#allocation2 + $0x70] sm:$0xff] %v878
          %911 = vst [vmem:[#allocation2 + $0x78] sm:$0xff] %v879
          %912 = vst [vmem:[#allocation2 + $0x80] sm:$0xff] %v880
          %913 = vst [vmem:[#allocation2 + $0x88] sm:$0xff] %v881
          %914 = vst [vmem:[#allocation2 + $0x90] sm:$0xff] %v882
          %915 = vst [vmem:[#allocation2 + $0x98] sm:$0xff] %v883
          %916 = vst [vmem:[#allocation2 + $0xa0] sm:$0xff] %v884
          %917 = vst [vmem:[#allocation2 + $0xa8] sm:$0xff] %v885
          %918 = vst [vmem:[#allocation2 + $0xb0] sm:$0xff] %v886
          %919 = vst [vmem:[#allocation2 + $0xb8] sm:$0xff] %v887
          %920 = vst [vmem:[#allocation2 + $0xc0] sm:$0xff] %v888
          %921 = vst [vmem:[#allocation2 + $0xc8] sm:$0xff] %v889
          %922 = vst [vmem:[#allocation2 + $0xd0] sm:$0xff] %v890
          %923 = vst [vmem:[#allocation2 + $0xd8] sm:$0xff] %v891
          %924 = vst [vmem:[#allocation2 + $0xe0] sm:$0xff] %v892
          %925 = vst [vmem:[#allocation2 + $0xe8] sm:$0xff] %v893
          %926 = vst [vmem:[#allocation2 + $0xf0] sm:$0xff] %v894
          %927 = vst [vmem:[#allocation2 + $0xf8] sm:$0xff] %v895
          %928 = vst [vmem:[#allocation5] sm:$0xff] %v786
          %929 = vst [vmem:[#allocation5 + $0x8] sm:$0xff] %v791
          %930 = vst [vmem:[#allocation5 + $0x10] sm:$0xff] %v796
          %931 = vst [vmem:[#allocation5 + $0x18] sm:$0xff] %v801
          %932 = vst [vmem:[#allocation5 + $0x20] sm:$0xff] %v806
          %933 = vst [vmem:[#allocation5 + $0x28] sm:$0xff] %v811
          %934 = vst [vmem:[#allocation5 + $0x30] sm:$0xff] %v816
          %935 = vst [vmem:[#allocation5 + $0x38] sm:$0xff] %v821
          %936 = vst [vmem:[#allocation5 + $0x40] sm:$0xff] %v826
          %937 = vst [vmem:[#allocation5 + $0x48] sm:$0xff] %v831
          %938 = vst [vmem:[#allocation5 + $0x50] sm:$0xff] %v836
          %939 = vst [vmem:[#allocation5 + $0x58] sm:$0xff] %v841
          %940 = vst [vmem:[#allocation5 + $0x60] sm:$0xff] %v846
          %941 = vst [vmem:[#allocation5 + $0x68] sm:$0xff] %v851
          %942 = vst [vmem:[#allocation5 + $0x70] sm:$0xff] %v856
          %943 = vst [vmem:[#allocation5 + $0x78] sm:$0xff] %v861
          %vm944 = vcmask 7168
          %945 = vst.msk [vmem:[#allocation6] sm:$0xff] %vm944, -1e+30
          %946 = vst.msk [vmem:[#allocation6 + $0x8] sm:$0xff] %vm944, -1e+30
          %947 = vst.msk [vmem:[#allocation6 + $0x10] sm:$0xff] %vm944, -1e+30
          %948 = vst.msk [vmem:[#allocation6 + $0x18] sm:$0xff] %vm944, -1e+30
          %949 = vst.msk [vmem:[#allocation6 + $0x20] sm:$0xff] %vm944, -1e+30
          %950 = vst.msk [vmem:[#allocation6 + $0x28] sm:$0xff] %vm944, -1e+30
          %951 = vst.msk [vmem:[#allocation6 + $0x30] sm:$0xff] %vm944, -1e+30
          %952 = vst.msk [vmem:[#allocation6 + $0x38] sm:$0xff] %vm944, -1e+30
          %953 = vst.msk [vmem:[#allocation6 + $0x40] sm:$0xff] %vm944, -1e+30
          %954 = vst.msk [vmem:[#allocation6 + $0x48] sm:$0xff] %vm944, -1e+30
          %955 = vst.msk [vmem:[#allocation6 + $0x50] sm:$0xff] %vm944, -1e+30
          %956 = vst.msk [vmem:[#allocation6 + $0x58] sm:$0xff] %vm944, -1e+30
          %957 = vst.msk [vmem:[#allocation6 + $0x60] sm:$0xff] %vm944, -1e+30
          %958 = vst.msk [vmem:[#allocation6 + $0x68] sm:$0xff] %vm944, -1e+30
          %959 = vst.msk [vmem:[#allocation6 + $0x70] sm:$0xff] %vm944, -1e+30
          %960 = vst.msk [vmem:[#allocation6 + $0x78] sm:$0xff] %vm944, -1e+30
          %961 = vst.msk [vmem:[#allocation6 + $0x80] sm:$0xff] %vm944, -1e+30
          %962 = vst.msk [vmem:[#allocation6 + $0x88] sm:$0xff] %vm944, -1e+30
          %963 = vst.msk [vmem:[#allocation6 + $0x90] sm:$0xff] %vm944, -1e+30
          %964 = vst.msk [vmem:[#allocation6 + $0x98] sm:$0xff] %vm944, -1e+30
          %965 = vst.msk [vmem:[#allocation6 + $0xa0] sm:$0xff] %vm944, -1e+30
          %966 = vst.msk [vmem:[#allocation6 + $0xa8] sm:$0xff] %vm944, -1e+30
          %967 = vst.msk [vmem:[#allocation6 + $0xb0] sm:$0xff] %vm944, -1e+30
          %968 = vst.msk [vmem:[#allocation6 + $0xb8] sm:$0xff] %vm944, -1e+30
          %969 = vst.msk [vmem:[#allocation6 + $0xc0] sm:$0xff] %vm944, -1e+30
          %970 = vst.msk [vmem:[#allocation6 + $0xc8] sm:$0xff] %vm944, -1e+30
          %971 = vst.msk [vmem:[#allocation6 + $0xd0] sm:$0xff] %vm944, -1e+30
          %972 = vst.msk [vmem:[#allocation6 + $0xd8] sm:$0xff] %vm944, -1e+30
          %973 = vst.msk [vmem:[#allocation6 + $0xe0] sm:$0xff] %vm944, -1e+30
          %974 = vst.msk [vmem:[#allocation6 + $0xe8] sm:$0xff] %vm944, -1e+30
          %975 = vst.msk [vmem:[#allocation6 + $0xf0] sm:$0xff] %vm944, -1e+30
          %976 = vst.msk [vmem:[#allocation6 + $0xf8] sm:$0xff] %vm944, -1e+30
          %977 = vst.msk [vmem:[#allocation7] sm:$0xff] %vm944, 0.0
          %978 = vst.msk [vmem:[#allocation7 + $0x8] sm:$0xff] %vm944, 0.0
          %979 = vst.msk [vmem:[#allocation7 + $0x10] sm:$0xff] %vm944, 0.0
          %980 = vst.msk [vmem:[#allocation7 + $0x18] sm:$0xff] %vm944, 0.0
          %981 = vst.msk [vmem:[#allocation7 + $0x20] sm:$0xff] %vm944, 0.0
          %982 = vst.msk [vmem:[#allocation7 + $0x28] sm:$0xff] %vm944, 0.0
          %983 = vst.msk [vmem:[#allocation7 + $0x30] sm:$0xff] %vm944, 0.0
          %984 = vst.msk [vmem:[#allocation7 + $0x38] sm:$0xff] %vm944, 0.0
          %985 = vst.msk [vmem:[#allocation7 + $0x40] sm:$0xff] %vm944, 0.0
          %986 = vst.msk [vmem:[#allocation7 + $0x48] sm:$0xff] %vm944, 0.0
          %987 = vst.msk [vmem:[#allocation7 + $0x50] sm:$0xff] %vm944, 0.0
          %988 = vst.msk [vmem:[#allocation7 + $0x58] sm:$0xff] %vm944, 0.0
          %989 = vst.msk [vmem:[#allocation7 + $0x60] sm:$0xff] %vm944, 0.0
          %990 = vst.msk [vmem:[#allocation7 + $0x68] sm:$0xff] %vm944, 0.0
          %991 = vst.msk [vmem:[#allocation7 + $0x70] sm:$0xff] %vm944, 0.0
          %992 = vst.msk [vmem:[#allocation7 + $0x78] sm:$0xff] %vm944, 0.0
          %993 = vst.msk [vmem:[#allocation7 + $0x80] sm:$0xff] %vm944, 0.0
          %994 = vst.msk [vmem:[#allocation7 + $0x88] sm:$0xff] %vm944, 0.0
          %995 = vst.msk [vmem:[#allocation7 + $0x90] sm:$0xff] %vm944, 0.0
          %996 = vst.msk [vmem:[#allocation7 + $0x98] sm:$0xff] %vm944, 0.0
          %997 = vst.msk [vmem:[#allocation7 + $0xa0] sm:$0xff] %vm944, 0.0
          %998 = vst.msk [vmem:[#allocation7 + $0xa8] sm:$0xff] %vm944, 0.0
          %999 = vst.msk [vmem:[#allocation7 + $0xb0] sm:$0xff] %vm944, 0.0
          %1000 = vst.msk [vmem:[#allocation7 + $0xb8] sm:$0xff] %vm944, 0.0
          %1001 = vst.msk [vmem:[#allocation7 + $0xc0] sm:$0xff] %vm944, 0.0
          %1002 = vst.msk [vmem:[#allocation7 + $0xc8] sm:$0xff] %vm944, 0.0
          %1003 = vst.msk [vmem:[#allocation7 + $0xd0] sm:$0xff] %vm944, 0.0
          %1004 = vst.msk [vmem:[#allocation7 + $0xd8] sm:$0xff] %vm944, 0.0
          %1005 = vst.msk [vmem:[#allocation7 + $0xe0] sm:$0xff] %vm944, 0.0
          %1006 = vst.msk [vmem:[#allocation7 + $0xe8] sm:$0xff] %vm944, 0.0
          %1007 = vst.msk [vmem:[#allocation7 + $0xf0] sm:$0xff] %vm944, 0.0
          %1008 = vst.msk [vmem:[#allocation7 + $0xf8] sm:$0xff] %vm944, 0.0
          %1009 = vst [vmem:[#allocation8] sm:$0xff] 0.0
          %1010 = vst [vmem:[#allocation8 + $0x8] sm:$0xff] 0.0
          %1011 = vst [vmem:[#allocation8 + $0x10] sm:$0xff] 0.0
          %1012 = vst [vmem:[#allocation8 + $0x18] sm:$0xff] 0.0
          %1013 = vst [vmem:[#allocation8 + $0x20] sm:$0xff] 0.0
          %1014 = vst [vmem:[#allocation8 + $0x28] sm:$0xff] 0.0
          %1015 = vst [vmem:[#allocation8 + $0x30] sm:$0xff] 0.0
          %1016 = vst [vmem:[#allocation8 + $0x38] sm:$0xff] 0.0
          %1017 = vst [vmem:[#allocation8 + $0x40] sm:$0xff] 0.0
          %1018 = vst [vmem:[#allocation8 + $0x48] sm:$0xff] 0.0
          %1019 = vst [vmem:[#allocation8 + $0x50] sm:$0xff] 0.0
          %1020 = vst [vmem:[#allocation8 + $0x58] sm:$0xff] 0.0
          %1021 = vst [vmem:[#allocation8 + $0x60] sm:$0xff] 0.0
          %1022 = vst [vmem:[#allocation8 + $0x68] sm:$0xff] 0.0
          %1023 = vst [vmem:[#allocation8 + $0x70] sm:$0xff] 0.0
          %1024 = vst [vmem:[#allocation8 + $0x78] sm:$0xff] 0.0
          %1025 = vst [vmem:[#allocation8 + $0x80] sm:$0xff] 0.0
          %1026 = vst [vmem:[#allocation8 + $0x88] sm:$0xff] 0.0
          %1027 = vst [vmem:[#allocation8 + $0x90] sm:$0xff] 0.0
          %1028 = vst [vmem:[#allocation8 + $0x98] sm:$0xff] 0.0
          %1029 = vst [vmem:[#allocation8 + $0xa0] sm:$0xff] 0.0
          %1030 = vst [vmem:[#allocation8 + $0xa8] sm:$0xff] 0.0
          %1031 = vst [vmem:[#allocation8 + $0xb0] sm:$0xff] 0.0
          %1032 = vst [vmem:[#allocation8 + $0xb8] sm:$0xff] 0.0
          %1033 = vst [vmem:[#allocation8 + $0xc0] sm:$0xff] 0.0
          %1034 = vst [vmem:[#allocation8 + $0xc8] sm:$0xff] 0.0
          %1035 = vst [vmem:[#allocation8 + $0xd0] sm:$0xff] 0.0
          %1036 = vst [vmem:[#allocation8 + $0xd8] sm:$0xff] 0.0
          %1037 = vst [vmem:[#allocation8 + $0xe0] sm:$0xff] 0.0
          %1038 = vst [vmem:[#allocation8 + $0xe8] sm:$0xff] 0.0
          %1039 = vst [vmem:[#allocation8 + $0xf0] sm:$0xff] 0.0
          %1040 = vst [vmem:[#allocation8 + $0xf8] sm:$0xff] 0.0
        $region94: #{tpu_custom_call.1} parent=85 // pred_fallthru
          _
        %s1041 = sld [smem:[#allocation10 + %s38]]
        %p1042 = scmp.lt.s32.totalorder %s39, %s1041
        // Predicated region
        $region95: #{tpu_custom_call.1} parent=85 // pred_check
          %p1043 = pneg %p1042
        $region96: #{tpu_custom_call.1} parent=85 // pred_check_branch
          %1045 = sbr.rel (%p1043) target = $region98
        $region97: #{tpu_custom_call.1} parent=85 // pred_region
          %v1046 = vld [vmem:[%s448] sm:$0xff]
          %v1047 = vld [vmem:[%s448 + $0x8] sm:$0xff]
          %v1048 = vld [vmem:[%s448 + $0x10] sm:$0xff]
          %v1049 = vld [vmem:[%s448 + $0x18] sm:$0xff]
          %v1050 = vld [vmem:[%s448 + $0x20] sm:$0xff]
          %v1051 = vld [vmem:[%s448 + $0x28] sm:$0xff]
          %v1052 = vld [vmem:[%s448 + $0x30] sm:$0xff]
          %v1053 = vld [vmem:[%s448 + $0x38] sm:$0xff]
          %v1054 = vld [vmem:[%s448 + $0x40] sm:$0xff]
          %v1055 = vld [vmem:[%s448 + $0x48] sm:$0xff]
          %v1056 = vld [vmem:[%s448 + $0x50] sm:$0xff]
          %v1057 = vld [vmem:[%s448 + $0x58] sm:$0xff]
          %v1058 = vld [vmem:[%s448 + $0x60] sm:$0xff]
          %v1059 = vld [vmem:[%s448 + $0x68] sm:$0xff]
          %v1060 = vld [vmem:[%s448 + $0x70] sm:$0xff]
          %v1061 = vld [vmem:[%s448 + $0x78] sm:$0xff]
          %v1062 = vld [vmem:[%s4 + $0x10] sm:$0xff]
          %v1063 = vld [vmem:[%s4 + $0x18] sm:$0xff]
          %v1064 = vld [vmem:[%s4 + $0x48] sm:$0xff]
          %v1065 = vld [vmem:[%s4 + $0x50] sm:$0xff]
          %v1066 = vld [vmem:[%s4 + $0x80] sm:$0xff]
          %v1067 = vld [vmem:[%s4 + $0x88] sm:$0xff]
          %v1068 = vld [vmem:[%s4 + $0xb8] sm:$0xff]
          %v1069 = vld [vmem:[%s4 + $0xc0] sm:$0xff]
          %v1070 = vld [vmem:[%s5 + $0x2] sm:$0x3]
          %v1072 = vlaneseq
          %v1073 = vshrl.u32 %v1072, 7
          %v1074 = vsub.s32 0, %v1073
          %v1075 = vrot.slane %v1070, %v1074
          %v1076 = vlaneseq
          %v1077 = vshrl.u32 %v1076, 7
          %v1078 = vsub.s32 1, %v1077
          %v1079 = vrot.slane %v1070, %v1078
          %vm1082 = vcmask 261120
          %v1084 = vsel %vm1082, %v1046, 0
          %v1087 = vsel %vm1082, %v1047, 0
          %v1090 = vsel %vm1082, %v1048, 0
          %v1093 = vsel %vm1082, %v1049, 0
          %v1096 = vsel %vm1082, %v1050, 0
          %v1099 = vsel %vm1082, %v1051, 0
          %v1102 = vsel %vm1082, %v1052, 0
          %v1105 = vsel %vm1082, %v1053, 0
          %v1108 = vsel %vm1082, %v1054, 0
          %v1111 = vsel %vm1082, %v1055, 0
          %v1114 = vsel %vm1082, %v1056, 0
          %v1117 = vsel %vm1082, %v1057, 0
          %v1120 = vsel %vm1082, %v1058, 0
          %v1123 = vsel %vm1082, %v1059, 0
          %v1126 = vsel %vm1082, %v1060, 0
          %v1129 = vsel %vm1082, %v1061, 0
          %1131 = vmatprep.subr.mxu0 %v1063
          %1132 = vmatpush1.msra.mxu0 %v1062
          %1133 = vmatprep.subr.mxu0 %v1065
          %1134 = vmatpush1.msra.mxu0 %v1064
          %1135 = vmatprep.subr.mxu0 %v1067
          %1136 = vmatpush1.msra.mxu0 %v1066
          %1137 = vmatprep.subr.mxu0 %v1069
          %1138 = vmatpush1.msra.mxu0 %v1068
          %1139 = vmatprep.subr.mxu0 0.0
          %1140 = vmatpush1.msra.mxu0 0.0
          %1141 = vmatprep.subr.mxu0 0.0
          %1142 = vmatpush1.msra.mxu0 0.0
          %1143 = vmatprep.subr.mxu0 0.0
          %1144 = vmatpush1.msra.mxu0 0.0
          %1145 = vmatprep.subr.mxu0 0.0
          %1146 = vmatpush1.msra.mxu0 0.0
          %1147 = vmatprep.subr.mxu0 0.0
          %1148 = vmatpush1.msra.mxu0 0.0
          %1149 = vmatprep.subr.mxu0 0.0
          %1150 = vmatpush1.msra.mxu0 0.0
          %1151 = vmatprep.subr.mxu0 0.0
          %1152 = vmatpush1.msra.mxu0 0.0
          %1153 = vmatprep.subr.mxu0 0.0
          %1154 = vmatpush1.msra.mxu0 0.0
          %1155 = vmatprep.subr.mxu0 0.0
          %1156 = vmatpush1.msra.mxu0 0.0
          %1157 = vmatprep.subr.mxu0 0.0
          %1158 = vmatpush1.msra.mxu0 0.0
          %1159 = vmatprep.subr.mxu0 0.0
          %1160 = vmatpush1.msra.mxu0 0.0
          %1161 = vmatprep.subr.mxu0 0.0
          %1162 = vmatpush1.msra.mxu0 0.0
          %1163 = vmatprep.subr.mxu0 0.0
          %1164 = vmatpush1.msra.mxu0 0.0
          %1165 = vmatprep.subr.mxu0 0.0
          %1166 = vmatpush1.msra.mxu0 0.0
          %1167 = vmatprep.subr.mxu0 0.0
          %1168 = vmatpush1.msra.mxu0 0.0
          %1169 = vmatprep.subr.mxu0 0.0
          %1170 = vmatpush1.msra.mxu0 0.0
          %1171 = vmatprep.subr.mxu0 0.0
          %1172 = vmatpush1.msra.mxu0 0.0
          %1173 = vmatprep.subr.mxu0 0.0
          %1174 = vmatpush1.msra.mxu0 0.0
          %1175 = vmatprep.subr.mxu0 0.0
          %1176 = vmatpush1.msra.mxu0 0.0
          %1177 = vmatprep.subr.mxu0 0.0
          %1178 = vmatpush1.msra.mxu0 0.0
          %1179 = vmatprep.subr.mxu0 0.0
          %1180 = vmatpush1.msra.mxu0 0.0
          %1181 = vmatprep.subr.mxu0 0.0
          %1182 = vmatpush1.msra.mxu0 0.0
          %1183 = vmatprep.subr.mxu0 0.0
          %1184 = vmatpush1.msra.mxu0 0.0
          %1185 = vmatprep.subr.mxu0 0.0
          %1186 = vmatpush1.msra.mxu0 0.0
          %1187 = vmatprep.subr.mxu0 0.0
          %1188 = vmatpush1.msra.mxu0 0.0
          %1189 = vmatprep.subr.mxu0 0.0
          %1190 = vmatpush1.msra.mxu0 0.0
          %1191 = vmatprep.subr.mxu0 0.0
          %1192 = vmatpush1.msra.mxu0 0.0
          %1193 = vmatprep.subr.mxu0 0.0
          %1194 = vmatpush1.msra.mxu0 0.0
          %1195 = vmatprep.mubr.f32.mxu0 0.0
          %1196 = vmatmul.mubr.f32.gmra.mrb[0].mxu0 %v1084
          %v1197 = vpop.f32.mrb[0].mxu0
          %v1198 = vadd.f32 %v1075, %v1197
          %v1199 = vpop.f32.mrb[0].mxu0
          %v1200 = vadd.f32 %v1079, %v1199
          %1201 = vmatprep.mubr.f32.mxu0 0.0
          %1202 = vmatmul.mubr.f32.gmra.mrb[0].mxu0 %v1087
          %v1203 = vpop.f32.mrb[0].mxu0
          %v1204 = vadd.f32 %v1075, %v1203
          %v1205 = vpop.f32.mrb[0].mxu0
          %v1206 = vadd.f32 %v1079, %v1205
          %1207 = vmatprep.mubr.f32.mxu0 0.0
          %1208 = vmatmul.mubr.f32.gmra.mrb[0].mxu0 %v1090
          %v1209 = vpop.f32.mrb[0].mxu0
          %v1210 = vadd.f32 %v1075, %v1209
          %v1211 = vpop.f32.mrb[0].mxu0
          %v1212 = vadd.f32 %v1079, %v1211
          %1213 = vmatprep.mubr.f32.mxu0 0.0
          %1214 = vmatmul.mubr.f32.gmra.mrb[0].mxu0 %v1093
          %v1215 = vpop.f32.mrb[0].mxu0
          %v1216 = vadd.f32 %v1075, %v1215
          %v1217 = vpop.f32.mrb[0].mxu0
          %v1218 = vadd.f32 %v1079, %v1217
          %1219 = vmatprep.mubr.f32.mxu0 0.0
          %1220 = vmatmul.mubr.f32.gmra.mrb[0].mxu0 %v1096
          %v1221 = vpop.f32.mrb[0].mxu0
          %v1222 = vadd.f32 %v1075, %v1221
          %v1223 = vpop.f32.mrb[0].mxu0
          %v1224 = vadd.f32 %v1079, %v1223
          %1225 = vmatprep.mubr.f32.mxu0 0.0
          %1226 = vmatmul.mubr.f32.gmra.mrb[0].mxu0 %v1099
          %v1227 = vpop.f32.mrb[0].mxu0
          %v1228 = vadd.f32 %v1075, %v1227
          %v1229 = vpop.f32.mrb[0].mxu0
          %v1230 = vadd.f32 %v1079, %v1229
          %1231 = vmatprep.mubr.f32.mxu0 0.0
          %1232 = vmatmul.mubr.f32.gmra.mrb[0].mxu0 %v1102
          %v1233 = vpop.f32.mrb[0].mxu0
          %v1234 = vadd.f32 %v1075, %v1233
          %v1235 = vpop.f32.mrb[0].mxu0
          %v1236 = vadd.f32 %v1079, %v1235
          %1237 = vmatprep.mubr.f32.mxu0 0.0
          %1238 = vmatmul.mubr.f32.gmra.mrb[0].mxu0 %v1105
          %v1239 = vpop.f32.mrb[0].mxu0
          %v1240 = vadd.f32 %v1075, %v1239
          %v1241 = vpop.f32.mrb[0].mxu0
          %v1242 = vadd.f32 %v1079, %v1241
          %1243 = vmatprep.mubr.f32.mxu0 0.0
          %1244 = vmatmul.mubr.f32.gmra.mrb[0].mxu0 %v1108
          %v1245 = vpop.f32.mrb[0].mxu0
          %v1246 = vadd.f32 %v1075, %v1245
          %v1247 = vpop.f32.mrb[0].mxu0
          %v1248 = vadd.f32 %v1079, %v1247
          %1249 = vmatprep.mubr.f32.mxu0 0.0
          %1250 = vmatmul.mubr.f32.gmra.mrb[0].mxu0 %v1111
          %v1251 = vpop.f32.mrb[0].mxu0
          %v1252 = vadd.f32 %v1075, %v1251
          %v1253 = vpop.f32.mrb[0].mxu0
          %v1254 = vadd.f32 %v1079, %v1253
          %1255 = vmatprep.mubr.f32.mxu0 0.0
          %1256 = vmatmul.mubr.f32.gmra.mrb[0].mxu0 %v1114
          %v1257 = vpop.f32.mrb[0].mxu0
          %v1258 = vadd.f32 %v1075, %v1257
          %v1259 = vpop.f32.mrb[0].mxu0
          %v1260 = vadd.f32 %v1079, %v1259
          %1261 = vmatprep.mubr.f32.mxu0 0.0
          %1262 = vmatmul.mubr.f32.gmra.mrb[0].mxu0 %v1117
          %v1263 = vpop.f32.mrb[0].mxu0
          %v1264 = vadd.f32 %v1075, %v1263
          %v1265 = vpop.f32.mrb[0].mxu0
          %v1266 = vadd.f32 %v1079, %v1265
          %1267 = vmatprep.mubr.f32.mxu0 0.0
          %1268 = vmatmul.mubr.f32.gmra.mrb[0].mxu0 %v1120
          %v1269 = vpop.f32.mrb[0].mxu0
          %v1270 = vadd.f32 %v1075, %v1269
          %v1271 = vpop.f32.mrb[0].mxu0
          %v1272 = vadd.f32 %v1079, %v1271
          %1273 = vmatprep.mubr.f32.mxu0 0.0
          %1274 = vmatmul.mubr.f32.gmra.mrb[0].mxu0 %v1123
          %v1275 = vpop.f32.mrb[0].mxu0
          %v1276 = vadd.f32 %v1075, %v1275
          %v1277 = vpop.f32.mrb[0].mxu0
          %v1278 = vadd.f32 %v1079, %v1277
          %1279 = vmatprep.mubr.f32.mxu0 0.0
          %1280 = vmatmul.mubr.f32.gmra.mrb[0].mxu0 %v1126
          %v1281 = vpop.f32.mrb[0].mxu0
          %v1282 = vadd.f32 %v1075, %v1281
          %v1283 = vpop.f32.mrb[0].mxu0
          %v1284 = vadd.f32 %v1079, %v1283
          %1285 = vmatprep.mubr.f32.mxu0 0.0
          %1286 = vmatmul.mubr.f32.gmra.mrb[0].mxu0 %v1129
          %v1287 = vpop.f32.mrb[0].mxu0
          %v1288 = vadd.f32 %v1075, %v1287
          %v1289 = vpop.f32.mrb[0].mxu0
          %v1290 = vadd.f32 %v1079, %v1289
          %1291 = vdwg.mxu0
          %1292 = vst [vmem:[#allocation3] sm:$0xff] %v1198
          %1293 = vst [vmem:[#allocation3 + $0x8] sm:$0xff] %v1200
          %1294 = vst [vmem:[#allocation3 + $0x10] sm:$0xff] %v1204
          %1295 = vst [vmem:[#allocation3 + $0x18] sm:$0xff] %v1206
          %1296 = vst [vmem:[#allocation3 + $0x20] sm:$0xff] %v1210
          %1297 = vst [vmem:[#allocation3 + $0x28] sm:$0xff] %v1212
          %1298 = vst [vmem:[#allocation3 + $0x30] sm:$0xff] %v1216
          %1299 = vst [vmem:[#allocation3 + $0x38] sm:$0xff] %v1218
          %1300 = vst [vmem:[#allocation3 + $0x40] sm:$0xff] %v1222
          %1301 = vst [vmem:[#allocation3 + $0x48] sm:$0xff] %v1224
          %1302 = vst [vmem:[#allocation3 + $0x50] sm:$0xff] %v1228
          %1303 = vst [vmem:[#allocation3 + $0x58] sm:$0xff] %v1230
          %1304 = vst [vmem:[#allocation3 + $0x60] sm:$0xff] %v1234
          %1305 = vst [vmem:[#allocation3 + $0x68] sm:$0xff] %v1236
          %1306 = vst [vmem:[#allocation3 + $0x70] sm:$0xff] %v1240
          %1307 = vst [vmem:[#allocation3 + $0x78] sm:$0xff] %v1242
          %1308 = vst [vmem:[#allocation3 + $0x80] sm:$0xff] %v1246
          %1309 = vst [vmem:[#allocation3 + $0x88] sm:$0xff] %v1248
          %1310 = vst [vmem:[#allocation3 + $0x90] sm:$0xff] %v1252
          %1311 = vst [vmem:[#allocation3 + $0x98] sm:$0xff] %v1254
          %1312 = vst [vmem:[#allocation3 + $0xa0] sm:$0xff] %v1258
          %1313 = vst [vmem:[#allocation3 + $0xa8] sm:$0xff] %v1260
          %1314 = vst [vmem:[#allocation3 + $0xb0] sm:$0xff] %v1264
          %1315 = vst [vmem:[#allocation3 + $0xb8] sm:$0xff] %v1266
          %1316 = vst [vmem:[#allocation3 + $0xc0] sm:$0xff] %v1270
          %1317 = vst [vmem:[#allocation3 + $0xc8] sm:$0xff] %v1272
          %1318 = vst [vmem:[#allocation3 + $0xd0] sm:$0xff] %v1276
          %1319 = vst [vmem:[#allocation3 + $0xd8] sm:$0xff] %v1278
          %1320 = vst [vmem:[#allocation3 + $0xe0] sm:$0xff] %v1282
          %1321 = vst [vmem:[#allocation3 + $0xe8] sm:$0xff] %v1284
          %1322 = vst [vmem:[#allocation3 + $0xf0] sm:$0xff] %v1288
          %1323 = vst [vmem:[#allocation3 + $0xf8] sm:$0xff] %v1290
          %v1324 = vld [vmem:[%s4 + $0x20] sm:$0xff]
          %v1325 = vld [vmem:[%s4 + $0x28] sm:$0xff]
          %v1326 = vld [vmem:[%s4 + $0x58] sm:$0xff]
          %v1327 = vld [vmem:[%s4 + $0x60] sm:$0xff]
          %v1328 = vld [vmem:[%s4 + $0x90] sm:$0xff]
          %v1329 = vld [vmem:[%s4 + $0x98] sm:$0xff]
          %v1330 = vld [vmem:[%s4 + $0xc8] sm:$0xff]
          %v1331 = vld [vmem:[%s4 + $0xd0] sm:$0xff]
          %v1332 = vld [vmem:[%s5 + $0x4] sm:$0x3]
          %v1334 = vlaneseq
          %v1335 = vshrl.u32 %v1334, 7
          %v1336 = vsub.s32 0, %v1335
          %v1337 = vrot.slane %v1332, %v1336
          %v1338 = vlaneseq
          %v1339 = vshrl.u32 %v1338, 7
          %v1340 = vsub.s32 1, %v1339
          %v1341 = vrot.slane %v1332, %v1340
          %1344 = vmatprep.subr.mxu0 %v1325
          %1345 = vmatpush1.msra.mxu0 %v1324
          %1346 = vmatprep.subr.mxu0 %v1327
          %1347 = vmatpush1.msra.mxu0 %v1326
          %1348 = vmatprep.subr.mxu0 %v1329
          %1349 = vmatpush1.msra.mxu0 %v1328
          %1350 = vmatprep.subr.mxu0 %v1331
          %1351 = vmatpush1.msra.mxu0 %v1330
          %1352 = vmatprep.subr.mxu0 0.0
          %1353 = vmatpush1.msra.mxu0 0.0
          %1354 = vmatprep.subr.mxu0 0.0
          %1355 = vmatpush1.msra.mxu0 0.0
          %1356 = vmatprep.subr.mxu0 0.0
          %1357 = vmatpush1.msra.mxu0 0.0
          %1358 = vmatprep.subr.mxu0 0.0
          %1359 = vmatpush1.msra.mxu0 0.0
          %1360 = vmatprep.subr.mxu0 0.0
          %1361 = vmatpush1.msra.mxu0 0.0
          %1362 = vmatprep.subr.mxu0 0.0
          %1363 = vmatpush1.msra.mxu0 0.0
          %1364 = vmatprep.subr.mxu0 0.0
          %1365 = vmatpush1.msra.mxu0 0.0
          %1366 = vmatprep.subr.mxu0 0.0
          %1367 = vmatpush1.msra.mxu0 0.0
          %1368 = vmatprep.subr.mxu0 0.0
          %1369 = vmatpush1.msra.mxu0 0.0
          %1370 = vmatprep.subr.mxu0 0.0
          %1371 = vmatpush1.msra.mxu0 0.0
          %1372 = vmatprep.subr.mxu0 0.0
          %1373 = vmatpush1.msra.mxu0 0.0
          %1374 = vmatprep.subr.mxu0 0.0
          %1375 = vmatpush1.msra.mxu0 0.0
          %1376 = vmatprep.subr.mxu0 0.0
          %1377 = vmatpush1.msra.mxu0 0.0
          %1378 = vmatprep.subr.mxu0 0.0
          %1379 = vmatpush1.msra.mxu0 0.0
          %1380 = vmatprep.subr.mxu0 0.0
          %1381 = vmatpush1.msra.mxu0 0.0
          %1382 = vmatprep.subr.mxu0 0.0
          %1383 = vmatpush1.msra.mxu0 0.0
          %1384 = vmatprep.subr.mxu0 0.0
          %1385 = vmatpush1.msra.mxu0 0.0
          %1386 = vmatprep.subr.mxu0 0.0
          %1387 = vmatpush1.msra.mxu0 0.0
          %1388 = vmatprep.subr.mxu0 0.0
          %1389 = vmatpush1.msra.mxu0 0.0
          %1390 = vmatprep.subr.mxu0 0.0
          %1391 = vmatpush1.msra.mxu0 0.0
          %1392 = vmatprep.subr.mxu0 0.0
          %1393 = vmatpush1.msra.mxu0 0.0
          %1394 = vmatprep.subr.mxu0 0.0
          %1395 = vmatpush1.msra.mxu0 0.0
          %1396 = vmatprep.subr.mxu0 0.0
          %1397 = vmatpush1.msra.mxu0 0.0
          %1398 = vmatprep.subr.mxu0 0.0
          %1399 = vmatpush1.msra.mxu0 0.0
          %1400 = vmatprep.subr.mxu0 0.0
          %1401 = vmatpush1.msra.mxu0 0.0
          %1402 = vmatprep.subr.mxu0 0.0
          %1403 = vmatpush1.msra.mxu0 0.0
          %1404 = vmatprep.subr.mxu0 0.0
          %1405 = vmatpush1.msra.mxu0 0.0
          %1406 = vmatprep.subr.mxu0 0.0
          %1407 = vmatpush1.msra.mxu0 0.0
          %1408 = vmatprep.mubr.f32.mxu0 0.0
          %1409 = vmatmul.mubr.f32.gmra.mrb[0].mxu0 %v1084
          %v1410 = vpop.f32.mrb[0].mxu0
          %v1411 = vadd.f32 %v1337, %v1410
          %v1412 = vpop.f32.mrb[0].mxu0
          %v1413 = vadd.f32 %v1341, %v1412
          %1414 = vmatprep.mubr.f32.mxu0 0.0
          %1415 = vmatmul.mubr.f32.gmra.mrb[0].mxu0 %v1087
          %v1416 = vpop.f32.mrb[0].mxu0
          %v1417 = vadd.f32 %v1337, %v1416
          %v1418 = vpop.f32.mrb[0].mxu0
          %v1419 = vadd.f32 %v1341, %v1418
          %1420 = vmatprep.mubr.f32.mxu0 0.0
          %1421 = vmatmul.mubr.f32.gmra.mrb[0].mxu0 %v1090
          %v1422 = vpop.f32.mrb[0].mxu0
          %v1423 = vadd.f32 %v1337, %v1422
          %v1424 = vpop.f32.mrb[0].mxu0
          %v1425 = vadd.f32 %v1341, %v1424
          %1426 = vmatprep.mubr.f32.mxu0 0.0
          %1427 = vmatmul.mubr.f32.gmra.mrb[0].mxu0 %v1093
          %v1428 = vpop.f32.mrb[0].mxu0
          %v1429 = vadd.f32 %v1337, %v1428
          %v1430 = vpop.f32.mrb[0].mxu0
          %v1431 = vadd.f32 %v1341, %v1430
          %1432 = vmatprep.mubr.f32.mxu0 0.0
          %1433 = vmatmul.mubr.f32.gmra.mrb[0].mxu0 %v1096
          %v1434 = vpop.f32.mrb[0].mxu0
          %v1435 = vadd.f32 %v1337, %v1434
          %v1436 = vpop.f32.mrb[0].mxu0
          %v1437 = vadd.f32 %v1341, %v1436
          %1438 = vmatprep.mubr.f32.mxu0 0.0
          %1439 = vmatmul.mubr.f32.gmra.mrb[0].mxu0 %v1099
          %v1440 = vpop.f32.mrb[0].mxu0
          %v1441 = vadd.f32 %v1337, %v1440
          %v1442 = vpop.f32.mrb[0].mxu0
          %v1443 = vadd.f32 %v1341, %v1442
          %1444 = vmatprep.mubr.f32.mxu0 0.0
          %1445 = vmatmul.mubr.f32.gmra.mrb[0].mxu0 %v1102
          %v1446 = vpop.f32.mrb[0].mxu0
          %v1447 = vadd.f32 %v1337, %v1446
          %v1448 = vpop.f32.mrb[0].mxu0
          %v1449 = vadd.f32 %v1341, %v1448
          %1450 = vmatprep.mubr.f32.mxu0 0.0
          %1451 = vmatmul.mubr.f32.gmra.mrb[0].mxu0 %v1105
          %v1452 = vpop.f32.mrb[0].mxu0
          %v1453 = vadd.f32 %v1337, %v1452
          %v1454 = vpop.f32.mrb[0].mxu0
          %v1455 = vadd.f32 %v1341, %v1454
          %1456 = vmatprep.mubr.f32.mxu0 0.0
          %1457 = vmatmul.mubr.f32.gmra.mrb[0].mxu0 %v1108
          %v1458 = vpop.f32.mrb[0].mxu0
          %v1459 = vadd.f32 %v1337, %v1458
          %v1460 = vpop.f32.mrb[0].mxu0
          %v1461 = vadd.f32 %v1341, %v1460
          %1462 = vmatprep.mubr.f32.mxu0 0.0
          %1463 = vmatmul.mubr.f32.gmra.mrb[0].mxu0 %v1111
          %v1464 = vpop.f32.mrb[0].mxu0
          %v1465 = vadd.f32 %v1337, %v1464
          %v1466 = vpop.f32.mrb[0].mxu0
          %v1467 = vadd.f32 %v1341, %v1466
          %1468 = vmatprep.mubr.f32.mxu0 0.0
          %1469 = vmatmul.mubr.f32.gmra.mrb[0].mxu0 %v1114
          %v1470 = vpop.f32.mrb[0].mxu0
          %v1471 = vadd.f32 %v1337, %v1470
          %v1472 = vpop.f32.mrb[0].mxu0
          %v1473 = vadd.f32 %v1341, %v1472
          %1474 = vmatprep.mubr.f32.mxu0 0.0
          %1475 = vmatmul.mubr.f32.gmra.mrb[0].mxu0 %v1117
          %v1476 = vpop.f32.mrb[0].mxu0
          %v1477 = vadd.f32 %v1337, %v1476
          %v1478 = vpop.f32.mrb[0].mxu0
          %v1479 = vadd.f32 %v1341, %v1478
          %1480 = vmatprep.mubr.f32.mxu0 0.0
          %1481 = vmatmul.mubr.f32.gmra.mrb[0].mxu0 %v1120
          %v1482 = vpop.f32.mrb[0].mxu0
          %v1483 = vadd.f32 %v1337, %v1482
          %v1484 = vpop.f32.mrb[0].mxu0
          %v1485 = vadd.f32 %v1341, %v1484
          %1486 = vmatprep.mubr.f32.mxu0 0.0
          %1487 = vmatmul.mubr.f32.gmra.mrb[0].mxu0 %v1123
          %v1488 = vpop.f32.mrb[0].mxu0
          %v1489 = vadd.f32 %v1337, %v1488
          %v1490 = vpop.f32.mrb[0].mxu0
          %v1491 = vadd.f32 %v1341, %v1490
          %1492 = vmatprep.mubr.f32.mxu0 0.0
          %1493 = vmatmul.mubr.f32.gmra.mrb[0].mxu0 %v1126
          %v1494 = vpop.f32.mrb[0].mxu0
          %v1495 = vadd.f32 %v1337, %v1494
          %v1496 = vpop.f32.mrb[0].mxu0
          %v1497 = vadd.f32 %v1341, %v1496
          %1498 = vmatprep.mubr.f32.mxu0 0.0
          %1499 = vmatmul.mubr.f32.gmra.mrb[0].mxu0 %v1129
          %v1500 = vpop.f32.mrb[0].mxu0
          %v1501 = vadd.f32 %v1337, %v1500
          %v1502 = vpop.f32.mrb[0].mxu0
          %v1503 = vadd.f32 %v1341, %v1502
          %1504 = vdwg.mxu0
          %1505 = vst [vmem:[#allocation4] sm:$0xff] %v1411
          %1506 = vst [vmem:[#allocation4 + $0x8] sm:$0xff] %v1413
          %1507 = vst [vmem:[#allocation4 + $0x10] sm:$0xff] %v1417
          %1508 = vst [vmem:[#allocation4 + $0x18] sm:$0xff] %v1419
          %1509 = vst [vmem:[#allocation4 + $0x20] sm:$0xff] %v1423
          %1510 = vst [vmem:[#allocation4 + $0x28] sm:$0xff] %v1425
          %1511 = vst [vmem:[#allocation4 + $0x30] sm:$0xff] %v1429
          %1512 = vst [vmem:[#allocation4 + $0x38] sm:$0xff] %v1431
          %1513 = vst [vmem:[#allocation4 + $0x40] sm:$0xff] %v1435
          %1514 = vst [vmem:[#allocation4 + $0x48] sm:$0xff] %v1437
          %1515 = vst [vmem:[#allocation4 + $0x50] sm:$0xff] %v1441
          %1516 = vst [vmem:[#allocation4 + $0x58] sm:$0xff] %v1443
          %1517 = vst [vmem:[#allocation4 + $0x60] sm:$0xff] %v1447
          %1518 = vst [vmem:[#allocation4 + $0x68] sm:$0xff] %v1449
          %1519 = vst [vmem:[#allocation4 + $0x70] sm:$0xff] %v1453
          %1520 = vst [vmem:[#allocation4 + $0x78] sm:$0xff] %v1455
          %1521 = vst [vmem:[#allocation4 + $0x80] sm:$0xff] %v1459
          %1522 = vst [vmem:[#allocation4 + $0x88] sm:$0xff] %v1461
          %1523 = vst [vmem:[#allocation4 + $0x90] sm:$0xff] %v1465
          %1524 = vst [vmem:[#allocation4 + $0x98] sm:$0xff] %v1467
          %1525 = vst [vmem:[#allocation4 + $0xa0] sm:$0xff] %v1471
          %1526 = vst [vmem:[#allocation4 + $0xa8] sm:$0xff] %v1473
          %1527 = vst [vmem:[#allocation4 + $0xb0] sm:$0xff] %v1477
          %1528 = vst [vmem:[#allocation4 + $0xb8] sm:$0xff] %v1479
          %1529 = vst [vmem:[#allocation4 + $0xc0] sm:$0xff] %v1483
          %1530 = vst [vmem:[#allocation4 + $0xc8] sm:$0xff] %v1485
          %1531 = vst [vmem:[#allocation4 + $0xd0] sm:$0xff] %v1489
          %1532 = vst [vmem:[#allocation4 + $0xd8] sm:$0xff] %v1491
          %1533 = vst [vmem:[#allocation4 + $0xe0] sm:$0xff] %v1495
          %1534 = vst [vmem:[#allocation4 + $0xe8] sm:$0xff] %v1497
          %1535 = vst [vmem:[#allocation4 + $0xf0] sm:$0xff] %v1501
          %1536 = vst [vmem:[#allocation4 + $0xf8] sm:$0xff] %v1503
          %v1537 = vld [vmem:[%s391] sm:$0xff]
          %v1538 = vld [vmem:[%s391 + $0x8] sm:$0xff]
          %v1539 = vld [vmem:[%s391 + $0x10] sm:$0xff]
          %v1540 = vld [vmem:[%s391 + $0x18] sm:$0xff]
          %v1541 = vunpack.c.0.s8 %v1537
          %v1542 = vunpack.c.1.s8 %v1537
          %v1543 = vunpack.c.2.s8 %v1537
          %v1544 = vunpack.c.3.s8 %v1537
          %v1545 = vunpack.c.0.s8 %v1538
          %v1546 = vunpack.c.1.s8 %v1538
          %v1547 = vunpack.c.2.s8 %v1538
          %v1548 = vunpack.c.3.s8 %v1538
          %v1549 = vunpack.c.0.s8 %v1539
          %v1550 = vunpack.c.1.s8 %v1539
          %v1551 = vunpack.c.2.s8 %v1539
          %v1552 = vunpack.c.3.s8 %v1539
          %v1553 = vunpack.c.0.s8 %v1540
          %v1554 = vunpack.c.1.s8 %v1540
          %v1555 = vunpack.c.2.s8 %v1540
          %v1556 = vunpack.c.3.s8 %v1540
          %v1557 = vcvt.s32.f32 %v1541
          %v1558 = vcvt.s32.f32 %v1542
          %v1559 = vcvt.s32.f32 %v1543
          %v1560 = vcvt.s32.f32 %v1544
          %v1561 = vcvt.s32.f32 %v1545
          %v1562 = vcvt.s32.f32 %v1546
          %v1563 = vcvt.s32.f32 %v1547
          %v1564 = vcvt.s32.f32 %v1548
          %v1565 = vcvt.s32.f32 %v1549
          %v1566 = vcvt.s32.f32 %v1550
          %v1567 = vcvt.s32.f32 %v1551
          %v1568 = vcvt.s32.f32 %v1552
          %v1569 = vcvt.s32.f32 %v1553
          %v1570 = vcvt.s32.f32 %v1554
          %v1571 = vcvt.s32.f32 %v1555
          %v1572 = vcvt.s32.f32 %v1556
          %v1573 = vsub.f32 %v1557, 1.0
          %v1574 = vsub.f32 %v1558, 1.0
          %v1575 = vsub.f32 %v1559, 1.0
          %v1576 = vsub.f32 %v1560, 1.0
          %v1577 = vsub.f32 %v1561, 1.0
          %v1578 = vsub.f32 %v1562, 1.0
          %v1579 = vsub.f32 %v1563, 1.0
          %v1580 = vsub.f32 %v1564, 1.0
          %v1581 = vsub.f32 %v1565, 1.0
          %v1582 = vsub.f32 %v1566, 1.0
          %v1583 = vsub.f32 %v1567, 1.0
          %v1584 = vsub.f32 %v1568, 1.0
          %v1585 = vsub.f32 %v1569, 1.0
          %v1586 = vsub.f32 %v1570, 1.0
          %v1587 = vsub.f32 %v1571, 1.0
          %v1588 = vsub.f32 %v1572, 1.0
          %v1589 = vmul.f32 %v1573, 1e+30
          %v1590 = vmul.f32 %v1574, 1e+30
          %v1591 = vmul.f32 %v1575, 1e+30
          %v1592 = vmul.f32 %v1576, 1e+30
          %v1593 = vmul.f32 %v1577, 1e+30
          %v1594 = vmul.f32 %v1578, 1e+30
          %v1595 = vmul.f32 %v1579, 1e+30
          %v1596 = vmul.f32 %v1580, 1e+30
          %v1597 = vmul.f32 %v1581, 1e+30
          %v1598 = vmul.f32 %v1582, 1e+30
          %v1599 = vmul.f32 %v1583, 1e+30
          %v1600 = vmul.f32 %v1584, 1e+30
          %v1601 = vmul.f32 %v1585, 1e+30
          %v1602 = vmul.f32 %v1586, 1e+30
          %v1603 = vmul.f32 %v1587, 1e+30
          %v1604 = vmul.f32 %v1588, 1e+30
          %vm1605 = vcmp.gt.f32.partialorder %v1557, 0.5
          %vm1606 = vcmp.gt.f32.partialorder %v1558, 0.5
          %vm1607 = vcmp.gt.f32.partialorder %v1559, 0.5
          %vm1608 = vcmp.gt.f32.partialorder %v1560, 0.5
          %vm1609 = vcmp.gt.f32.partialorder %v1561, 0.5
          %vm1610 = vcmp.gt.f32.partialorder %v1562, 0.5
          %vm1611 = vcmp.gt.f32.partialorder %v1563, 0.5
          %vm1612 = vcmp.gt.f32.partialorder %v1564, 0.5
          %vm1613 = vcmp.gt.f32.partialorder %v1565, 0.5
          %vm1614 = vcmp.gt.f32.partialorder %v1566, 0.5
          %vm1615 = vcmp.gt.f32.partialorder %v1567, 0.5
          %vm1616 = vcmp.gt.f32.partialorder %v1568, 0.5
          %vm1617 = vcmp.gt.f32.partialorder %v1569, 0.5
          %vm1618 = vcmp.gt.f32.partialorder %v1570, 0.5
          %vm1619 = vcmp.gt.f32.partialorder %v1571, 0.5
          %vm1620 = vcmp.gt.f32.partialorder %v1572, 0.5
          %v1621 = vld [vmem:[#allocation2] sm:$0xff]
          %v1622 = vld [vmem:[#allocation2 + $0x10] sm:$0xff]
          %v1623 = vld [vmem:[#allocation2 + $0x20] sm:$0xff]
          %v1624 = vld [vmem:[#allocation2 + $0x30] sm:$0xff]
          %v1625 = vld [vmem:[#allocation2 + $0x40] sm:$0xff]
          %v1626 = vld [vmem:[#allocation2 + $0x50] sm:$0xff]
          %v1627 = vld [vmem:[#allocation2 + $0x60] sm:$0xff]
          %v1628 = vld [vmem:[#allocation2 + $0x70] sm:$0xff]
          %v1629 = vld [vmem:[#allocation2 + $0x80] sm:$0xff]
          %v1630 = vld [vmem:[#allocation2 + $0x90] sm:$0xff]
          %v1631 = vld [vmem:[#allocation2 + $0xa0] sm:$0xff]
          %v1632 = vld [vmem:[#allocation2 + $0xb0] sm:$0xff]
          %v1633 = vld [vmem:[#allocation2 + $0xc0] sm:$0xff]
          %v1634 = vld [vmem:[#allocation2 + $0xd0] sm:$0xff]
          %v1635 = vld [vmem:[#allocation2 + $0xe0] sm:$0xff]
          %v1636 = vld [vmem:[#allocation2 + $0xf0] sm:$0xff]
          %v1637 = vld [vmem:[#allocation3] sm:$0xff]
          %v1638 = vld [vmem:[#allocation3 + $0x10] sm:$0xff]
          %v1639 = vld [vmem:[#allocation3 + $0x20] sm:$0xff]
          %v1640 = vld [vmem:[#allocation3 + $0x30] sm:$0xff]
          %v1641 = vld [vmem:[#allocation3 + $0x40] sm:$0xff]
          %v1642 = vld [vmem:[#allocation3 + $0x50] sm:$0xff]
          %v1643 = vld [vmem:[#allocation3 + $0x60] sm:$0xff]
          %v1644 = vld [vmem:[#allocation3 + $0x70] sm:$0xff]
          %v1645 = vld [vmem:[#allocation3 + $0x80] sm:$0xff]
          %v1646 = vld [vmem:[#allocation3 + $0x90] sm:$0xff]
          %v1647 = vld [vmem:[#allocation3 + $0xa0] sm:$0xff]
          %v1648 = vld [vmem:[#allocation3 + $0xb0] sm:$0xff]
          %v1649 = vld [vmem:[#allocation3 + $0xc0] sm:$0xff]
          %v1650 = vld [vmem:[#allocation3 + $0xd0] sm:$0xff]
          %v1651 = vld [vmem:[#allocation3 + $0xe0] sm:$0xff]
          %v1652 = vld [vmem:[#allocation3 + $0xf0] sm:$0xff]
          %v1653 = vld [vmem:[#allocation4] sm:$0xff]
          %v1654 = vld [vmem:[#allocation4 + $0x10] sm:$0xff]
          %v1655 = vld [vmem:[#allocation4 + $0x20] sm:$0xff]
          %v1656 = vld [vmem:[#allocation4 + $0x30] sm:$0xff]
          %v1657 = vld [vmem:[#allocation4 + $0x40] sm:$0xff]
          %v1658 = vld [vmem:[#allocation4 + $0x50] sm:$0xff]
          %v1659 = vld [vmem:[#allocation4 + $0x60] sm:$0xff]
          %v1660 = vld [vmem:[#allocation4 + $0x70] sm:$0xff]
          %v1661 = vld [vmem:[#allocation4 + $0x80] sm:$0xff]
          %v1662 = vld [vmem:[#allocation4 + $0x90] sm:$0xff]
          %v1663 = vld [vmem:[#allocation4 + $0xa0] sm:$0xff]
          %v1664 = vld [vmem:[#allocation4 + $0xb0] sm:$0xff]
          %v1665 = vld [vmem:[#allocation4 + $0xc0] sm:$0xff]
          %v1666 = vld [vmem:[#allocation4 + $0xd0] sm:$0xff]
          %v1667 = vld [vmem:[#allocation4 + $0xe0] sm:$0xff]
          %v1668 = vld [vmem:[#allocation4 + $0xf0] sm:$0xff]
          %1669 = vmatprep.subr.mxu0 0.0
          %1670 = vmatpush1.xpose.msra.mxu0 %v1637
          %1671 = vmatprep.subr.mxu0 0.0
          %1672 = vmatpush1.xpose.msra.mxu0 %v1638
          %1673 = vmatprep.subr.mxu0 0.0
          %1674 = vmatpush1.xpose.msra.mxu0 %v1639
          %1675 = vmatprep.subr.mxu0 0.0
          %1676 = vmatpush1.xpose.msra.mxu0 %v1640
          %1677 = vmatprep.subr.mxu0 0.0
          %1678 = vmatpush1.xpose.msra.mxu0 %v1641
          %1679 = vmatprep.subr.mxu0 0.0
          %1680 = vmatpush1.xpose.msra.mxu0 %v1642
          %1681 = vmatprep.subr.mxu0 0.0
          %1682 = vmatpush1.xpose.msra.mxu0 %v1643
          %1683 = vmatprep.subr.mxu0 0.0
          %1684 = vmatpush1.xpose.msra.mxu0 %v1644
          %1685 = vmatprep.subr.mxu0 0.0
          %1686 = vmatpush1.xpose.msra.mxu0 %v1645
          %1687 = vmatprep.subr.mxu0 0.0
          %1688 = vmatpush1.xpose.msra.mxu0 %v1646
          %1689 = vmatprep.subr.mxu0 0.0
          %1690 = vmatpush1.xpose.msra.mxu0 %v1647
          %1691 = vmatprep.subr.mxu0 0.0
          %1692 = vmatpush1.xpose.msra.mxu0 %v1648
          %1693 = vmatprep.subr.mxu0 0.0
          %1694 = vmatpush1.xpose.msra.mxu0 %v1649
          %1695 = vmatprep.subr.mxu0 0.0
          %1696 = vmatpush1.xpose.msra.mxu0 %v1650
          %1697 = vmatprep.subr.mxu0 0.0
          %1698 = vmatpush1.xpose.msra.mxu0 %v1651
          %1699 = vmatprep.subr.mxu0 0.0
          %1700 = vmatpush1.xpose.msra.mxu0 %v1652
          %1701 = vmatprep.subr.mxu0 0.0
          %1702 = vmatpush1.xpose.msra.mxu0 0.0
          %1703 = vmatprep.subr.mxu0 0.0
          %1704 = vmatpush1.xpose.msra.mxu0 0.0
          %1705 = vmatprep.subr.mxu0 0.0
          %1706 = vmatpush1.xpose.msra.mxu0 0.0
          %1707 = vmatprep.subr.mxu0 0.0
          %1708 = vmatpush1.xpose.msra.mxu0 0.0
          %1709 = vmatprep.subr.mxu0 0.0
          %1710 = vmatpush1.xpose.msra.mxu0 0.0
          %1711 = vmatprep.subr.mxu0 0.0
          %1712 = vmatpush1.xpose.msra.mxu0 0.0
          %1713 = vmatprep.subr.mxu0 0.0
          %1714 = vmatpush1.xpose.msra.mxu0 0.0
          %1715 = vmatprep.subr.mxu0 0.0
          %1716 = vmatpush1.xpose.msra.mxu0 0.0
          %1717 = vmatprep.subr.mxu0 0.0
          %1718 = vmatpush1.xpose.msra.mxu0 0.0
          %1719 = vmatprep.subr.mxu0 0.0
          %1720 = vmatpush1.xpose.msra.mxu0 0.0
          %1721 = vmatprep.subr.mxu0 0.0
          %1722 = vmatpush1.xpose.msra.mxu0 0.0
          %1723 = vmatprep.subr.mxu0 0.0
          %1724 = vmatpush1.xpose.msra.mxu0 0.0
          %1725 = vmatprep.subr.mxu0 0.0
          %1726 = vmatpush1.xpose.msra.mxu0 0.0
          %1727 = vmatprep.subr.mxu0 0.0
          %1728 = vmatpush1.xpose.msra.mxu0 0.0
          %1729 = vmatprep.subr.mxu0 0.0
          %1730 = vmatpush1.xpose.msra.mxu0 0.0
          %1731 = vmatprep.subr.mxu0 0.0
          %1732 = vmatpush1.xpose.msra.mxu0 0.0
          %1733 = vmatprep.mubr.f32.mxu0 0.0
          %1734 = vmatmul.mubr.f32.gmra.mrb[0].mxu0 %v1621
          %v1735 = vpop.f32.mrb[0].mxu0
          %v1736 = vadd.f32 %v1589, %v1735
          %v1737 = vpop.f32.mrb[0].mxu0
          %1738 = vmatprep.mubr.f32.mxu0 0.0
          %1739 = vmatmul.mubr.f32.gmra.mrb[0].mxu0 %v1622
          %v1740 = vpop.f32.mrb[0].mxu0
          %v1741 = vadd.f32 %v1590, %v1740
          %v1742 = vpop.f32.mrb[0].mxu0
          %1743 = vmatprep.mubr.f32.mxu0 0.0
          %1744 = vmatmul.mubr.f32.gmra.mrb[0].mxu0 %v1623
          %v1745 = vpop.f32.mrb[0].mxu0
          %v1746 = vadd.f32 %v1591, %v1745
          %v1747 = vpop.f32.mrb[0].mxu0
          %1748 = vmatprep.mubr.f32.mxu0 0.0
          %1749 = vmatmul.mubr.f32.gmra.mrb[0].mxu0 %v1624
          %v1750 = vpop.f32.mrb[0].mxu0
          %v1751 = vadd.f32 %v1592, %v1750
          %v1752 = vpop.f32.mrb[0].mxu0
          %1753 = vmatprep.mubr.f32.mxu0 0.0
          %1754 = vmatmul.mubr.f32.gmra.mrb[0].mxu0 %v1625
          %v1755 = vpop.f32.mrb[0].mxu0
          %v1756 = vadd.f32 %v1593, %v1755
          %v1757 = vpop.f32.mrb[0].mxu0
          %1758 = vmatprep.mubr.f32.mxu0 0.0
          %1759 = vmatmul.mubr.f32.gmra.mrb[0].mxu0 %v1626
          %v1760 = vpop.f32.mrb[0].mxu0
          %v1761 = vadd.f32 %v1594, %v1760
          %v1762 = vpop.f32.mrb[0].mxu0
          %1763 = vmatprep.mubr.f32.mxu0 0.0
          %1764 = vmatmul.mubr.f32.gmra.mrb[0].mxu0 %v1627
          %v1765 = vpop.f32.mrb[0].mxu0
          %v1766 = vadd.f32 %v1595, %v1765
          %v1767 = vpop.f32.mrb[0].mxu0
          %1768 = vmatprep.mubr.f32.mxu0 0.0
          %1769 = vmatmul.mubr.f32.gmra.mrb[0].mxu0 %v1628
          %v1770 = vpop.f32.mrb[0].mxu0
          %v1771 = vadd.f32 %v1596, %v1770
          %v1772 = vpop.f32.mrb[0].mxu0
          %1773 = vmatprep.mubr.f32.mxu0 0.0
          %1774 = vmatmul.mubr.f32.gmra.mrb[0].mxu0 %v1629
          %v1775 = vpop.f32.mrb[0].mxu0
          %v1776 = vadd.f32 %v1597, %v1775
          %v1777 = vpop.f32.mrb[0].mxu0
          %1778 = vmatprep.mubr.f32.mxu0 0.0
          %1779 = vmatmul.mubr.f32.gmra.mrb[0].mxu0 %v1630
          %v1780 = vpop.f32.mrb[0].mxu0
          %v1781 = vadd.f32 %v1598, %v1780
          %v1782 = vpop.f32.mrb[0].mxu0
          %1783 = vmatprep.mubr.f32.mxu0 0.0
          %1784 = vmatmul.mubr.f32.gmra.mrb[0].mxu0 %v1631
          %v1785 = vpop.f32.mrb[0].mxu0
          %v1786 = vadd.f32 %v1599, %v1785
          %v1787 = vpop.f32.mrb[0].mxu0
          %1788 = vmatprep.mubr.f32.mxu0 0.0
          %1789 = vmatmul.mubr.f32.gmra.mrb[0].mxu0 %v1632
          %v1790 = vpop.f32.mrb[0].mxu0
          %v1791 = vadd.f32 %v1600, %v1790
          %v1792 = vpop.f32.mrb[0].mxu0
          %1793 = vmatprep.mubr.f32.mxu0 0.0
          %1794 = vmatmul.mubr.f32.gmra.mrb[0].mxu0 %v1633
          %v1795 = vpop.f32.mrb[0].mxu0
          %v1796 = vadd.f32 %v1601, %v1795
          %v1797 = vpop.f32.mrb[0].mxu0
          %1798 = vmatprep.mubr.f32.mxu0 0.0
          %1799 = vmatmul.mubr.f32.gmra.mrb[0].mxu0 %v1634
          %v1800 = vpop.f32.mrb[0].mxu0
          %v1801 = vadd.f32 %v1602, %v1800
          %v1802 = vpop.f32.mrb[0].mxu0
          %1803 = vmatprep.mubr.f32.mxu0 0.0
          %1804 = vmatmul.mubr.f32.gmra.mrb[0].mxu0 %v1635
          %v1805 = vpop.f32.mrb[0].mxu0
          %v1806 = vadd.f32 %v1603, %v1805
          %v1807 = vpop.f32.mrb[0].mxu0
          %1808 = vmatprep.mubr.f32.mxu0 0.0
          %1809 = vmatmul.mubr.f32.gmra.mrb[0].mxu0 %v1636
          %v1810 = vpop.f32.mrb[0].mxu0
          %v1811 = vadd.f32 %v1604, %v1810
          %v1812 = vpop.f32.mrb[0].mxu0
          %1813 = vdwg.mxu0
          %v1814 = vld [vmem:[#allocation6] sm:$0xff]
          %v1815 = vld [vmem:[#allocation6 + $0x8] sm:$0xff]
          %v1816 = vld [vmem:[#allocation6 + $0x10] sm:$0xff]
          %v1817 = vld [vmem:[#allocation6 + $0x18] sm:$0xff]
          %v1818 = vld [vmem:[#allocation6 + $0x20] sm:$0xff]
          %v1819 = vld [vmem:[#allocation6 + $0x28] sm:$0xff]
          %v1820 = vld [vmem:[#allocation6 + $0x30] sm:$0xff]
          %v1821 = vld [vmem:[#allocation6 + $0x38] sm:$0xff]
          %v1822 = vld [vmem:[#allocation6 + $0x40] sm:$0xff]
          %v1823 = vld [vmem:[#allocation6 + $0x48] sm:$0xff]
          %v1824 = vld [vmem:[#allocation6 + $0x50] sm:$0xff]
          %v1825 = vld [vmem:[#allocation6 + $0x58] sm:$0xff]
          %v1826 = vld [vmem:[#allocation6 + $0x60] sm:$0xff]
          %v1827 = vld [vmem:[#allocation6 + $0x68] sm:$0xff]
          %v1828 = vld [vmem:[#allocation6 + $0x70] sm:$0xff]
          %v1829 = vld [vmem:[#allocation6 + $0x78] sm:$0xff]
          %1830 = vmax.xlane.f32.xlu0 %v1736
          %v1831 = vpop.xlane.xlu0 %1830
          %1832 = vmax.xlane.f32.xlu0 %v1741
          %v1833 = vpop.xlane.xlu0 %1832
          %1834 = vmax.xlane.f32.xlu0 %v1746
          %v1835 = vpop.xlane.xlu0 %1834
          %1836 = vmax.xlane.f32.xlu0 %v1751
          %v1837 = vpop.xlane.xlu0 %1836
          %1838 = vmax.xlane.f32.xlu0 %v1756
          %v1839 = vpop.xlane.xlu0 %1838
          %1840 = vmax.xlane.f32.xlu0 %v1761
          %v1841 = vpop.xlane.xlu0 %1840
          %1842 = vmax.xlane.f32.xlu0 %v1766
          %v1843 = vpop.xlane.xlu0 %1842
          %1844 = vmax.xlane.f32.xlu0 %v1771
          %v1845 = vpop.xlane.xlu0 %1844
          %1846 = vmax.xlane.f32.xlu0 %v1776
          %v1847 = vpop.xlane.xlu0 %1846
          %1848 = vmax.xlane.f32.xlu0 %v1781
          %v1849 = vpop.xlane.xlu0 %1848
          %1850 = vmax.xlane.f32.xlu0 %v1786
          %v1851 = vpop.xlane.xlu0 %1850
          %1852 = vmax.xlane.f32.xlu0 %v1791
          %v1853 = vpop.xlane.xlu0 %1852
          %1854 = vmax.xlane.f32.xlu0 %v1796
          %v1855 = vpop.xlane.xlu0 %1854
          %1856 = vmax.xlane.f32.xlu0 %v1801
          %v1857 = vpop.xlane.xlu0 %1856
          %1858 = vmax.xlane.f32.xlu0 %v1806
          %v1859 = vpop.xlane.xlu0 %1858
          %1860 = vmax.xlane.f32.xlu0 %v1811
          %v1861 = vpop.xlane.xlu0 %1860
          %v1862 = vmax.f32 %v1814, %v1831
          %v1863 = vmax.f32 %v1815, %v1833
          %v1864 = vmax.f32 %v1816, %v1835
          %v1865 = vmax.f32 %v1817, %v1837
          %v1866 = vmax.f32 %v1818, %v1839
          %v1867 = vmax.f32 %v1819, %v1841
          %v1868 = vmax.f32 %v1820, %v1843
          %v1869 = vmax.f32 %v1821, %v1845
          %v1870 = vmax.f32 %v1822, %v1847
          %v1871 = vmax.f32 %v1823, %v1849
          %v1872 = vmax.f32 %v1824, %v1851
          %v1873 = vmax.f32 %v1825, %v1853
          %v1874 = vmax.f32 %v1826, %v1855
          %v1875 = vmax.f32 %v1827, %v1857
          %v1876 = vmax.f32 %v1828, %v1859
          %v1877 = vmax.f32 %v1829, %v1861
          %v1878 = vsub.f32 %v1814, %v1862
          %v1879 = vsub.f32 %v1815, %v1863
          %v1880 = vsub.f32 %v1816, %v1864
          %v1881 = vsub.f32 %v1817, %v1865
          %v1882 = vsub.f32 %v1818, %v1866
          %v1883 = vsub.f32 %v1819, %v1867
          %v1884 = vsub.f32 %v1820, %v1868
          %v1885 = vsub.f32 %v1821, %v1869
          %v1886 = vsub.f32 %v1822, %v1870
          %v1887 = vsub.f32 %v1823, %v1871
          %v1888 = vsub.f32 %v1824, %v1872
          %v1889 = vsub.f32 %v1825, %v1873
          %v1890 = vsub.f32 %v1826, %v1874
          %v1891 = vsub.f32 %v1827, %v1875
          %v1892 = vsub.f32 %v1828, %v1876
          %v1893 = vsub.f32 %v1829, %v1877
          %v1894 = vmul.f32 %v1878, 1.442695
          %v1895 = vpow.pop %v1894
          %v1896 = vmul.f32 %v1879, 1.442695
          %v1897 = vpow.pop %v1896
          %v1898 = vmul.f32 %v1880, 1.442695
          %v1899 = vpow.pop %v1898
          %v1900 = vmul.f32 %v1881, 1.442695
          %v1901 = vpow.pop %v1900
          %v1902 = vmul.f32 %v1882, 1.442695
          %v1903 = vpow.pop %v1902
          %v1904 = vmul.f32 %v1883, 1.442695
          %v1905 = vpow.pop %v1904
          %v1906 = vmul.f32 %v1884, 1.442695
          %v1907 = vpow.pop %v1906
          %v1908 = vmul.f32 %v1885, 1.442695
          %v1909 = vpow.pop %v1908
          %v1910 = vmul.f32 %v1886, 1.442695
          %v1911 = vpow.pop %v1910
          %v1912 = vmul.f32 %v1887, 1.442695
          %v1913 = vpow.pop %v1912
          %v1914 = vmul.f32 %v1888, 1.442695
          %v1915 = vpow.pop %v1914
          %v1916 = vmul.f32 %v1889, 1.442695
          %v1917 = vpow.pop %v1916
          %v1918 = vmul.f32 %v1890, 1.442695
          %v1919 = vpow.pop %v1918
          %v1920 = vmul.f32 %v1891, 1.442695
          %v1921 = vpow.pop %v1920
          %v1922 = vmul.f32 %v1892, 1.442695
          %v1923 = vpow.pop %v1922
          %v1924 = vmul.f32 %v1893, 1.442695
          %v1925 = vpow.pop %v1924
          %1927 = vset.pattern.permute.xlu0 0
          %1928 = vperm.xlu0 %1927, %v1862
          %v1929 = vpop.permute.xlu0 %1928
          %1932 = vset.pattern.permute.xlu0 0
          %1933 = vperm.xlu0 %1932, %v1863
          %v1934 = vpop.permute.xlu0 %1933
          %1937 = vset.pattern.permute.xlu0 0
          %1938 = vperm.xlu0 %1937, %v1864
          %v1939 = vpop.permute.xlu0 %1938
          %1942 = vset.pattern.permute.xlu0 0
          %1943 = vperm.xlu0 %1942, %v1865
          %v1944 = vpop.permute.xlu0 %1943
          %1947 = vset.pattern.permute.xlu0 0
          %1948 = vperm.xlu0 %1947, %v1866
          %v1949 = vpop.permute.xlu0 %1948
          %1952 = vset.pattern.permute.xlu0 0
          %1953 = vperm.xlu0 %1952, %v1867
          %v1954 = vpop.permute.xlu0 %1953
          %1957 = vset.pattern.permute.xlu0 0
          %1958 = vperm.xlu0 %1957, %v1868
          %v1959 = vpop.permute.xlu0 %1958
          %1962 = vset.pattern.permute.xlu0 0
          %1963 = vperm.xlu0 %1962, %v1869
          %v1964 = vpop.permute.xlu0 %1963
          %1967 = vset.pattern.permute.xlu0 0
          %1968 = vperm.xlu0 %1967, %v1870
          %v1969 = vpop.permute.xlu0 %1968
          %1972 = vset.pattern.permute.xlu0 0
          %1973 = vperm.xlu0 %1972, %v1871
          %v1974 = vpop.permute.xlu0 %1973
          %1977 = vset.pattern.permute.xlu0 0
          %1978 = vperm.xlu0 %1977, %v1872
          %v1979 = vpop.permute.xlu0 %1978
          %1982 = vset.pattern.permute.xlu0 0
          %1983 = vperm.xlu0 %1982, %v1873
          %v1984 = vpop.permute.xlu0 %1983
          %1987 = vset.pattern.permute.xlu0 0
          %1988 = vperm.xlu0 %1987, %v1874
          %v1989 = vpop.permute.xlu0 %1988
          %1992 = vset.pattern.permute.xlu0 0
          %1993 = vperm.xlu0 %1992, %v1875
          %v1994 = vpop.permute.xlu0 %1993
          %1997 = vset.pattern.permute.xlu0 0
          %1998 = vperm.xlu0 %1997, %v1876
          %v1999 = vpop.permute.xlu0 %1998
          %2002 = vset.pattern.permute.xlu0 0
          %2003 = vperm.xlu0 %2002, %v1877
          %v2004 = vpop.permute.xlu0 %2003
          %v2006 = vsub.f32 %v1736, %v1929
          %v2007 = vsub.f32 %v1741, %v1934
          %v2008 = vsub.f32 %v1746, %v1939
          %v2009 = vsub.f32 %v1751, %v1944
          %v2010 = vsub.f32 %v1756, %v1949
          %v2011 = vsub.f32 %v1761, %v1954
          %v2012 = vsub.f32 %v1766, %v1959
          %v2013 = vsub.f32 %v1771, %v1964
          %v2014 = vsub.f32 %v1776, %v1969
          %v2015 = vsub.f32 %v1781, %v1974
          %v2016 = vsub.f32 %v1786, %v1979
          %v2017 = vsub.f32 %v1791, %v1984
          %v2018 = vsub.f32 %v1796, %v1989
          %v2019 = vsub.f32 %v1801, %v1994
          %v2020 = vsub.f32 %v1806, %v1999
          %v2021 = vsub.f32 %v1811, %v2004
          %v2022 = vmul.f32 %v2006, 1.442695
          %v2023 = vpow.pop %v2022
          %v2024 = vmul.f32 %v2007, 1.442695
          %v2025 = vpow.pop %v2024
          %v2026 = vmul.f32 %v2008, 1.442695
          %v2027 = vpow.pop %v2026
          %v2028 = vmul.f32 %v2009, 1.442695
          %v2029 = vpow.pop %v2028
          %v2030 = vmul.f32 %v2010, 1.442695
          %v2031 = vpow.pop %v2030
          %v2032 = vmul.f32 %v2011, 1.442695
          %v2033 = vpow.pop %v2032
          %v2034 = vmul.f32 %v2012, 1.442695
          %v2035 = vpow.pop %v2034
          %v2036 = vmul.f32 %v2013, 1.442695
          %v2037 = vpow.pop %v2036
          %v2038 = vmul.f32 %v2014, 1.442695
          %v2039 = vpow.pop %v2038
          %v2040 = vmul.f32 %v2015, 1.442695
          %v2041 = vpow.pop %v2040
          %v2042 = vmul.f32 %v2016, 1.442695
          %v2043 = vpow.pop %v2042
          %v2044 = vmul.f32 %v2017, 1.442695
          %v2045 = vpow.pop %v2044
          %v2046 = vmul.f32 %v2018, 1.442695
          %v2047 = vpow.pop %v2046
          %v2048 = vmul.f32 %v2019, 1.442695
          %v2049 = vpow.pop %v2048
          %v2050 = vmul.f32 %v2020, 1.442695
          %v2051 = vpow.pop %v2050
          %v2052 = vmul.f32 %v2021, 1.442695
          %v2053 = vpow.pop %v2052
          %v2054 = vsel %vm1605, %v2023, 0.0
          %v2055 = vsel %vm1606, %v2025, 0.0
          %v2056 = vsel %vm1607, %v2027, 0.0
          %v2057 = vsel %vm1608, %v2029, 0.0
          %v2058 = vsel %vm1609, %v2031, 0.0
          %v2059 = vsel %vm1610, %v2033, 0.0
          %v2060 = vsel %vm1611, %v2035, 0.0
          %v2061 = vsel %vm1612, %v2037, 0.0
          %v2062 = vsel %vm1613, %v2039, 0.0
          %v2063 = vsel %vm1614, %v2041, 0.0
          %v2064 = vsel %vm1615, %v2043, 0.0
          %v2065 = vsel %vm1616, %v2045, 0.0
          %v2066 = vsel %vm1617, %v2047, 0.0
          %v2067 = vsel %vm1618, %v2049, 0.0
          %v2068 = vsel %vm1619, %v2051, 0.0
          %v2069 = vsel %vm1620, %v2053, 0.0
          %v2070 = vld [vmem:[#allocation7] sm:$0xff]
          %v2071 = vld [vmem:[#allocation7 + $0x8] sm:$0xff]
          %v2072 = vld [vmem:[#allocation7 + $0x10] sm:$0xff]
          %v2073 = vld [vmem:[#allocation7 + $0x18] sm:$0xff]
          %v2074 = vld [vmem:[#allocation7 + $0x20] sm:$0xff]
          %v2075 = vld [vmem:[#allocation7 + $0x28] sm:$0xff]
          %v2076 = vld [vmem:[#allocation7 + $0x30] sm:$0xff]
          %v2077 = vld [vmem:[#allocation7 + $0x38] sm:$0xff]
          %v2078 = vld [vmem:[#allocation7 + $0x40] sm:$0xff]
          %v2079 = vld [vmem:[#allocation7 + $0x48] sm:$0xff]
          %v2080 = vld [vmem:[#allocation7 + $0x50] sm:$0xff]
          %v2081 = vld [vmem:[#allocation7 + $0x58] sm:$0xff]
          %v2082 = vld [vmem:[#allocation7 + $0x60] sm:$0xff]
          %v2083 = vld [vmem:[#allocation7 + $0x68] sm:$0xff]
          %v2084 = vld [vmem:[#allocation7 + $0x70] sm:$0xff]
          %v2085 = vld [vmem:[#allocation7 + $0x78] sm:$0xff]
          %v2086 = vmul.f32 %v1895, %v2070
          %v2087 = vmul.f32 %v1897, %v2071
          %v2088 = vmul.f32 %v1899, %v2072
          %v2089 = vmul.f32 %v1901, %v2073
          %v2090 = vmul.f32 %v1903, %v2074
          %v2091 = vmul.f32 %v1905, %v2075
          %v2092 = vmul.f32 %v1907, %v2076
          %v2093 = vmul.f32 %v1909, %v2077
          %v2094 = vmul.f32 %v1911, %v2078
          %v2095 = vmul.f32 %v1913, %v2079
          %v2096 = vmul.f32 %v1915, %v2080
          %v2097 = vmul.f32 %v1917, %v2081
          %v2098 = vmul.f32 %v1919, %v2082
          %v2099 = vmul.f32 %v1921, %v2083
          %v2100 = vmul.f32 %v1923, %v2084
          %v2101 = vmul.f32 %v1925, %v2085
          %2102 = vadd.xlane.f32.xlu0 %v2054
          %v2103 = vpop.xlane.xlu0 %2102
          %2104 = vadd.xlane.f32.xlu0 %v2055
          %v2105 = vpop.xlane.xlu0 %2104
          %2106 = vadd.xlane.f32.xlu0 %v2056
          %v2107 = vpop.xlane.xlu0 %2106
          %2108 = vadd.xlane.f32.xlu0 %v2057
          %v2109 = vpop.xlane.xlu0 %2108
          %2110 = vadd.xlane.f32.xlu0 %v2058
          %v2111 = vpop.xlane.xlu0 %2110
          %2112 = vadd.xlane.f32.xlu0 %v2059
          %v2113 = vpop.xlane.xlu0 %2112
          %2114 = vadd.xlane.f32.xlu0 %v2060
          %v2115 = vpop.xlane.xlu0 %2114
          %2116 = vadd.xlane.f32.xlu0 %v2061
          %v2117 = vpop.xlane.xlu0 %2116
          %2118 = vadd.xlane.f32.xlu0 %v2062
          %v2119 = vpop.xlane.xlu0 %2118
          %2120 = vadd.xlane.f32.xlu0 %v2063
          %v2121 = vpop.xlane.xlu0 %2120
          %2122 = vadd.xlane.f32.xlu0 %v2064
          %v2123 = vpop.xlane.xlu0 %2122
          %2124 = vadd.xlane.f32.xlu0 %v2065
          %v2125 = vpop.xlane.xlu0 %2124
          %2126 = vadd.xlane.f32.xlu0 %v2066
          %v2127 = vpop.xlane.xlu0 %2126
          %2128 = vadd.xlane.f32.xlu0 %v2067
          %v2129 = vpop.xlane.xlu0 %2128
          %2130 = vadd.xlane.f32.xlu0 %v2068
          %v2131 = vpop.xlane.xlu0 %2130
          %2132 = vadd.xlane.f32.xlu0 %v2069
          %v2133 = vpop.xlane.xlu0 %2132
          %v2134 = vadd.f32 %v2086, %v2103
          %v2135 = vadd.f32 %v2087, %v2105
          %v2136 = vadd.f32 %v2088, %v2107
          %v2137 = vadd.f32 %v2089, %v2109
          %v2138 = vadd.f32 %v2090, %v2111
          %v2139 = vadd.f32 %v2091, %v2113
          %v2140 = vadd.f32 %v2092, %v2115
          %v2141 = vadd.f32 %v2093, %v2117
          %v2142 = vadd.f32 %v2094, %v2119
          %v2143 = vadd.f32 %v2095, %v2121
          %v2144 = vadd.f32 %v2096, %v2123
          %v2145 = vadd.f32 %v2097, %v2125
          %v2146 = vadd.f32 %v2098, %v2127
          %v2147 = vadd.f32 %v2099, %v2129
          %v2148 = vadd.f32 %v2100, %v2131
          %v2149 = vadd.f32 %v2101, %v2133
          %vm2150 = vcmask 7168
          %2151 = vst.msk [vmem:[#allocation7] sm:$0xff] %vm2150, %v2134
          %2152 = vst.msk [vmem:[#allocation7 + $0x8] sm:$0xff] %vm2150, %v2135
          %2153 = vst.msk [vmem:[#allocation7 + $0x10] sm:$0xff] %vm2150, %v2136
          %2154 = vst.msk [vmem:[#allocation7 + $0x18] sm:$0xff] %vm2150, %v2137
          %2155 = vst.msk [vmem:[#allocation7 + $0x20] sm:$0xff] %vm2150, %v2138
          %2156 = vst.msk [vmem:[#allocation7 + $0x28] sm:$0xff] %vm2150, %v2139
          %2157 = vst.msk [vmem:[#allocation7 + $0x30] sm:$0xff] %vm2150, %v2140
          %2158 = vst.msk [vmem:[#allocation7 + $0x38] sm:$0xff] %vm2150, %v2141
          %2159 = vst.msk [vmem:[#allocation7 + $0x40] sm:$0xff] %vm2150, %v2142
          %2160 = vst.msk [vmem:[#allocation7 + $0x48] sm:$0xff] %vm2150, %v2143
          %2161 = vst.msk [vmem:[#allocation7 + $0x50] sm:$0xff] %vm2150, %v2144
          %2162 = vst.msk [vmem:[#allocation7 + $0x58] sm:$0xff] %vm2150, %v2145
          %2163 = vst.msk [vmem:[#allocation7 + $0x60] sm:$0xff] %vm2150, %v2146
          %2164 = vst.msk [vmem:[#allocation7 + $0x68] sm:$0xff] %vm2150, %v2147
          %2165 = vst.msk [vmem:[#allocation7 + $0x70] sm:$0xff] %vm2150, %v2148
          %2166 = vst.msk [vmem:[#allocation7 + $0x78] sm:$0xff] %vm2150, %v2149
          %v2167 = vld [vmem:[#allocation8] sm:$0xff]
          %v2168 = vld [vmem:[#allocation8 + $0x8] sm:$0xff]
          %v2169 = vld [vmem:[#allocation8 + $0x10] sm:$0xff]
          %v2170 = vld [vmem:[#allocation8 + $0x18] sm:$0xff]
          %v2171 = vld [vmem:[#allocation8 + $0x20] sm:$0xff]
          %v2172 = vld [vmem:[#allocation8 + $0x28] sm:$0xff]
          %v2173 = vld [vmem:[#allocation8 + $0x30] sm:$0xff]
          %v2174 = vld [vmem:[#allocation8 + $0x38] sm:$0xff]
          %v2175 = vld [vmem:[#allocation8 + $0x40] sm:$0xff]
          %v2176 = vld [vmem:[#allocation8 + $0x48] sm:$0xff]
          %v2177 = vld [vmem:[#allocation8 + $0x50] sm:$0xff]
          %v2178 = vld [vmem:[#allocation8 + $0x58] sm:$0xff]
          %v2179 = vld [vmem:[#allocation8 + $0x60] sm:$0xff]
          %v2180 = vld [vmem:[#allocation8 + $0x68] sm:$0xff]
          %v2181 = vld [vmem:[#allocation8 + $0x70] sm:$0xff]
          %v2182 = vld [vmem:[#allocation8 + $0x78] sm:$0xff]
          %2184 = vset.pattern.permute.xlu0 0
          %2185 = vperm.xlu0 %2184, %v1895
          %v2186 = vpop.permute.xlu0 %2185
          %2189 = vset.pattern.permute.xlu0 0
          %2190 = vperm.xlu0 %2189, %v1897
          %v2191 = vpop.permute.xlu0 %2190
          %2194 = vset.pattern.permute.xlu0 0
          %2195 = vperm.xlu0 %2194, %v1899
          %v2196 = vpop.permute.xlu0 %2195
          %2199 = vset.pattern.permute.xlu0 0
          %2200 = vperm.xlu0 %2199, %v1901
          %v2201 = vpop.permute.xlu0 %2200
          %2204 = vset.pattern.permute.xlu0 0
          %2205 = vperm.xlu0 %2204, %v1903
          %v2206 = vpop.permute.xlu0 %2205
          %2209 = vset.pattern.permute.xlu0 0
          %2210 = vperm.xlu0 %2209, %v1905
          %v2211 = vpop.permute.xlu0 %2210
          %2214 = vset.pattern.permute.xlu0 0
          %2215 = vperm.xlu0 %2214, %v1907
          %v2216 = vpop.permute.xlu0 %2215
          %2219 = vset.pattern.permute.xlu0 0
          %2220 = vperm.xlu0 %2219, %v1909
          %v2221 = vpop.permute.xlu0 %2220
          %2224 = vset.pattern.permute.xlu0 0
          %2225 = vperm.xlu0 %2224, %v1911
          %v2226 = vpop.permute.xlu0 %2225
          %2229 = vset.pattern.permute.xlu0 0
          %2230 = vperm.xlu0 %2229, %v1913
          %v2231 = vpop.permute.xlu0 %2230
          %2234 = vset.pattern.permute.xlu0 0
          %2235 = vperm.xlu0 %2234, %v1915
          %v2236 = vpop.permute.xlu0 %2235
          %2239 = vset.pattern.permute.xlu0 0
          %2240 = vperm.xlu0 %2239, %v1917
          %v2241 = vpop.permute.xlu0 %2240
          %2244 = vset.pattern.permute.xlu0 0
          %2245 = vperm.xlu0 %2244, %v1919
          %v2246 = vpop.permute.xlu0 %2245
          %2249 = vset.pattern.permute.xlu0 0
          %2250 = vperm.xlu0 %2249, %v1921
          %v2251 = vpop.permute.xlu0 %2250
          %2254 = vset.pattern.permute.xlu0 0
          %2255 = vperm.xlu0 %2254, %v1923
          %v2256 = vpop.permute.xlu0 %2255
          %2259 = vset.pattern.permute.xlu0 0
          %2260 = vperm.xlu0 %2259, %v1925
          %v2261 = vpop.permute.xlu0 %2260
          %v2263 = vmul.f32 %v2186, %v2167
          %v2264 = vmul.f32 %v2191, %v2168
          %v2265 = vmul.f32 %v2196, %v2169
          %v2266 = vmul.f32 %v2201, %v2170
          %v2267 = vmul.f32 %v2206, %v2171
          %v2268 = vmul.f32 %v2211, %v2172
          %v2269 = vmul.f32 %v2216, %v2173
          %v2270 = vmul.f32 %v2221, %v2174
          %v2271 = vmul.f32 %v2226, %v2175
          %v2272 = vmul.f32 %v2231, %v2176
          %v2273 = vmul.f32 %v2236, %v2177
          %v2274 = vmul.f32 %v2241, %v2178
          %v2275 = vmul.f32 %v2246, %v2179
          %v2276 = vmul.f32 %v2251, %v2180
          %v2277 = vmul.f32 %v2256, %v2181
          %v2278 = vmul.f32 %v2261, %v2182
          %2279 = vmatprep.subr.mxu0 0.0
          %2280 = vmatpush1.msra.mxu0 %v1653
          %2281 = vmatprep.subr.mxu0 0.0
          %2282 = vmatpush1.msra.mxu0 %v1654
          %2283 = vmatprep.subr.mxu0 0.0
          %2284 = vmatpush1.msra.mxu0 %v1655
          %2285 = vmatprep.subr.mxu0 0.0
          %2286 = vmatpush1.msra.mxu0 %v1656
          %2287 = vmatprep.subr.mxu0 0.0
          %2288 = vmatpush1.msra.mxu0 %v1657
          %2289 = vmatprep.subr.mxu0 0.0
          %2290 = vmatpush1.msra.mxu0 %v1658
          %2291 = vmatprep.subr.mxu0 0.0
          %2292 = vmatpush1.msra.mxu0 %v1659
          %2293 = vmatprep.subr.mxu0 0.0
          %2294 = vmatpush1.msra.mxu0 %v1660
          %2295 = vmatprep.subr.mxu0 0.0
          %2296 = vmatpush1.msra.mxu0 %v1661
          %2297 = vmatprep.subr.mxu0 0.0
          %2298 = vmatpush1.msra.mxu0 %v1662
          %2299 = vmatprep.subr.mxu0 0.0
          %2300 = vmatpush1.msra.mxu0 %v1663
          %2301 = vmatprep.subr.mxu0 0.0
          %2302 = vmatpush1.msra.mxu0 %v1664
          %2303 = vmatprep.subr.mxu0 0.0
          %2304 = vmatpush1.msra.mxu0 %v1665
          %2305 = vmatprep.subr.mxu0 0.0
          %2306 = vmatpush1.msra.mxu0 %v1666
          %2307 = vmatprep.subr.mxu0 0.0
          %2308 = vmatpush1.msra.mxu0 %v1667
          %2309 = vmatprep.subr.mxu0 0.0
          %2310 = vmatpush1.msra.mxu0 %v1668
          %2311 = vmatprep.subr.mxu0 0.0
          %2312 = vmatpush1.msra.mxu0 0.0
          %2313 = vmatprep.subr.mxu0 0.0
          %2314 = vmatpush1.msra.mxu0 0.0
          %2315 = vmatprep.subr.mxu0 0.0
          %2316 = vmatpush1.msra.mxu0 0.0
          %2317 = vmatprep.subr.mxu0 0.0
          %2318 = vmatpush1.msra.mxu0 0.0
          %2319 = vmatprep.subr.mxu0 0.0
          %2320 = vmatpush1.msra.mxu0 0.0
          %2321 = vmatprep.subr.mxu0 0.0
          %2322 = vmatpush1.msra.mxu0 0.0
          %2323 = vmatprep.subr.mxu0 0.0
          %2324 = vmatpush1.msra.mxu0 0.0
          %2325 = vmatprep.subr.mxu0 0.0
          %2326 = vmatpush1.msra.mxu0 0.0
          %2327 = vmatprep.subr.mxu0 0.0
          %2328 = vmatpush1.msra.mxu0 0.0
          %2329 = vmatprep.subr.mxu0 0.0
          %2330 = vmatpush1.msra.mxu0 0.0
          %2331 = vmatprep.subr.mxu0 0.0
          %2332 = vmatpush1.msra.mxu0 0.0
          %2333 = vmatprep.subr.mxu0 0.0
          %2334 = vmatpush1.msra.mxu0 0.0
          %2335 = vmatprep.subr.mxu0 0.0
          %2336 = vmatpush1.msra.mxu0 0.0
          %2337 = vmatprep.subr.mxu0 0.0
          %2338 = vmatpush1.msra.mxu0 0.0
          %2339 = vmatprep.subr.mxu0 0.0
          %2340 = vmatpush1.msra.mxu0 0.0
          %2341 = vmatprep.subr.mxu0 0.0
          %2342 = vmatpush1.msra.mxu0 0.0
          %2343 = vmatprep.mubr.f32.mxu0 0.0
          %2344 = vmatmul.mubr.f32.gmra.mrb[0].mxu0 %v2054
          %v2345 = vpop.f32.mrb[0].mxu0
          %v2346 = vadd.f32 0.0, %v2345
          %v2347 = vpop.f32.mrb[0].mxu0
          %2348 = vmatprep.mubr.f32.mxu0 0.0
          %2349 = vmatmul.mubr.f32.gmra.mrb[0].mxu0 %v2055
          %v2350 = vpop.f32.mrb[0].mxu0
          %v2351 = vadd.f32 0.0, %v2350
          %v2352 = vpop.f32.mrb[0].mxu0
          %2353 = vmatprep.mubr.f32.mxu0 0.0
          %2354 = vmatmul.mubr.f32.gmra.mrb[0].mxu0 %v2056
          %v2355 = vpop.f32.mrb[0].mxu0
          %v2356 = vadd.f32 0.0, %v2355
          %v2357 = vpop.f32.mrb[0].mxu0
          %2358 = vmatprep.mubr.f32.mxu0 0.0
          %2359 = vmatmul.mubr.f32.gmra.mrb[0].mxu0 %v2057
          %v2360 = vpop.f32.mrb[0].mxu0
          %v2361 = vadd.f32 0.0, %v2360
          %v2362 = vpop.f32.mrb[0].mxu0
          %2363 = vmatprep.mubr.f32.mxu0 0.0
          %2364 = vmatmul.mubr.f32.gmra.mrb[0].mxu0 %v2058
          %v2365 = vpop.f32.mrb[0].mxu0
          %v2366 = vadd.f32 0.0, %v2365
          %v2367 = vpop.f32.mrb[0].mxu0
          %2368 = vmatprep.mubr.f32.mxu0 0.0
          %2369 = vmatmul.mubr.f32.gmra.mrb[0].mxu0 %v2059
          %v2370 = vpop.f32.mrb[0].mxu0
          %v2371 = vadd.f32 0.0, %v2370
          %v2372 = vpop.f32.mrb[0].mxu0
          %2373 = vmatprep.mubr.f32.mxu0 0.0
          %2374 = vmatmul.mubr.f32.gmra.mrb[0].mxu0 %v2060
          %v2375 = vpop.f32.mrb[0].mxu0
          %v2376 = vadd.f32 0.0, %v2375
          %v2377 = vpop.f32.mrb[0].mxu0
          %2378 = vmatprep.mubr.f32.mxu0 0.0
          %2379 = vmatmul.mubr.f32.gmra.mrb[0].mxu0 %v2061
          %v2380 = vpop.f32.mrb[0].mxu0
          %v2381 = vadd.f32 0.0, %v2380
          %v2382 = vpop.f32.mrb[0].mxu0
          %2383 = vmatprep.mubr.f32.mxu0 0.0
          %2384 = vmatmul.mubr.f32.gmra.mrb[0].mxu0 %v2062
          %v2385 = vpop.f32.mrb[0].mxu0
          %v2386 = vadd.f32 0.0, %v2385
          %v2387 = vpop.f32.mrb[0].mxu0
          %2388 = vmatprep.mubr.f32.mxu0 0.0
          %2389 = vmatmul.mubr.f32.gmra.mrb[0].mxu0 %v2063
          %v2390 = vpop.f32.mrb[0].mxu0
          %v2391 = vadd.f32 0.0, %v2390
          %v2392 = vpop.f32.mrb[0].mxu0
          %2393 = vmatprep.mubr.f32.mxu0 0.0
          %2394 = vmatmul.mubr.f32.gmra.mrb[0].mxu0 %v2064
          %v2395 = vpop.f32.mrb[0].mxu0
          %v2396 = vadd.f32 0.0, %v2395
          %v2397 = vpop.f32.mrb[0].mxu0
          %2398 = vmatprep.mubr.f32.mxu0 0.0
          %2399 = vmatmul.mubr.f32.gmra.mrb[0].mxu0 %v2065
          %v2400 = vpop.f32.mrb[0].mxu0
          %v2401 = vadd.f32 0.0, %v2400
          %v2402 = vpop.f32.mrb[0].mxu0
          %2403 = vmatprep.mubr.f32.mxu0 0.0
          %2404 = vmatmul.mubr.f32.gmra.mrb[0].mxu0 %v2066
          %v2405 = vpop.f32.mrb[0].mxu0
          %v2406 = vadd.f32 0.0, %v2405
          %v2407 = vpop.f32.mrb[0].mxu0
          %2408 = vmatprep.mubr.f32.mxu0 0.0
          %2409 = vmatmul.mubr.f32.gmra.mrb[0].mxu0 %v2067
          %v2410 = vpop.f32.mrb[0].mxu0
          %v2411 = vadd.f32 0.0, %v2410
          %v2412 = vpop.f32.mrb[0].mxu0
          %2413 = vmatprep.mubr.f32.mxu0 0.0
          %2414 = vmatmul.mubr.f32.gmra.mrb[0].mxu0 %v2068
          %v2415 = vpop.f32.mrb[0].mxu0
          %v2416 = vadd.f32 0.0, %v2415
          %v2417 = vpop.f32.mrb[0].mxu0
          %2418 = vmatprep.mubr.f32.mxu0 0.0
          %2419 = vmatmul.mubr.f32.gmra.mrb[0].mxu0 %v2069
          %v2420 = vpop.f32.mrb[0].mxu0
          %v2421 = vadd.f32 0.0, %v2420
          %v2422 = vpop.f32.mrb[0].mxu0
          %2423 = vdwg.mxu0
          %v2424 = vadd.f32 %v2263, %v2346
          %v2425 = vadd.f32 %v2264, %v2351
          %v2426 = vadd.f32 %v2265, %v2356
          %v2427 = vadd.f32 %v2266, %v2361
          %v2428 = vadd.f32 %v2267, %v2366
          %v2429 = vadd.f32 %v2268, %v2371
          %v2430 = vadd.f32 %v2269, %v2376
          %v2431 = vadd.f32 %v2270, %v2381
          %v2432 = vadd.f32 %v2271, %v2386
          %v2433 = vadd.f32 %v2272, %v2391
          %v2434 = vadd.f32 %v2273, %v2396
          %v2435 = vadd.f32 %v2274, %v2401
          %v2436 = vadd.f32 %v2275, %v2406
          %v2437 = vadd.f32 %v2276, %v2411
          %v2438 = vadd.f32 %v2277, %v2416
          %v2439 = vadd.f32 %v2278, %v2421
          %2440 = vst [vmem:[#allocation8] sm:$0xff] %v2424
          %2441 = vst [vmem:[#allocation8 + $0x8] sm:$0xff] %v2425
          %2442 = vst [vmem:[#allocation8 + $0x10] sm:$0xff] %v2426
          %2443 = vst [vmem:[#allocation8 + $0x18] sm:$0xff] %v2427
          %2444 = vst [vmem:[#allocation8 + $0x20] sm:$0xff] %v2428
          %2445 = vst [vmem:[#allocation8 + $0x28] sm:$0xff] %v2429
          %2446 = vst [vmem:[#allocation8 + $0x30] sm:$0xff] %v2430
          %2447 = vst [vmem:[#allocation8 + $0x38] sm:$0xff] %v2431
          %2448 = vst [vmem:[#allocation8 + $0x40] sm:$0xff] %v2432
          %2449 = vst [vmem:[#allocation8 + $0x48] sm:$0xff] %v2433
          %2450 = vst [vmem:[#allocation8 + $0x50] sm:$0xff] %v2434
          %2451 = vst [vmem:[#allocation8 + $0x58] sm:$0xff] %v2435
          %2452 = vst [vmem:[#allocation8 + $0x60] sm:$0xff] %v2436
          %2453 = vst [vmem:[#allocation8 + $0x68] sm:$0xff] %v2437
          %2454 = vst [vmem:[#allocation8 + $0x70] sm:$0xff] %v2438
          %2455 = vst [vmem:[#allocation8 + $0x78] sm:$0xff] %v2439
          %2456 = vst.msk [vmem:[#allocation6] sm:$0xff] %vm2150, %v1862
          %2457 = vst.msk [vmem:[#allocation6 + $0x8] sm:$0xff] %vm2150, %v1863
          %2458 = vst.msk [vmem:[#allocation6 + $0x10] sm:$0xff] %vm2150, %v1864
          %2459 = vst.msk [vmem:[#allocation6 + $0x18] sm:$0xff] %vm2150, %v1865
          %2460 = vst.msk [vmem:[#allocation6 + $0x20] sm:$0xff] %vm2150, %v1866
          %2461 = vst.msk [vmem:[#allocation6 + $0x28] sm:$0xff] %vm2150, %v1867
          %2462 = vst.msk [vmem:[#allocation6 + $0x30] sm:$0xff] %vm2150, %v1868
          %2463 = vst.msk [vmem:[#allocation6 + $0x38] sm:$0xff] %vm2150, %v1869
          %2464 = vst.msk [vmem:[#allocation6 + $0x40] sm:$0xff] %vm2150, %v1870
          %2465 = vst.msk [vmem:[#allocation6 + $0x48] sm:$0xff] %vm2150, %v1871
          %2466 = vst.msk [vmem:[#allocation6 + $0x50] sm:$0xff] %vm2150, %v1872
          %2467 = vst.msk [vmem:[#allocation6 + $0x58] sm:$0xff] %vm2150, %v1873
          %2468 = vst.msk [vmem:[#allocation6 + $0x60] sm:$0xff] %vm2150, %v1874
          %2469 = vst.msk [vmem:[#allocation6 + $0x68] sm:$0xff] %vm2150, %v1875
          %2470 = vst.msk [vmem:[#allocation6 + $0x70] sm:$0xff] %vm2150, %v1876
          %2471 = vst.msk [vmem:[#allocation6 + $0x78] sm:$0xff] %vm2150, %v1877
          %v2472 = vld [vmem:[#allocation2 + $0x8] sm:$0xff]
          %v2473 = vld [vmem:[#allocation2 + $0x18] sm:$0xff]
          %v2474 = vld [vmem:[#allocation2 + $0x28] sm:$0xff]
          %v2475 = vld [vmem:[#allocation2 + $0x38] sm:$0xff]
          %v2476 = vld [vmem:[#allocation2 + $0x48] sm:$0xff]
          %v2477 = vld [vmem:[#allocation2 + $0x58] sm:$0xff]
          %v2478 = vld [vmem:[#allocation2 + $0x68] sm:$0xff]
          %v2479 = vld [vmem:[#allocation2 + $0x78] sm:$0xff]
          %v2480 = vld [vmem:[#allocation2 + $0x88] sm:$0xff]
          %v2481 = vld [vmem:[#allocation2 + $0x98] sm:$0xff]
          %v2482 = vld [vmem:[#allocation2 + $0xa8] sm:$0xff]
          %v2483 = vld [vmem:[#allocation2 + $0xb8] sm:$0xff]
          %v2484 = vld [vmem:[#allocation2 + $0xc8] sm:$0xff]
          %v2485 = vld [vmem:[#allocation2 + $0xd8] sm:$0xff]
          %v2486 = vld [vmem:[#allocation2 + $0xe8] sm:$0xff]
          %v2487 = vld [vmem:[#allocation2 + $0xf8] sm:$0xff]
          %v2488 = vld [vmem:[#allocation3 + $0x8] sm:$0xff]
          %v2489 = vld [vmem:[#allocation3 + $0x18] sm:$0xff]
          %v2490 = vld [vmem:[#allocation3 + $0x28] sm:$0xff]
          %v2491 = vld [vmem:[#allocation3 + $0x38] sm:$0xff]
          %v2492 = vld [vmem:[#allocation3 + $0x48] sm:$0xff]
          %v2493 = vld [vmem:[#allocation3 + $0x58] sm:$0xff]
          %v2494 = vld [vmem:[#allocation3 + $0x68] sm:$0xff]
          %v2495 = vld [vmem:[#allocation3 + $0x78] sm:$0xff]
          %v2496 = vld [vmem:[#allocation3 + $0x88] sm:$0xff]
          %v2497 = vld [vmem:[#allocation3 + $0x98] sm:$0xff]
          %v2498 = vld [vmem:[#allocation3 + $0xa8] sm:$0xff]
          %v2499 = vld [vmem:[#allocation3 + $0xb8] sm:$0xff]
          %v2500 = vld [vmem:[#allocation3 + $0xc8] sm:$0xff]
          %v2501 = vld [vmem:[#allocation3 + $0xd8] sm:$0xff]
          %v2502 = vld [vmem:[#allocation3 + $0xe8] sm:$0xff]
          %v2503 = vld [vmem:[#allocation3 + $0xf8] sm:$0xff]
          %v2504 = vld [vmem:[#allocation4 + $0x8] sm:$0xff]
          %v2505 = vld [vmem:[#allocation4 + $0x18] sm:$0xff]
          %v2506 = vld [vmem:[#allocation4 + $0x28] sm:$0xff]
          %v2507 = vld [vmem:[#allocation4 + $0x38] sm:$0xff]
          %v2508 = vld [vmem:[#allocation4 + $0x48] sm:$0xff]
          %v2509 = vld [vmem:[#allocation4 + $0x58] sm:$0xff]
          %v2510 = vld [vmem:[#allocation4 + $0x68] sm:$0xff]
          %v2511 = vld [vmem:[#allocation4 + $0x78] sm:$0xff]
          %v2512 = vld [vmem:[#allocation4 + $0x88] sm:$0xff]
          %v2513 = vld [vmem:[#allocation4 + $0x98] sm:$0xff]
          %v2514 = vld [vmem:[#allocation4 + $0xa8] sm:$0xff]
          %v2515 = vld [vmem:[#allocation4 + $0xb8] sm:$0xff]
          %v2516 = vld [vmem:[#allocation4 + $0xc8] sm:$0xff]
          %v2517 = vld [vmem:[#allocation4 + $0xd8] sm:$0xff]
          %v2518 = vld [vmem:[#allocation4 + $0xe8] sm:$0xff]
          %v2519 = vld [vmem:[#allocation4 + $0xf8] sm:$0xff]
          %2520 = vmatprep.subr.mxu0 0.0
          %2521 = vmatpush1.xpose.msra.mxu0 %v2488
          %2522 = vmatprep.subr.mxu0 0.0
          %2523 = vmatpush1.xpose.msra.mxu0 %v2489
          %2524 = vmatprep.subr.mxu0 0.0
          %2525 = vmatpush1.xpose.msra.mxu0 %v2490
          %2526 = vmatprep.subr.mxu0 0.0
          %2527 = vmatpush1.xpose.msra.mxu0 %v2491
          %2528 = vmatprep.subr.mxu0 0.0
          %2529 = vmatpush1.xpose.msra.mxu0 %v2492
          %2530 = vmatprep.subr.mxu0 0.0
          %2531 = vmatpush1.xpose.msra.mxu0 %v2493
          %2532 = vmatprep.subr.mxu0 0.0
          %2533 = vmatpush1.xpose.msra.mxu0 %v2494
          %2534 = vmatprep.subr.mxu0 0.0
          %2535 = vmatpush1.xpose.msra.mxu0 %v2495
          %2536 = vmatprep.subr.mxu0 0.0
          %2537 = vmatpush1.xpose.msra.mxu0 %v2496
          %2538 = vmatprep.subr.mxu0 0.0
          %2539 = vmatpush1.xpose.msra.mxu0 %v2497
          %2540 = vmatprep.subr.mxu0 0.0
          %2541 = vmatpush1.xpose.msra.mxu0 %v2498
          %2542 = vmatprep.subr.mxu0 0.0
          %2543 = vmatpush1.xpose.msra.mxu0 %v2499
          %2544 = vmatprep.subr.mxu0 0.0
          %2545 = vmatpush1.xpose.msra.mxu0 %v2500
          %2546 = vmatprep.subr.mxu0 0.0
          %2547 = vmatpush1.xpose.msra.mxu0 %v2501
          %2548 = vmatprep.subr.mxu0 0.0
          %2549 = vmatpush1.xpose.msra.mxu0 %v2502
          %2550 = vmatprep.subr.mxu0 0.0
          %2551 = vmatpush1.xpose.msra.mxu0 %v2503
          %2552 = vmatprep.subr.mxu0 0.0
          %2553 = vmatpush1.xpose.msra.mxu0 0.0
          %2554 = vmatprep.subr.mxu0 0.0
          %2555 = vmatpush1.xpose.msra.mxu0 0.0
          %2556 = vmatprep.subr.mxu0 0.0
          %2557 = vmatpush1.xpose.msra.mxu0 0.0
          %2558 = vmatprep.subr.mxu0 0.0
          %2559 = vmatpush1.xpose.msra.mxu0 0.0
          %2560 = vmatprep.subr.mxu0 0.0
          %2561 = vmatpush1.xpose.msra.mxu0 0.0
          %2562 = vmatprep.subr.mxu0 0.0
          %2563 = vmatpush1.xpose.msra.mxu0 0.0
          %2564 = vmatprep.subr.mxu0 0.0
          %2565 = vmatpush1.xpose.msra.mxu0 0.0
          %2566 = vmatprep.subr.mxu0 0.0
          %2567 = vmatpush1.xpose.msra.mxu0 0.0
          %2568 = vmatprep.subr.mxu0 0.0
          %2569 = vmatpush1.xpose.msra.mxu0 0.0
          %2570 = vmatprep.subr.mxu0 0.0
          %2571 = vmatpush1.xpose.msra.mxu0 0.0
          %2572 = vmatprep.subr.mxu0 0.0
          %2573 = vmatpush1.xpose.msra.mxu0 0.0
          %2574 = vmatprep.subr.mxu0 0.0
          %2575 = vmatpush1.xpose.msra.mxu0 0.0
          %2576 = vmatprep.subr.mxu0 0.0
          %2577 = vmatpush1.xpose.msra.mxu0 0.0
          %2578 = vmatprep.subr.mxu0 0.0
          %2579 = vmatpush1.xpose.msra.mxu0 0.0
          %2580 = vmatprep.subr.mxu0 0.0
          %2581 = vmatpush1.xpose.msra.mxu0 0.0
          %2582 = vmatprep.subr.mxu0 0.0
          %2583 = vmatpush1.xpose.msra.mxu0 0.0
          %2584 = vmatprep.mubr.f32.mxu0 0.0
          %2585 = vmatmul.mubr.f32.gmra.mrb[0].mxu0 %v2472
          %v2586 = vpop.f32.mrb[0].mxu0
          %v2587 = vadd.f32 %v1589, %v2586
          %v2588 = vpop.f32.mrb[0].mxu0
          %2589 = vmatprep.mubr.f32.mxu0 0.0
          %2590 = vmatmul.mubr.f32.gmra.mrb[0].mxu0 %v2473
          %v2591 = vpop.f32.mrb[0].mxu0
          %v2592 = vadd.f32 %v1590, %v2591
          %v2593 = vpop.f32.mrb[0].mxu0
          %2594 = vmatprep.mubr.f32.mxu0 0.0
          %2595 = vmatmul.mubr.f32.gmra.mrb[0].mxu0 %v2474
          %v2596 = vpop.f32.mrb[0].mxu0
          %v2597 = vadd.f32 %v1591, %v2596
          %v2598 = vpop.f32.mrb[0].mxu0
          %2599 = vmatprep.mubr.f32.mxu0 0.0
          %2600 = vmatmul.mubr.f32.gmra.mrb[0].mxu0 %v2475
          %v2601 = vpop.f32.mrb[0].mxu0
          %v2602 = vadd.f32 %v1592, %v2601
          %v2603 = vpop.f32.mrb[0].mxu0
          %2604 = vmatprep.mubr.f32.mxu0 0.0
          %2605 = vmatmul.mubr.f32.gmra.mrb[0].mxu0 %v2476
          %v2606 = vpop.f32.mrb[0].mxu0
          %v2607 = vadd.f32 %v1593, %v2606
          %v2608 = vpop.f32.mrb[0].mxu0
          %2609 = vmatprep.mubr.f32.mxu0 0.0
          %2610 = vmatmul.mubr.f32.gmra.mrb[0].mxu0 %v2477
          %v2611 = vpop.f32.mrb[0].mxu0
          %v2612 = vadd.f32 %v1594, %v2611
          %v2613 = vpop.f32.mrb[0].mxu0
          %2614 = vmatprep.mubr.f32.mxu0 0.0
          %2615 = vmatmul.mubr.f32.gmra.mrb[0].mxu0 %v2478
          %v2616 = vpop.f32.mrb[0].mxu0
          %v2617 = vadd.f32 %v1595, %v2616
          %v2618 = vpop.f32.mrb[0].mxu0
          %2619 = vmatprep.mubr.f32.mxu0 0.0
          %2620 = vmatmul.mubr.f32.gmra.mrb[0].mxu0 %v2479
          %v2621 = vpop.f32.mrb[0].mxu0
          %v2622 = vadd.f32 %v1596, %v2621
          %v2623 = vpop.f32.mrb[0].mxu0
          %2624 = vmatprep.mubr.f32.mxu0 0.0
          %2625 = vmatmul.mubr.f32.gmra.mrb[0].mxu0 %v2480
          %v2626 = vpop.f32.mrb[0].mxu0
          %v2627 = vadd.f32 %v1597, %v2626
          %v2628 = vpop.f32.mrb[0].mxu0
          %2629 = vmatprep.mubr.f32.mxu0 0.0
          %2630 = vmatmul.mubr.f32.gmra.mrb[0].mxu0 %v2481
          %v2631 = vpop.f32.mrb[0].mxu0
          %v2632 = vadd.f32 %v1598, %v2631
          %v2633 = vpop.f32.mrb[0].mxu0
          %2634 = vmatprep.mubr.f32.mxu0 0.0
          %2635 = vmatmul.mubr.f32.gmra.mrb[0].mxu0 %v2482
          %v2636 = vpop.f32.mrb[0].mxu0
          %v2637 = vadd.f32 %v1599, %v2636
          %v2638 = vpop.f32.mrb[0].mxu0
          %2639 = vmatprep.mubr.f32.mxu0 0.0
          %2640 = vmatmul.mubr.f32.gmra.mrb[0].mxu0 %v2483
          %v2641 = vpop.f32.mrb[0].mxu0
          %v2642 = vadd.f32 %v1600, %v2641
          %v2643 = vpop.f32.mrb[0].mxu0
          %2644 = vmatprep.mubr.f32.mxu0 0.0
          %2645 = vmatmul.mubr.f32.gmra.mrb[0].mxu0 %v2484
          %v2646 = vpop.f32.mrb[0].mxu0
          %v2647 = vadd.f32 %v1601, %v2646
          %v2648 = vpop.f32.mrb[0].mxu0
          %2649 = vmatprep.mubr.f32.mxu0 0.0
          %2650 = vmatmul.mubr.f32.gmra.mrb[0].mxu0 %v2485
          %v2651 = vpop.f32.mrb[0].mxu0
          %v2652 = vadd.f32 %v1602, %v2651
          %v2653 = vpop.f32.mrb[0].mxu0
          %2654 = vmatprep.mubr.f32.mxu0 0.0
          %2655 = vmatmul.mubr.f32.gmra.mrb[0].mxu0 %v2486
          %v2656 = vpop.f32.mrb[0].mxu0
          %v2657 = vadd.f32 %v1603, %v2656
          %v2658 = vpop.f32.mrb[0].mxu0
          %2659 = vmatprep.mubr.f32.mxu0 0.0
          %2660 = vmatmul.mubr.f32.gmra.mrb[0].mxu0 %v2487
          %v2661 = vpop.f32.mrb[0].mxu0
          %v2662 = vadd.f32 %v1604, %v2661
          %v2663 = vpop.f32.mrb[0].mxu0
          %2664 = vdwg.mxu0
          %s2665 = scalar_lea.vmem [#allocation6], 128
          %v2666 = vld [vmem:[%s2665] sm:$0xff]
          %v2667 = vld [vmem:[%s2665 + $0x8] sm:$0xff]
          %v2668 = vld [vmem:[%s2665 + $0x10] sm:$0xff]
          %v2669 = vld [vmem:[%s2665 + $0x18] sm:$0xff]
          %v2670 = vld [vmem:[%s2665 + $0x20] sm:$0xff]
          %v2671 = vld [vmem:[%s2665 + $0x28] sm:$0xff]
          %v2672 = vld [vmem:[%s2665 + $0x30] sm:$0xff]
          %v2673 = vld [vmem:[%s2665 + $0x38] sm:$0xff]
          %v2674 = vld [vmem:[%s2665 + $0x40] sm:$0xff]
          %v2675 = vld [vmem:[%s2665 + $0x48] sm:$0xff]
          %v2676 = vld [vmem:[%s2665 + $0x50] sm:$0xff]
          %v2677 = vld [vmem:[%s2665 + $0x58] sm:$0xff]
          %v2678 = vld [vmem:[%s2665 + $0x60] sm:$0xff]
          %v2679 = vld [vmem:[%s2665 + $0x68] sm:$0xff]
          %v2680 = vld [vmem:[%s2665 + $0x70] sm:$0xff]
          %v2681 = vld [vmem:[%s2665 + $0x78] sm:$0xff]
          %2682 = vmax.xlane.f32.xlu0 %v2587
          %v2683 = vpop.xlane.xlu0 %2682
          %2684 = vmax.xlane.f32.xlu0 %v2592
          %v2685 = vpop.xlane.xlu0 %2684
          %2686 = vmax.xlane.f32.xlu0 %v2597
          %v2687 = vpop.xlane.xlu0 %2686
          %2688 = vmax.xlane.f32.xlu0 %v2602
          %v2689 = vpop.xlane.xlu0 %2688
          %2690 = vmax.xlane.f32.xlu0 %v2607
          %v2691 = vpop.xlane.xlu0 %2690
          %2692 = vmax.xlane.f32.xlu0 %v2612
          %v2693 = vpop.xlane.xlu0 %2692
          %2694 = vmax.xlane.f32.xlu0 %v2617
          %v2695 = vpop.xlane.xlu0 %2694
          %2696 = vmax.xlane.f32.xlu0 %v2622
          %v2697 = vpop.xlane.xlu0 %2696
          %2698 = vmax.xlane.f32.xlu0 %v2627
          %v2699 = vpop.xlane.xlu0 %2698
          %2700 = vmax.xlane.f32.xlu0 %v2632
          %v2701 = vpop.xlane.xlu0 %2700
          %2702 = vmax.xlane.f32.xlu0 %v2637
          %v2703 = vpop.xlane.xlu0 %2702
          %2704 = vmax.xlane.f32.xlu0 %v2642
          %v2705 = vpop.xlane.xlu0 %2704
          %2706 = vmax.xlane.f32.xlu0 %v2647
          %v2707 = vpop.xlane.xlu0 %2706
          %2708 = vmax.xlane.f32.xlu0 %v2652
          %v2709 = vpop.xlane.xlu0 %2708
          %2710 = vmax.xlane.f32.xlu0 %v2657
          %v2711 = vpop.xlane.xlu0 %2710
          %2712 = vmax.xlane.f32.xlu0 %v2662
          %v2713 = vpop.xlane.xlu0 %2712
          %v2714 = vmax.f32 %v2666, %v2683
          %v2715 = vmax.f32 %v2667, %v2685
          %v2716 = vmax.f32 %v2668, %v2687
          %v2717 = vmax.f32 %v2669, %v2689
          %v2718 = vmax.f32 %v2670, %v2691
          %v2719 = vmax.f32 %v2671, %v2693
          %v2720 = vmax.f32 %v2672, %v2695
          %v2721 = vmax.f32 %v2673, %v2697
          %v2722 = vmax.f32 %v2674, %v2699
          %v2723 = vmax.f32 %v2675, %v2701
          %v2724 = vmax.f32 %v2676, %v2703
          %v2725 = vmax.f32 %v2677, %v2705
          %v2726 = vmax.f32 %v2678, %v2707
          %v2727 = vmax.f32 %v2679, %v2709
          %v2728 = vmax.f32 %v2680, %v2711
          %v2729 = vmax.f32 %v2681, %v2713
          %v2730 = vsub.f32 %v2666, %v2714
          %v2731 = vsub.f32 %v2667, %v2715
          %v2732 = vsub.f32 %v2668, %v2716
          %v2733 = vsub.f32 %v2669, %v2717
          %v2734 = vsub.f32 %v2670, %v2718
          %v2735 = vsub.f32 %v2671, %v2719
          %v2736 = vsub.f32 %v2672, %v2720
          %v2737 = vsub.f32 %v2673, %v2721
          %v2738 = vsub.f32 %v2674, %v2722
          %v2739 = vsub.f32 %v2675, %v2723
          %v2740 = vsub.f32 %v2676, %v2724
          %v2741 = vsub.f32 %v2677, %v2725
          %v2742 = vsub.f32 %v2678, %v2726
          %v2743 = vsub.f32 %v2679, %v2727
          %v2744 = vsub.f32 %v2680, %v2728
          %v2745 = vsub.f32 %v2681, %v2729
          %v2746 = vmul.f32 %v2730, 1.442695
          %v2747 = vpow.pop %v2746
          %v2748 = vmul.f32 %v2731, 1.442695
          %v2749 = vpow.pop %v2748
          %v2750 = vmul.f32 %v2732, 1.442695
          %v2751 = vpow.pop %v2750
          %v2752 = vmul.f32 %v2733, 1.442695
          %v2753 = vpow.pop %v2752
          %v2754 = vmul.f32 %v2734, 1.442695
          %v2755 = vpow.pop %v2754
          %v2756 = vmul.f32 %v2735, 1.442695
          %v2757 = vpow.pop %v2756
          %v2758 = vmul.f32 %v2736, 1.442695
          %v2759 = vpow.pop %v2758
          %v2760 = vmul.f32 %v2737, 1.442695
          %v2761 = vpow.pop %v2760
          %v2762 = vmul.f32 %v2738, 1.442695
          %v2763 = vpow.pop %v2762
          %v2764 = vmul.f32 %v2739, 1.442695
          %v2765 = vpow.pop %v2764
          %v2766 = vmul.f32 %v2740, 1.442695
          %v2767 = vpow.pop %v2766
          %v2768 = vmul.f32 %v2741, 1.442695
          %v2769 = vpow.pop %v2768
          %v2770 = vmul.f32 %v2742, 1.442695
          %v2771 = vpow.pop %v2770
          %v2772 = vmul.f32 %v2743, 1.442695
          %v2773 = vpow.pop %v2772
          %v2774 = vmul.f32 %v2744, 1.442695
          %v2775 = vpow.pop %v2774
          %v2776 = vmul.f32 %v2745, 1.442695
          %v2777 = vpow.pop %v2776
          %2779 = vset.pattern.permute.xlu0 0
          %2780 = vperm.xlu0 %2779, %v2714
          %v2781 = vpop.permute.xlu0 %2780
          %2784 = vset.pattern.permute.xlu0 0
          %2785 = vperm.xlu0 %2784, %v2715
          %v2786 = vpop.permute.xlu0 %2785
          %2789 = vset.pattern.permute.xlu0 0
          %2790 = vperm.xlu0 %2789, %v2716
          %v2791 = vpop.permute.xlu0 %2790
          %2794 = vset.pattern.permute.xlu0 0
          %2795 = vperm.xlu0 %2794, %v2717
          %v2796 = vpop.permute.xlu0 %2795
          %2799 = vset.pattern.permute.xlu0 0
          %2800 = vperm.xlu0 %2799, %v2718
          %v2801 = vpop.permute.xlu0 %2800
          %2804 = vset.pattern.permute.xlu0 0
          %2805 = vperm.xlu0 %2804, %v2719
          %v2806 = vpop.permute.xlu0 %2805
          %2809 = vset.pattern.permute.xlu0 0
          %2810 = vperm.xlu0 %2809, %v2720
          %v2811 = vpop.permute.xlu0 %2810
          %2814 = vset.pattern.permute.xlu0 0
          %2815 = vperm.xlu0 %2814, %v2721
          %v2816 = vpop.permute.xlu0 %2815
          %2819 = vset.pattern.permute.xlu0 0
          %2820 = vperm.xlu0 %2819, %v2722
          %v2821 = vpop.permute.xlu0 %2820
          %2824 = vset.pattern.permute.xlu0 0
          %2825 = vperm.xlu0 %2824, %v2723
          %v2826 = vpop.permute.xlu0 %2825
          %2829 = vset.pattern.permute.xlu0 0
          %2830 = vperm.xlu0 %2829, %v2724
          %v2831 = vpop.permute.xlu0 %2830
          %2834 = vset.pattern.permute.xlu0 0
          %2835 = vperm.xlu0 %2834, %v2725
          %v2836 = vpop.permute.xlu0 %2835
          %2839 = vset.pattern.permute.xlu0 0
          %2840 = vperm.xlu0 %2839, %v2726
          %v2841 = vpop.permute.xlu0 %2840
          %2844 = vset.pattern.permute.xlu0 0
          %2845 = vperm.xlu0 %2844, %v2727
          %v2846 = vpop.permute.xlu0 %2845
          %2849 = vset.pattern.permute.xlu0 0
          %2850 = vperm.xlu0 %2849, %v2728
          %v2851 = vpop.permute.xlu0 %2850
          %2854 = vset.pattern.permute.xlu0 0
          %2855 = vperm.xlu0 %2854, %v2729
          %v2856 = vpop.permute.xlu0 %2855
          %v2858 = vsub.f32 %v2587, %v2781
          %v2859 = vsub.f32 %v2592, %v2786
          %v2860 = vsub.f32 %v2597, %v2791
          %v2861 = vsub.f32 %v2602, %v2796
          %v2862 = vsub.f32 %v2607, %v2801
          %v2863 = vsub.f32 %v2612, %v2806
          %v2864 = vsub.f32 %v2617, %v2811
          %v2865 = vsub.f32 %v2622, %v2816
          %v2866 = vsub.f32 %v2627, %v2821
          %v2867 = vsub.f32 %v2632, %v2826
          %v2868 = vsub.f32 %v2637, %v2831
          %v2869 = vsub.f32 %v2642, %v2836
          %v2870 = vsub.f32 %v2647, %v2841
          %v2871 = vsub.f32 %v2652, %v2846
          %v2872 = vsub.f32 %v2657, %v2851
          %v2873 = vsub.f32 %v2662, %v2856
          %v2874 = vmul.f32 %v2858, 1.442695
          %v2875 = vpow.pop %v2874
          %v2876 = vmul.f32 %v2859, 1.442695
          %v2877 = vpow.pop %v2876
          %v2878 = vmul.f32 %v2860, 1.442695
          %v2879 = vpow.pop %v2878
          %v2880 = vmul.f32 %v2861, 1.442695
          %v2881 = vpow.pop %v2880
          %v2882 = vmul.f32 %v2862, 1.442695
          %v2883 = vpow.pop %v2882
          %v2884 = vmul.f32 %v2863, 1.442695
          %v2885 = vpow.pop %v2884
          %v2886 = vmul.f32 %v2864, 1.442695
          %v2887 = vpow.pop %v2886
          %v2888 = vmul.f32 %v2865, 1.442695
          %v2889 = vpow.pop %v2888
          %v2890 = vmul.f32 %v2866, 1.442695
          %v2891 = vpow.pop %v2890
          %v2892 = vmul.f32 %v2867, 1.442695
          %v2893 = vpow.pop %v2892
          %v2894 = vmul.f32 %v2868, 1.442695
          %v2895 = vpow.pop %v2894
          %v2896 = vmul.f32 %v2869, 1.442695
          %v2897 = vpow.pop %v2896
          %v2898 = vmul.f32 %v2870, 1.442695
          %v2899 = vpow.pop %v2898
          %v2900 = vmul.f32 %v2871, 1.442695
          %v2901 = vpow.pop %v2900
          %v2902 = vmul.f32 %v2872, 1.442695
          %v2903 = vpow.pop %v2902
          %v2904 = vmul.f32 %v2873, 1.442695
          %v2905 = vpow.pop %v2904
          %v2906 = vsel %vm1605, %v2875, 0.0
          %v2907 = vsel %vm1606, %v2877, 0.0
          %v2908 = vsel %vm1607, %v2879, 0.0
          %v2909 = vsel %vm1608, %v2881, 0.0
          %v2910 = vsel %vm1609, %v2883, 0.0
          %v2911 = vsel %vm1610, %v2885, 0.0
          %v2912 = vsel %vm1611, %v2887, 0.0
          %v2913 = vsel %vm1612, %v2889, 0.0
          %v2914 = vsel %vm1613, %v2891, 0.0
          %v2915 = vsel %vm1614, %v2893, 0.0
          %v2916 = vsel %vm1615, %v2895, 0.0
          %v2917 = vsel %vm1616, %v2897, 0.0
          %v2918 = vsel %vm1617, %v2899, 0.0
          %v2919 = vsel %vm1618, %v2901, 0.0
          %v2920 = vsel %vm1619, %v2903, 0.0
          %v2921 = vsel %vm1620, %v2905, 0.0
          %s2922 = scalar_lea.vmem [#allocation7], 128
          %v2923 = vld [vmem:[%s2922] sm:$0xff]
          %v2924 = vld [vmem:[%s2922 + $0x8] sm:$0xff]
          %v2925 = vld [vmem:[%s2922 + $0x10] sm:$0xff]
          %v2926 = vld [vmem:[%s2922 + $0x18] sm:$0xff]
          %v2927 = vld [vmem:[%s2922 + $0x20] sm:$0xff]
          %v2928 = vld [vmem:[%s2922 + $0x28] sm:$0xff]
          %v2929 = vld [vmem:[%s2922 + $0x30] sm:$0xff]
          %v2930 = vld [vmem:[%s2922 + $0x38] sm:$0xff]
          %v2931 = vld [vmem:[%s2922 + $0x40] sm:$0xff]
          %v2932 = vld [vmem:[%s2922 + $0x48] sm:$0xff]
          %v2933 = vld [vmem:[%s2922 + $0x50] sm:$0xff]
          %v2934 = vld [vmem:[%s2922 + $0x58] sm:$0xff]
          %v2935 = vld [vmem:[%s2922 + $0x60] sm:$0xff]
          %v2936 = vld [vmem:[%s2922 + $0x68] sm:$0xff]
          %v2937 = vld [vmem:[%s2922 + $0x70] sm:$0xff]
          %v2938 = vld [vmem:[%s2922 + $0x78] sm:$0xff]
          %v2939 = vmul.f32 %v2747, %v2923
          %v2940 = vmul.f32 %v2749, %v2924
          %v2941 = vmul.f32 %v2751, %v2925
          %v2942 = vmul.f32 %v2753, %v2926
          %v2943 = vmul.f32 %v2755, %v2927
          %v2944 = vmul.f32 %v2757, %v2928
          %v2945 = vmul.f32 %v2759, %v2929
          %v2946 = vmul.f32 %v2761, %v2930
          %v2947 = vmul.f32 %v2763, %v2931
          %v2948 = vmul.f32 %v2765, %v2932
          %v2949 = vmul.f32 %v2767, %v2933
          %v2950 = vmul.f32 %v2769, %v2934
          %v2951 = vmul.f32 %v2771, %v2935
          %v2952 = vmul.f32 %v2773, %v2936
          %v2953 = vmul.f32 %v2775, %v2937
          %v2954 = vmul.f32 %v2777, %v2938
          %2955 = vadd.xlane.f32.xlu0 %v2906
          %v2956 = vpop.xlane.xlu0 %2955
          %2957 = vadd.xlane.f32.xlu0 %v2907
          %v2958 = vpop.xlane.xlu0 %2957
          %2959 = vadd.xlane.f32.xlu0 %v2908
          %v2960 = vpop.xlane.xlu0 %2959
          %2961 = vadd.xlane.f32.xlu0 %v2909
          %v2962 = vpop.xlane.xlu0 %2961
          %2963 = vadd.xlane.f32.xlu0 %v2910
          %v2964 = vpop.xlane.xlu0 %2963
          %2965 = vadd.xlane.f32.xlu0 %v2911
          %v2966 = vpop.xlane.xlu0 %2965
          %2967 = vadd.xlane.f32.xlu0 %v2912
          %v2968 = vpop.xlane.xlu0 %2967
          %2969 = vadd.xlane.f32.xlu0 %v2913
          %v2970 = vpop.xlane.xlu0 %2969
          %2971 = vadd.xlane.f32.xlu0 %v2914
          %v2972 = vpop.xlane.xlu0 %2971
          %2973 = vadd.xlane.f32.xlu0 %v2915
          %v2974 = vpop.xlane.xlu0 %2973
          %2975 = vadd.xlane.f32.xlu0 %v2916
          %v2976 = vpop.xlane.xlu0 %2975
          %2977 = vadd.xlane.f32.xlu0 %v2917
          %v2978 = vpop.xlane.xlu0 %2977
          %2979 = vadd.xlane.f32.xlu0 %v2918
          %v2980 = vpop.xlane.xlu0 %2979
          %2981 = vadd.xlane.f32.xlu0 %v2919
          %v2982 = vpop.xlane.xlu0 %2981
          %2983 = vadd.xlane.f32.xlu0 %v2920
          %v2984 = vpop.xlane.xlu0 %2983
          %2985 = vadd.xlane.f32.xlu0 %v2921
          %v2986 = vpop.xlane.xlu0 %2985
          %v2987 = vadd.f32 %v2939, %v2956
          %v2988 = vadd.f32 %v2940, %v2958
          %v2989 = vadd.f32 %v2941, %v2960
          %v2990 = vadd.f32 %v2942, %v2962
          %v2991 = vadd.f32 %v2943, %v2964
          %v2992 = vadd.f32 %v2944, %v2966
          %v2993 = vadd.f32 %v2945, %v2968
          %v2994 = vadd.f32 %v2946, %v2970
          %v2995 = vadd.f32 %v2947, %v2972
          %v2996 = vadd.f32 %v2948, %v2974
          %v2997 = vadd.f32 %v2949, %v2976
          %v2998 = vadd.f32 %v2950, %v2978
          %v2999 = vadd.f32 %v2951, %v2980
          %v3000 = vadd.f32 %v2952, %v2982
          %v3001 = vadd.f32 %v2953, %v2984
          %v3002 = vadd.f32 %v2954, %v2986
          %3003 = vst.msk [vmem:[%s2922] sm:$0xff] %vm2150, %v2987
          %3004 = vst.msk [vmem:[%s2922 + $0x8] sm:$0xff] %vm2150, %v2988
          %3005 = vst.msk [vmem:[%s2922 + $0x10] sm:$0xff] %vm2150, %v2989
          %3006 = vst.msk [vmem:[%s2922 + $0x18] sm:$0xff] %vm2150, %v2990
          %3007 = vst.msk [vmem:[%s2922 + $0x20] sm:$0xff] %vm2150, %v2991
          %3008 = vst.msk [vmem:[%s2922 + $0x28] sm:$0xff] %vm2150, %v2992
          %3009 = vst.msk [vmem:[%s2922 + $0x30] sm:$0xff] %vm2150, %v2993
          %3010 = vst.msk [vmem:[%s2922 + $0x38] sm:$0xff] %vm2150, %v2994
          %3011 = vst.msk [vmem:[%s2922 + $0x40] sm:$0xff] %vm2150, %v2995
          %3012 = vst.msk [vmem:[%s2922 + $0x48] sm:$0xff] %vm2150, %v2996
          %3013 = vst.msk [vmem:[%s2922 + $0x50] sm:$0xff] %vm2150, %v2997
          %3014 = vst.msk [vmem:[%s2922 + $0x58] sm:$0xff] %vm2150, %v2998
          %3015 = vst.msk [vmem:[%s2922 + $0x60] sm:$0xff] %vm2150, %v2999
          %3016 = vst.msk [vmem:[%s2922 + $0x68] sm:$0xff] %vm2150, %v3000
          %3017 = vst.msk [vmem:[%s2922 + $0x70] sm:$0xff] %vm2150, %v3001
          %3018 = vst.msk [vmem:[%s2922 + $0x78] sm:$0xff] %vm2150, %v3002
          %s3019 = scalar_lea.vmem [#allocation8], 128
          %v3020 = vld [vmem:[%s3019] sm:$0xff]
          %v3021 = vld [vmem:[%s3019 + $0x8] sm:$0xff]
          %v3022 = vld [vmem:[%s3019 + $0x10] sm:$0xff]
          %v3023 = vld [vmem:[%s3019 + $0x18] sm:$0xff]
          %v3024 = vld [vmem:[%s3019 + $0x20] sm:$0xff]
          %v3025 = vld [vmem:[%s3019 + $0x28] sm:$0xff]
          %v3026 = vld [vmem:[%s3019 + $0x30] sm:$0xff]
          %v3027 = vld [vmem:[%s3019 + $0x38] sm:$0xff]
          %v3028 = vld [vmem:[%s3019 + $0x40] sm:$0xff]
          %v3029 = vld [vmem:[%s3019 + $0x48] sm:$0xff]
          %v3030 = vld [vmem:[%s3019 + $0x50] sm:$0xff]
          %v3031 = vld [vmem:[%s3019 + $0x58] sm:$0xff]
          %v3032 = vld [vmem:[%s3019 + $0x60] sm:$0xff]
          %v3033 = vld [vmem:[%s3019 + $0x68] sm:$0xff]
          %v3034 = vld [vmem:[%s3019 + $0x70] sm:$0xff]
          %v3035 = vld [vmem:[%s3019 + $0x78] sm:$0xff]
          %3037 = vset.pattern.permute.xlu0 0
          %3038 = vperm.xlu0 %3037, %v2747
          %v3039 = vpop.permute.xlu0 %3038
          %3042 = vset.pattern.permute.xlu0 0
          %3043 = vperm.xlu0 %3042, %v2749
          %v3044 = vpop.permute.xlu0 %3043
          %3047 = vset.pattern.permute.xlu0 0
          %3048 = vperm.xlu0 %3047, %v2751
          %v3049 = vpop.permute.xlu0 %3048
          %3052 = vset.pattern.permute.xlu0 0
          %3053 = vperm.xlu0 %3052, %v2753
          %v3054 = vpop.permute.xlu0 %3053
          %3057 = vset.pattern.permute.xlu0 0
          %3058 = vperm.xlu0 %3057, %v2755
          %v3059 = vpop.permute.xlu0 %3058
          %3062 = vset.pattern.permute.xlu0 0
          %3063 = vperm.xlu0 %3062, %v2757
          %v3064 = vpop.permute.xlu0 %3063
          %3067 = vset.pattern.permute.xlu0 0
          %3068 = vperm.xlu0 %3067, %v2759
          %v3069 = vpop.permute.xlu0 %3068
          %3072 = vset.pattern.permute.xlu0 0
          %3073 = vperm.xlu0 %3072, %v2761
          %v3074 = vpop.permute.xlu0 %3073
          %3077 = vset.pattern.permute.xlu0 0
          %3078 = vperm.xlu0 %3077, %v2763
          %v3079 = vpop.permute.xlu0 %3078
          %3082 = vset.pattern.permute.xlu0 0
          %3083 = vperm.xlu0 %3082, %v2765
          %v3084 = vpop.permute.xlu0 %3083
          %3087 = vset.pattern.permute.xlu0 0
          %3088 = vperm.xlu0 %3087, %v2767
          %v3089 = vpop.permute.xlu0 %3088
          %3092 = vset.pattern.permute.xlu0 0
          %3093 = vperm.xlu0 %3092, %v2769
          %v3094 = vpop.permute.xlu0 %3093
          %3097 = vset.pattern.permute.xlu0 0
          %3098 = vperm.xlu0 %3097, %v2771
          %v3099 = vpop.permute.xlu0 %3098
          %3102 = vset.pattern.permute.xlu0 0
          %3103 = vperm.xlu0 %3102, %v2773
          %v3104 = vpop.permute.xlu0 %3103
          %3107 = vset.pattern.permute.xlu0 0
          %3108 = vperm.xlu0 %3107, %v2775
          %v3109 = vpop.permute.xlu0 %3108
          %3112 = vset.pattern.permute.xlu0 0
          %3113 = vperm.xlu0 %3112, %v2777
          %v3114 = vpop.permute.xlu0 %3113
          %v3116 = vmul.f32 %v3039, %v3020
          %v3117 = vmul.f32 %v3044, %v3021
          %v3118 = vmul.f32 %v3049, %v3022
          %v3119 = vmul.f32 %v3054, %v3023
          %v3120 = vmul.f32 %v3059, %v3024
          %v3121 = vmul.f32 %v3064, %v3025
          %v3122 = vmul.f32 %v3069, %v3026
          %v3123 = vmul.f32 %v3074, %v3027
          %v3124 = vmul.f32 %v3079, %v3028
          %v3125 = vmul.f32 %v3084, %v3029
          %v3126 = vmul.f32 %v3089, %v3030
          %v3127 = vmul.f32 %v3094, %v3031
          %v3128 = vmul.f32 %v3099, %v3032
          %v3129 = vmul.f32 %v3104, %v3033
          %v3130 = vmul.f32 %v3109, %v3034
          %v3131 = vmul.f32 %v3114, %v3035
          %3132 = vmatprep.subr.mxu0 0.0
          %3133 = vmatpush1.msra.mxu0 %v2504
          %3134 = vmatprep.subr.mxu0 0.0
          %3135 = vmatpush1.msra.mxu0 %v2505
          %3136 = vmatprep.subr.mxu0 0.0
          %3137 = vmatpush1.msra.mxu0 %v2506
          %3138 = vmatprep.subr.mxu0 0.0
          %3139 = vmatpush1.msra.mxu0 %v2507
          %3140 = vmatprep.subr.mxu0 0.0
          %3141 = vmatpush1.msra.mxu0 %v2508
          %3142 = vmatprep.subr.mxu0 0.0
          %3143 = vmatpush1.msra.mxu0 %v2509
          %3144 = vmatprep.subr.mxu0 0.0
          %3145 = vmatpush1.msra.mxu0 %v2510
          %3146 = vmatprep.subr.mxu0 0.0
          %3147 = vmatpush1.msra.mxu0 %v2511
          %3148 = vmatprep.subr.mxu0 0.0
          %3149 = vmatpush1.msra.mxu0 %v2512
          %3150 = vmatprep.subr.mxu0 0.0
          %3151 = vmatpush1.msra.mxu0 %v2513
          %3152 = vmatprep.subr.mxu0 0.0
          %3153 = vmatpush1.msra.mxu0 %v2514
          %3154 = vmatprep.subr.mxu0 0.0
          %3155 = vmatpush1.msra.mxu0 %v2515
          %3156 = vmatprep.subr.mxu0 0.0
          %3157 = vmatpush1.msra.mxu0 %v2516
          %3158 = vmatprep.subr.mxu0 0.0
          %3159 = vmatpush1.msra.mxu0 %v2517
          %3160 = vmatprep.subr.mxu0 0.0
          %3161 = vmatpush1.msra.mxu0 %v2518
          %3162 = vmatprep.subr.mxu0 0.0
          %3163 = vmatpush1.msra.mxu0 %v2519
          %3164 = vmatprep.subr.mxu0 0.0
          %3165 = vmatpush1.msra.mxu0 0.0
          %3166 = vmatprep.subr.mxu0 0.0
          %3167 = vmatpush1.msra.mxu0 0.0
          %3168 = vmatprep.subr.mxu0 0.0
          %3169 = vmatpush1.msra.mxu0 0.0
          %3170 = vmatprep.subr.mxu0 0.0
          %3171 = vmatpush1.msra.mxu0 0.0
          %3172 = vmatprep.subr.mxu0 0.0
          %3173 = vmatpush1.msra.mxu0 0.0
          %3174 = vmatprep.subr.mxu0 0.0
          %3175 = vmatpush1.msra.mxu0 0.0
          %3176 = vmatprep.subr.mxu0 0.0
          %3177 = vmatpush1.msra.mxu0 0.0
          %3178 = vmatprep.subr.mxu0 0.0
          %3179 = vmatpush1.msra.mxu0 0.0
          %3180 = vmatprep.subr.mxu0 0.0
          %3181 = vmatpush1.msra.mxu0 0.0
          %3182 = vmatprep.subr.mxu0 0.0
          %3183 = vmatpush1.msra.mxu0 0.0
          %3184 = vmatprep.subr.mxu0 0.0
          %3185 = vmatpush1.msra.mxu0 0.0
          %3186 = vmatprep.subr.mxu0 0.0
          %3187 = vmatpush1.msra.mxu0 0.0
          %3188 = vmatprep.subr.mxu0 0.0
          %3189 = vmatpush1.msra.mxu0 0.0
          %3190 = vmatprep.subr.mxu0 0.0
          %3191 = vmatpush1.msra.mxu0 0.0
          %3192 = vmatprep.subr.mxu0 0.0
          %3193 = vmatpush1.msra.mxu0 0.0
          %3194 = vmatprep.subr.mxu0 0.0
          %3195 = vmatpush1.msra.mxu0 0.0
          %3196 = vmatprep.mubr.f32.mxu0 0.0
          %3197 = vmatmul.mubr.f32.gmra.mrb[0].mxu0 %v2906
          %v3198 = vpop.f32.mrb[0].mxu0
          %v3199 = vadd.f32 0.0, %v3198
          %v3200 = vpop.f32.mrb[0].mxu0
          %3201 = vmatprep.mubr.f32.mxu0 0.0
          %3202 = vmatmul.mubr.f32.gmra.mrb[0].mxu0 %v2907
          %v3203 = vpop.f32.mrb[0].mxu0
          %v3204 = vadd.f32 0.0, %v3203
          %v3205 = vpop.f32.mrb[0].mxu0
          %3206 = vmatprep.mubr.f32.mxu0 0.0
          %3207 = vmatmul.mubr.f32.gmra.mrb[0].mxu0 %v2908
          %v3208 = vpop.f32.mrb[0].mxu0
          %v3209 = vadd.f32 0.0, %v3208
          %v3210 = vpop.f32.mrb[0].mxu0
          %3211 = vmatprep.mubr.f32.mxu0 0.0
          %3212 = vmatmul.mubr.f32.gmra.mrb[0].mxu0 %v2909
          %v3213 = vpop.f32.mrb[0].mxu0
          %v3214 = vadd.f32 0.0, %v3213
          %v3215 = vpop.f32.mrb[0].mxu0
          %3216 = vmatprep.mubr.f32.mxu0 0.0
          %3217 = vmatmul.mubr.f32.gmra.mrb[0].mxu0 %v2910
          %v3218 = vpop.f32.mrb[0].mxu0
          %v3219 = vadd.f32 0.0, %v3218
          %v3220 = vpop.f32.mrb[0].mxu0
          %3221 = vmatprep.mubr.f32.mxu0 0.0
          %3222 = vmatmul.mubr.f32.gmra.mrb[0].mxu0 %v2911
          %v3223 = vpop.f32.mrb[0].mxu0
          %v3224 = vadd.f32 0.0, %v3223
          %v3225 = vpop.f32.mrb[0].mxu0
          %3226 = vmatprep.mubr.f32.mxu0 0.0
          %3227 = vmatmul.mubr.f32.gmra.mrb[0].mxu0 %v2912
          %v3228 = vpop.f32.mrb[0].mxu0
          %v3229 = vadd.f32 0.0, %v3228
          %v3230 = vpop.f32.mrb[0].mxu0
          %3231 = vmatprep.mubr.f32.mxu0 0.0
          %3232 = vmatmul.mubr.f32.gmra.mrb[0].mxu0 %v2913
          %v3233 = vpop.f32.mrb[0].mxu0
          %v3234 = vadd.f32 0.0, %v3233
          %v3235 = vpop.f32.mrb[0].mxu0
          %3236 = vmatprep.mubr.f32.mxu0 0.0
          %3237 = vmatmul.mubr.f32.gmra.mrb[0].mxu0 %v2914
          %v3238 = vpop.f32.mrb[0].mxu0
          %v3239 = vadd.f32 0.0, %v3238
          %v3240 = vpop.f32.mrb[0].mxu0
          %3241 = vmatprep.mubr.f32.mxu0 0.0
          %3242 = vmatmul.mubr.f32.gmra.mrb[0].mxu0 %v2915
          %v3243 = vpop.f32.mrb[0].mxu0
          %v3244 = vadd.f32 0.0, %v3243
          %v3245 = vpop.f32.mrb[0].mxu0
          %3246 = vmatprep.mubr.f32.mxu0 0.0
          %3247 = vmatmul.mubr.f32.gmra.mrb[0].mxu0 %v2916
          %v3248 = vpop.f32.mrb[0].mxu0
          %v3249 = vadd.f32 0.0, %v3248
          %v3250 = vpop.f32.mrb[0].mxu0
          %3251 = vmatprep.mubr.f32.mxu0 0.0
          %3252 = vmatmul.mubr.f32.gmra.mrb[0].mxu0 %v2917
          %v3253 = vpop.f32.mrb[0].mxu0
          %v3254 = vadd.f32 0.0, %v3253
          %v3255 = vpop.f32.mrb[0].mxu0
          %3256 = vmatprep.mubr.f32.mxu0 0.0
          %3257 = vmatmul.mubr.f32.gmra.mrb[0].mxu0 %v2918
          %v3258 = vpop.f32.mrb[0].mxu0
          %v3259 = vadd.f32 0.0, %v3258
          %v3260 = vpop.f32.mrb[0].mxu0
          %3261 = vmatprep.mubr.f32.mxu0 0.0
          %3262 = vmatmul.mubr.f32.gmra.mrb[0].mxu0 %v2919
          %v3263 = vpop.f32.mrb[0].mxu0
          %v3264 = vadd.f32 0.0, %v3263
          %v3265 = vpop.f32.mrb[0].mxu0
          %3266 = vmatprep.mubr.f32.mxu0 0.0
          %3267 = vmatmul.mubr.f32.gmra.mrb[0].mxu0 %v2920
          %v3268 = vpop.f32.mrb[0].mxu0
          %v3269 = vadd.f32 0.0, %v3268
          %v3270 = vpop.f32.mrb[0].mxu0
          %3271 = vmatprep.mubr.f32.mxu0 0.0
          %3272 = vmatmul.mubr.f32.gmra.mrb[0].mxu0 %v2921
          %v3273 = vpop.f32.mrb[0].mxu0
          %v3274 = vadd.f32 0.0, %v3273
          %v3275 = vpop.f32.mrb[0].mxu0
          %3276 = vdwg.mxu0
          %v3277 = vadd.f32 %v3116, %v3199
          %v3278 = vadd.f32 %v3117, %v3204
          %v3279 = vadd.f32 %v3118, %v3209
          %v3280 = vadd.f32 %v3119, %v3214
          %v3281 = vadd.f32 %v3120, %v3219
          %v3282 = vadd.f32 %v3121, %v3224
          %v3283 = vadd.f32 %v3122, %v3229
          %v3284 = vadd.f32 %v3123, %v3234
          %v3285 = vadd.f32 %v3124, %v3239
          %v3286 = vadd.f32 %v3125, %v3244
          %v3287 = vadd.f32 %v3126, %v3249
          %v3288 = vadd.f32 %v3127, %v3254
          %v3289 = vadd.f32 %v3128, %v3259
          %v3290 = vadd.f32 %v3129, %v3264
          %v3291 = vadd.f32 %v3130, %v3269
          %v3292 = vadd.f32 %v3131, %v3274
          %3293 = vst [vmem:[%s3019] sm:$0xff] %v3277
          %3294 = vst [vmem:[%s3019 + $0x8] sm:$0xff] %v3278
          %3295 = vst [vmem:[%s3019 + $0x10] sm:$0xff] %v3279
          %3296 = vst [vmem:[%s3019 + $0x18] sm:$0xff] %v3280
          %3297 = vst [vmem:[%s3019 + $0x20] sm:$0xff] %v3281
          %3298 = vst [vmem:[%s3019 + $0x28] sm:$0xff] %v3282
          %3299 = vst [vmem:[%s3019 + $0x30] sm:$0xff] %v3283
          %3300 = vst [vmem:[%s3019 + $0x38] sm:$0xff] %v3284
          %3301 = vst [vmem:[%s3019 + $0x40] sm:$0xff] %v3285
          %3302 = vst [vmem:[%s3019 + $0x48] sm:$0xff] %v3286
          %3303 = vst [vmem:[%s3019 + $0x50] sm:$0xff] %v3287
          %3304 = vst [vmem:[%s3019 + $0x58] sm:$0xff] %v3288
          %3305 = vst [vmem:[%s3019 + $0x60] sm:$0xff] %v3289
          %3306 = vst [vmem:[%s3019 + $0x68] sm:$0xff] %v3290
          %3307 = vst [vmem:[%s3019 + $0x70] sm:$0xff] %v3291
          %3308 = vst [vmem:[%s3019 + $0x78] sm:$0xff] %v3292
          %3309 = vst.msk [vmem:[%s2665] sm:$0xff] %vm2150, %v2714
          %3310 = vst.msk [vmem:[%s2665 + $0x8] sm:$0xff] %vm2150, %v2715
          %3311 = vst.msk [vmem:[%s2665 + $0x10] sm:$0xff] %vm2150, %v2716
          %3312 = vst.msk [vmem:[%s2665 + $0x18] sm:$0xff] %vm2150, %v2717
          %3313 = vst.msk [vmem:[%s2665 + $0x20] sm:$0xff] %vm2150, %v2718
          %3314 = vst.msk [vmem:[%s2665 + $0x28] sm:$0xff] %vm2150, %v2719
          %3315 = vst.msk [vmem:[%s2665 + $0x30] sm:$0xff] %vm2150, %v2720
          %3316 = vst.msk [vmem:[%s2665 + $0x38] sm:$0xff] %vm2150, %v2721
          %3317 = vst.msk [vmem:[%s2665 + $0x40] sm:$0xff] %vm2150, %v2722
          %3318 = vst.msk [vmem:[%s2665 + $0x48] sm:$0xff] %vm2150, %v2723
          %3319 = vst.msk [vmem:[%s2665 + $0x50] sm:$0xff] %vm2150, %v2724
          %3320 = vst.msk [vmem:[%s2665 + $0x58] sm:$0xff] %vm2150, %v2725
          %3321 = vst.msk [vmem:[%s2665 + $0x60] sm:$0xff] %vm2150, %v2726
          %3322 = vst.msk [vmem:[%s2665 + $0x68] sm:$0xff] %vm2150, %v2727
          %3323 = vst.msk [vmem:[%s2665 + $0x70] sm:$0xff] %vm2150, %v2728
          %3324 = vst.msk [vmem:[%s2665 + $0x78] sm:$0xff] %vm2150, %v2729
        $region98: #{tpu_custom_call.1} parent=85 // pred_fallthru
          _
        %p3325 = scmp.eq.s32.totalorder %s39, 1
        // Predicated region
        $region99: #{tpu_custom_call.1} parent=85 // pred_check
          %p3326 = pneg %p3325
        $region100: #{tpu_custom_call.1} parent=85 // pred_check_branch
          %3328 = sbr.rel (%p3326) target = $region102
        $region101: #{tpu_custom_call.1} parent=85 // pred_region
          %v3329 = vld [vmem:[#allocation7] sm:$0xff]
          %v3330 = vld [vmem:[#allocation7 + $0x8] sm:$0xff]
          %v3331 = vld [vmem:[#allocation7 + $0x10] sm:$0xff]
          %v3332 = vld [vmem:[#allocation7 + $0x18] sm:$0xff]
          %v3333 = vld [vmem:[#allocation7 + $0x20] sm:$0xff]
          %v3334 = vld [vmem:[#allocation7 + $0x28] sm:$0xff]
          %v3335 = vld [vmem:[#allocation7 + $0x30] sm:$0xff]
          %v3336 = vld [vmem:[#allocation7 + $0x38] sm:$0xff]
          %v3337 = vld [vmem:[#allocation7 + $0x40] sm:$0xff]
          %v3338 = vld [vmem:[#allocation7 + $0x48] sm:$0xff]
          %v3339 = vld [vmem:[#allocation7 + $0x50] sm:$0xff]
          %v3340 = vld [vmem:[#allocation7 + $0x58] sm:$0xff]
          %v3341 = vld [vmem:[#allocation7 + $0x60] sm:$0xff]
          %v3342 = vld [vmem:[#allocation7 + $0x68] sm:$0xff]
          %v3343 = vld [vmem:[#allocation7 + $0x70] sm:$0xff]
          %v3344 = vld [vmem:[#allocation7 + $0x78] sm:$0xff]
          %v3345 = vadd.f32 %v3329, 1e-16
          %v3346 = vadd.f32 %v3330, 1e-16
          %v3347 = vadd.f32 %v3331, 1e-16
          %v3348 = vadd.f32 %v3332, 1e-16
          %v3349 = vadd.f32 %v3333, 1e-16
          %v3350 = vadd.f32 %v3334, 1e-16
          %v3351 = vadd.f32 %v3335, 1e-16
          %v3352 = vadd.f32 %v3336, 1e-16
          %v3353 = vadd.f32 %v3337, 1e-16
          %v3354 = vadd.f32 %v3338, 1e-16
          %v3355 = vadd.f32 %v3339, 1e-16
          %v3356 = vadd.f32 %v3340, 1e-16
          %v3357 = vadd.f32 %v3341, 1e-16
          %v3358 = vadd.f32 %v3342, 1e-16
          %v3359 = vadd.f32 %v3343, 1e-16
          %v3360 = vadd.f32 %v3344, 1e-16
          %v3361 = vrcp.pop %v3345
          %v3362 = vrcp.pop %v3346
          %v3363 = vrcp.pop %v3347
          %v3364 = vrcp.pop %v3348
          %v3365 = vrcp.pop %v3349
          %v3366 = vrcp.pop %v3350
          %v3367 = vrcp.pop %v3351
          %v3368 = vrcp.pop %v3352
          %v3369 = vrcp.pop %v3353
          %v3370 = vrcp.pop %v3354
          %v3371 = vrcp.pop %v3355
          %v3372 = vrcp.pop %v3356
          %v3373 = vrcp.pop %v3357
          %v3374 = vrcp.pop %v3358
          %v3375 = vrcp.pop %v3359
          %v3376 = vrcp.pop %v3360
          %v3377 = vmul.f32 %v3345, %v3361
          %v3378 = vmul.f32 %v3346, %v3362
          %v3379 = vmul.f32 %v3347, %v3363
          %v3380 = vmul.f32 %v3348, %v3364
          %v3381 = vmul.f32 %v3349, %v3365
          %v3382 = vmul.f32 %v3350, %v3366
          %v3383 = vmul.f32 %v3351, %v3367
          %v3384 = vmul.f32 %v3352, %v3368
          %v3385 = vmul.f32 %v3353, %v3369
          %v3386 = vmul.f32 %v3354, %v3370
          %v3387 = vmul.f32 %v3355, %v3371
          %v3388 = vmul.f32 %v3356, %v3372
          %v3389 = vmul.f32 %v3357, %v3373
          %v3390 = vmul.f32 %v3358, %v3374
          %v3391 = vmul.f32 %v3359, %v3375
          %v3392 = vmul.f32 %v3360, %v3376
          %v3393 = vsub.f32 2.0, %v3377
          %v3394 = vsub.f32 2.0, %v3378
          %v3395 = vsub.f32 2.0, %v3379
          %v3396 = vsub.f32 2.0, %v3380
          %v3397 = vsub.f32 2.0, %v3381
          %v3398 = vsub.f32 2.0, %v3382
          %v3399 = vsub.f32 2.0, %v3383
          %v3400 = vsub.f32 2.0, %v3384
          %v3401 = vsub.f32 2.0, %v3385
          %v3402 = vsub.f32 2.0, %v3386
          %v3403 = vsub.f32 2.0, %v3387
          %v3404 = vsub.f32 2.0, %v3388
          %v3405 = vsub.f32 2.0, %v3389
          %v3406 = vsub.f32 2.0, %v3390
          %v3407 = vsub.f32 2.0, %v3391
          %v3408 = vsub.f32 2.0, %v3392
          %v3409 = vmul.f32 %v3361, %v3393
          %v3410 = vmul.f32 %v3362, %v3394
          %v3411 = vmul.f32 %v3363, %v3395
          %v3412 = vmul.f32 %v3364, %v3396
          %v3413 = vmul.f32 %v3365, %v3397
          %v3414 = vmul.f32 %v3366, %v3398
          %v3415 = vmul.f32 %v3367, %v3399
          %v3416 = vmul.f32 %v3368, %v3400
          %v3417 = vmul.f32 %v3369, %v3401
          %v3418 = vmul.f32 %v3370, %v3402
          %v3419 = vmul.f32 %v3371, %v3403
          %v3420 = vmul.f32 %v3372, %v3404
          %v3421 = vmul.f32 %v3373, %v3405
          %v3422 = vmul.f32 %v3374, %v3406
          %v3423 = vmul.f32 %v3375, %v3407
          %v3424 = vmul.f32 %v3376, %v3408
          %v3425 = vld [vmem:[#allocation8] sm:$0xff]
          %v3426 = vld [vmem:[#allocation8 + $0x8] sm:$0xff]
          %v3427 = vld [vmem:[#allocation8 + $0x10] sm:$0xff]
          %v3428 = vld [vmem:[#allocation8 + $0x18] sm:$0xff]
          %v3429 = vld [vmem:[#allocation8 + $0x20] sm:$0xff]
          %v3430 = vld [vmem:[#allocation8 + $0x28] sm:$0xff]
          %v3431 = vld [vmem:[#allocation8 + $0x30] sm:$0xff]
          %v3432 = vld [vmem:[#allocation8 + $0x38] sm:$0xff]
          %v3433 = vld [vmem:[#allocation8 + $0x40] sm:$0xff]
          %v3434 = vld [vmem:[#allocation8 + $0x48] sm:$0xff]
          %v3435 = vld [vmem:[#allocation8 + $0x50] sm:$0xff]
          %v3436 = vld [vmem:[#allocation8 + $0x58] sm:$0xff]
          %v3437 = vld [vmem:[#allocation8 + $0x60] sm:$0xff]
          %v3438 = vld [vmem:[#allocation8 + $0x68] sm:$0xff]
          %v3439 = vld [vmem:[#allocation8 + $0x70] sm:$0xff]
          %v3440 = vld [vmem:[#allocation8 + $0x78] sm:$0xff]
          %3442 = vset.pattern.permute.xlu0 0
          %3443 = vperm.xlu0 %3442, %v3409
          %v3444 = vpop.permute.xlu0 %3443
          %3447 = vset.pattern.permute.xlu0 0
          %3448 = vperm.xlu0 %3447, %v3410
          %v3449 = vpop.permute.xlu0 %3448
          %3452 = vset.pattern.permute.xlu0 0
          %3453 = vperm.xlu0 %3452, %v3411
          %v3454 = vpop.permute.xlu0 %3453
          %3457 = vset.pattern.permute.xlu0 0
          %3458 = vperm.xlu0 %3457, %v3412
          %v3459 = vpop.permute.xlu0 %3458
          %3462 = vset.pattern.permute.xlu0 0
          %3463 = vperm.xlu0 %3462, %v3413
          %v3464 = vpop.permute.xlu0 %3463
          %3467 = vset.pattern.permute.xlu0 0
          %3468 = vperm.xlu0 %3467, %v3414
          %v3469 = vpop.permute.xlu0 %3468
          %3472 = vset.pattern.permute.xlu0 0
          %3473 = vperm.xlu0 %3472, %v3415
          %v3474 = vpop.permute.xlu0 %3473
          %3477 = vset.pattern.permute.xlu0 0
          %3478 = vperm.xlu0 %3477, %v3416
          %v3479 = vpop.permute.xlu0 %3478
          %3482 = vset.pattern.permute.xlu0 0
          %3483 = vperm.xlu0 %3482, %v3417
          %v3484 = vpop.permute.xlu0 %3483
          %3487 = vset.pattern.permute.xlu0 0
          %3488 = vperm.xlu0 %3487, %v3418
          %v3489 = vpop.permute.xlu0 %3488
          %3492 = vset.pattern.permute.xlu0 0
          %3493 = vperm.xlu0 %3492, %v3419
          %v3494 = vpop.permute.xlu0 %3493
          %3497 = vset.pattern.permute.xlu0 0
          %3498 = vperm.xlu0 %3497, %v3420
          %v3499 = vpop.permute.xlu0 %3498
          %3502 = vset.pattern.permute.xlu0 0
          %3503 = vperm.xlu0 %3502, %v3421
          %v3504 = vpop.permute.xlu0 %3503
          %3507 = vset.pattern.permute.xlu0 0
          %3508 = vperm.xlu0 %3507, %v3422
          %v3509 = vpop.permute.xlu0 %3508
          %3512 = vset.pattern.permute.xlu0 0
          %3513 = vperm.xlu0 %3512, %v3423
          %v3514 = vpop.permute.xlu0 %3513
          %3517 = vset.pattern.permute.xlu0 0
          %3518 = vperm.xlu0 %3517, %v3424
          %v3519 = vpop.permute.xlu0 %3518
          %v3521 = vmul.f32 %v3425, %v3444
          %v3522 = vmul.f32 %v3426, %v3449
          %v3523 = vmul.f32 %v3427, %v3454
          %v3524 = vmul.f32 %v3428, %v3459
          %v3525 = vmul.f32 %v3429, %v3464
          %v3526 = vmul.f32 %v3430, %v3469
          %v3527 = vmul.f32 %v3431, %v3474
          %v3528 = vmul.f32 %v3432, %v3479
          %v3529 = vmul.f32 %v3433, %v3484
          %v3530 = vmul.f32 %v3434, %v3489
          %v3531 = vmul.f32 %v3435, %v3494
          %v3532 = vmul.f32 %v3436, %v3499
          %v3533 = vmul.f32 %v3437, %v3504
          %v3534 = vmul.f32 %v3438, %v3509
          %v3535 = vmul.f32 %v3439, %v3514
          %v3536 = vmul.f32 %v3440, %v3519
          %s3537 = scalar_lea.vmem [#allocation7], 128
          %v3538 = vld [vmem:[%s3537] sm:$0xff]
          %v3539 = vld [vmem:[%s3537 + $0x8] sm:$0xff]
          %v3540 = vld [vmem:[%s3537 + $0x10] sm:$0xff]
          %v3541 = vld [vmem:[%s3537 + $0x18] sm:$0xff]
          %v3542 = vld [vmem:[%s3537 + $0x20] sm:$0xff]
          %v3543 = vld [vmem:[%s3537 + $0x28] sm:$0xff]
          %v3544 = vld [vmem:[%s3537 + $0x30] sm:$0xff]
          %v3545 = vld [vmem:[%s3537 + $0x38] sm:$0xff]
          %v3546 = vld [vmem:[%s3537 + $0x40] sm:$0xff]
          %v3547 = vld [vmem:[%s3537 + $0x48] sm:$0xff]
          %v3548 = vld [vmem:[%s3537 + $0x50] sm:$0xff]
          %v3549 = vld [vmem:[%s3537 + $0x58] sm:$0xff]
          %v3550 = vld [vmem:[%s3537 + $0x60] sm:$0xff]
          %v3551 = vld [vmem:[%s3537 + $0x68] sm:$0xff]
          %v3552 = vld [vmem:[%s3537 + $0x70] sm:$0xff]
          %v3553 = vld [vmem:[%s3537 + $0x78] sm:$0xff]
          %v3554 = vadd.f32 %v3538, 1e-16
          %v3555 = vadd.f32 %v3539, 1e-16
          %v3556 = vadd.f32 %v3540, 1e-16
          %v3557 = vadd.f32 %v3541, 1e-16
          %v3558 = vadd.f32 %v3542, 1e-16
          %v3559 = vadd.f32 %v3543, 1e-16
          %v3560 = vadd.f32 %v3544, 1e-16
          %v3561 = vadd.f32 %v3545, 1e-16
          %v3562 = vadd.f32 %v3546, 1e-16
          %v3563 = vadd.f32 %v3547, 1e-16
          %v3564 = vadd.f32 %v3548, 1e-16
          %v3565 = vadd.f32 %v3549, 1e-16
          %v3566 = vadd.f32 %v3550, 1e-16
          %v3567 = vadd.f32 %v3551, 1e-16
          %v3568 = vadd.f32 %v3552, 1e-16
          %v3569 = vadd.f32 %v3553, 1e-16
          %v3570 = vrcp.pop %v3554
          %v3571 = vrcp.pop %v3555
          %v3572 = vrcp.pop %v3556
          %v3573 = vrcp.pop %v3557
          %v3574 = vrcp.pop %v3558
          %v3575 = vrcp.pop %v3559
          %v3576 = vrcp.pop %v3560
          %v3577 = vrcp.pop %v3561
          %v3578 = vrcp.pop %v3562
          %v3579 = vrcp.pop %v3563
          %v3580 = vrcp.pop %v3564
          %v3581 = vrcp.pop %v3565
          %v3582 = vrcp.pop %v3566
          %v3583 = vrcp.pop %v3567
          %v3584 = vrcp.pop %v3568
          %v3585 = vrcp.pop %v3569
          %v3586 = vmul.f32 %v3554, %v3570
          %v3587 = vmul.f32 %v3555, %v3571
          %v3588 = vmul.f32 %v3556, %v3572
          %v3589 = vmul.f32 %v3557, %v3573
          %v3590 = vmul.f32 %v3558, %v3574
          %v3591 = vmul.f32 %v3559, %v3575
          %v3592 = vmul.f32 %v3560, %v3576
          %v3593 = vmul.f32 %v3561, %v3577
          %v3594 = vmul.f32 %v3562, %v3578
          %v3595 = vmul.f32 %v3563, %v3579
          %v3596 = vmul.f32 %v3564, %v3580
          %v3597 = vmul.f32 %v3565, %v3581
          %v3598 = vmul.f32 %v3566, %v3582
          %v3599 = vmul.f32 %v3567, %v3583
          %v3600 = vmul.f32 %v3568, %v3584
          %v3601 = vmul.f32 %v3569, %v3585
          %v3602 = vsub.f32 2.0, %v3586
          %v3603 = vsub.f32 2.0, %v3587
          %v3604 = vsub.f32 2.0, %v3588
          %v3605 = vsub.f32 2.0, %v3589
          %v3606 = vsub.f32 2.0, %v3590
          %v3607 = vsub.f32 2.0, %v3591
          %v3608 = vsub.f32 2.0, %v3592
          %v3609 = vsub.f32 2.0, %v3593
          %v3610 = vsub.f32 2.0, %v3594
          %v3611 = vsub.f32 2.0, %v3595
          %v3612 = vsub.f32 2.0, %v3596
          %v3613 = vsub.f32 2.0, %v3597
          %v3614 = vsub.f32 2.0, %v3598
          %v3615 = vsub.f32 2.0, %v3599
          %v3616 = vsub.f32 2.0, %v3600
          %v3617 = vsub.f32 2.0, %v3601
          %v3618 = vmul.f32 %v3570, %v3602
          %v3619 = vmul.f32 %v3571, %v3603
          %v3620 = vmul.f32 %v3572, %v3604
          %v3621 = vmul.f32 %v3573, %v3605
          %v3622 = vmul.f32 %v3574, %v3606
          %v3623 = vmul.f32 %v3575, %v3607
          %v3624 = vmul.f32 %v3576, %v3608
          %v3625 = vmul.f32 %v3577, %v3609
          %v3626 = vmul.f32 %v3578, %v3610
          %v3627 = vmul.f32 %v3579, %v3611
          %v3628 = vmul.f32 %v3580, %v3612
          %v3629 = vmul.f32 %v3581, %v3613
          %v3630 = vmul.f32 %v3582, %v3614
          %v3631 = vmul.f32 %v3583, %v3615
          %v3632 = vmul.f32 %v3584, %v3616
          %v3633 = vmul.f32 %v3585, %v3617
          %s3634 = scalar_lea.vmem [#allocation8], 128
          %v3635 = vld [vmem:[%s3634] sm:$0xff]
          %v3636 = vld [vmem:[%s3634 + $0x8] sm:$0xff]
          %v3637 = vld [vmem:[%s3634 + $0x10] sm:$0xff]
          %v3638 = vld [vmem:[%s3634 + $0x18] sm:$0xff]
          %v3639 = vld [vmem:[%s3634 + $0x20] sm:$0xff]
          %v3640 = vld [vmem:[%s3634 + $0x28] sm:$0xff]
          %v3641 = vld [vmem:[%s3634 + $0x30] sm:$0xff]
          %v3642 = vld [vmem:[%s3634 + $0x38] sm:$0xff]
          %v3643 = vld [vmem:[%s3634 + $0x40] sm:$0xff]
          %v3644 = vld [vmem:[%s3634 + $0x48] sm:$0xff]
          %v3645 = vld [vmem:[%s3634 + $0x50] sm:$0xff]
          %v3646 = vld [vmem:[%s3634 + $0x58] sm:$0xff]
          %v3647 = vld [vmem:[%s3634 + $0x60] sm:$0xff]
          %v3648 = vld [vmem:[%s3634 + $0x68] sm:$0xff]
          %v3649 = vld [vmem:[%s3634 + $0x70] sm:$0xff]
          %v3650 = vld [vmem:[%s3634 + $0x78] sm:$0xff]
          %3652 = vset.pattern.permute.xlu0 0
          %3653 = vperm.xlu0 %3652, %v3618
          %v3654 = vpop.permute.xlu0 %3653
          %3657 = vset.pattern.permute.xlu0 0
          %3658 = vperm.xlu0 %3657, %v3619
          %v3659 = vpop.permute.xlu0 %3658
          %3662 = vset.pattern.permute.xlu0 0
          %3663 = vperm.xlu0 %3662, %v3620
          %v3664 = vpop.permute.xlu0 %3663
          %3667 = vset.pattern.permute.xlu0 0
          %3668 = vperm.xlu0 %3667, %v3621
          %v3669 = vpop.permute.xlu0 %3668
          %3672 = vset.pattern.permute.xlu0 0
          %3673 = vperm.xlu0 %3672, %v3622
          %v3674 = vpop.permute.xlu0 %3673
          %3677 = vset.pattern.permute.xlu0 0
          %3678 = vperm.xlu0 %3677, %v3623
          %v3679 = vpop.permute.xlu0 %3678
          %3682 = vset.pattern.permute.xlu0 0
          %3683 = vperm.xlu0 %3682, %v3624
          %v3684 = vpop.permute.xlu0 %3683
          %3687 = vset.pattern.permute.xlu0 0
          %3688 = vperm.xlu0 %3687, %v3625
          %v3689 = vpop.permute.xlu0 %3688
          %3692 = vset.pattern.permute.xlu0 0
          %3693 = vperm.xlu0 %3692, %v3626
          %v3694 = vpop.permute.xlu0 %3693
          %3697 = vset.pattern.permute.xlu0 0
          %3698 = vperm.xlu0 %3697, %v3627
          %v3699 = vpop.permute.xlu0 %3698
          %3702 = vset.pattern.permute.xlu0 0
          %3703 = vperm.xlu0 %3702, %v3628
          %v3704 = vpop.permute.xlu0 %3703
          %3707 = vset.pattern.permute.xlu0 0
          %3708 = vperm.xlu0 %3707, %v3629
          %v3709 = vpop.permute.xlu0 %3708
          %3712 = vset.pattern.permute.xlu0 0
          %3713 = vperm.xlu0 %3712, %v3630
          %v3714 = vpop.permute.xlu0 %3713
          %3717 = vset.pattern.permute.xlu0 0
          %3718 = vperm.xlu0 %3717, %v3631
          %v3719 = vpop.permute.xlu0 %3718
          %3722 = vset.pattern.permute.xlu0 0
          %3723 = vperm.xlu0 %3722, %v3632
          %v3724 = vpop.permute.xlu0 %3723
          %3727 = vset.pattern.permute.xlu0 0
          %3728 = vperm.xlu0 %3727, %v3633
          %v3729 = vpop.permute.xlu0 %3728
          %v3731 = vmul.f32 %v3635, %v3654
          %v3732 = vmul.f32 %v3636, %v3659
          %v3733 = vmul.f32 %v3637, %v3664
          %v3734 = vmul.f32 %v3638, %v3669
          %v3735 = vmul.f32 %v3639, %v3674
          %v3736 = vmul.f32 %v3640, %v3679
          %v3737 = vmul.f32 %v3641, %v3684
          %v3738 = vmul.f32 %v3642, %v3689
          %v3739 = vmul.f32 %v3643, %v3694
          %v3740 = vmul.f32 %v3644, %v3699
          %v3741 = vmul.f32 %v3645, %v3704
          %v3742 = vmul.f32 %v3646, %v3709
          %v3743 = vmul.f32 %v3647, %v3714
          %v3744 = vmul.f32 %v3648, %v3719
          %v3745 = vmul.f32 %v3649, %v3724
          %v3746 = vmul.f32 %v3650, %v3729
          %v3747 = vld [vmem:[%s7] sm:$0xff]
          %v3748 = vld [vmem:[%s7 + $0x8] sm:$0xff]
          %v3749 = vld [vmem:[%s7 + $0x10] sm:$0xff]
          %v3750 = vld [vmem:[%s7 + $0x18] sm:$0xff]
          %v3751 = vld [vmem:[%s7 + $0x20] sm:$0xff]
          %v3752 = vld [vmem:[%s7 + $0x28] sm:$0xff]
          %v3753 = vld [vmem:[%s7 + $0x30] sm:$0xff]
          %v3754 = vld [vmem:[%s7 + $0x38] sm:$0xff]
          %v3755 = vld [vmem:[%s7 + $0x40] sm:$0xff]
          %v3756 = vld [vmem:[%s7 + $0x48] sm:$0xff]
          %v3757 = vld [vmem:[%s7 + $0x50] sm:$0xff]
          %v3758 = vld [vmem:[%s7 + $0x58] sm:$0xff]
          %v3759 = vld [vmem:[%s7 + $0x60] sm:$0xff]
          %v3760 = vld [vmem:[%s7 + $0x68] sm:$0xff]
          %v3761 = vld [vmem:[%s7 + $0x70] sm:$0xff]
          %v3762 = vld [vmem:[%s7 + $0x78] sm:$0xff]
          %v3763 = vld [vmem:[%s7 + $0x80] sm:$0xff]
          %v3764 = vld [vmem:[%s7 + $0x88] sm:$0xff]
          %v3765 = vld [vmem:[%s7 + $0x90] sm:$0xff]
          %v3766 = vld [vmem:[%s7 + $0x98] sm:$0xff]
          %v3767 = vld [vmem:[%s7 + $0xa0] sm:$0xff]
          %v3768 = vld [vmem:[%s7 + $0xa8] sm:$0xff]
          %v3769 = vld [vmem:[%s7 + $0xb0] sm:$0xff]
          %v3770 = vld [vmem:[%s7 + $0xb8] sm:$0xff]
          %v3771 = vld [vmem:[%s7 + $0xc0] sm:$0xff]
          %v3772 = vld [vmem:[%s7 + $0xc8] sm:$0xff]
          %v3773 = vld [vmem:[%s7 + $0xd0] sm:$0xff]
          %v3774 = vld [vmem:[%s7 + $0xd8] sm:$0xff]
          %v3775 = vld [vmem:[%s7 + $0xe0] sm:$0xff]
          %v3776 = vld [vmem:[%s7 + $0xe8] sm:$0xff]
          %v3777 = vld [vmem:[%s7 + $0xf0] sm:$0xff]
          %v3778 = vld [vmem:[%s7 + $0xf8] sm:$0xff]
          %v3779 = vld [vmem:[#allocation5] sm:$0xff]
          %v3780 = vld [vmem:[#allocation5 + $0x8] sm:$0xff]
          %v3781 = vld [vmem:[#allocation5 + $0x10] sm:$0xff]
          %v3782 = vld [vmem:[#allocation5 + $0x18] sm:$0xff]
          %v3783 = vld [vmem:[#allocation5 + $0x20] sm:$0xff]
          %v3784 = vld [vmem:[#allocation5 + $0x28] sm:$0xff]
          %v3785 = vld [vmem:[#allocation5 + $0x30] sm:$0xff]
          %v3786 = vld [vmem:[#allocation5 + $0x38] sm:$0xff]
          %v3787 = vld [vmem:[#allocation5 + $0x40] sm:$0xff]
          %v3788 = vld [vmem:[#allocation5 + $0x48] sm:$0xff]
          %v3789 = vld [vmem:[#allocation5 + $0x50] sm:$0xff]
          %v3790 = vld [vmem:[#allocation5 + $0x58] sm:$0xff]
          %v3791 = vld [vmem:[#allocation5 + $0x60] sm:$0xff]
          %v3792 = vld [vmem:[#allocation5 + $0x68] sm:$0xff]
          %v3793 = vld [vmem:[#allocation5 + $0x70] sm:$0xff]
          %v3794 = vld [vmem:[#allocation5 + $0x78] sm:$0xff]
          %3795 = vmatprep.subr.mxu0 0.0
          %3796 = vmatpush1.msra.mxu0 %v3747
          %3797 = vmatprep.subr.mxu0 0.0
          %3798 = vmatpush1.msra.mxu0 %v3748
          %3799 = vmatprep.subr.mxu0 0.0
          %3800 = vmatpush1.msra.mxu0 %v3749
          %3801 = vmatprep.subr.mxu0 0.0
          %3802 = vmatpush1.msra.mxu0 %v3750
          %3803 = vmatprep.subr.mxu0 0.0
          %3804 = vmatpush1.msra.mxu0 %v3751
          %3805 = vmatprep.subr.mxu0 0.0
          %3806 = vmatpush1.msra.mxu0 %v3752
          %3807 = vmatprep.subr.mxu0 0.0
          %3808 = vmatpush1.msra.mxu0 %v3753
          %3809 = vmatprep.subr.mxu0 0.0
          %3810 = vmatpush1.msra.mxu0 %v3754
          %3811 = vmatprep.subr.mxu0 0.0
          %3812 = vmatpush1.msra.mxu0 %v3755
          %3813 = vmatprep.subr.mxu0 0.0
          %3814 = vmatpush1.msra.mxu0 %v3756
          %3815 = vmatprep.subr.mxu0 0.0
          %3816 = vmatpush1.msra.mxu0 %v3757
          %3817 = vmatprep.subr.mxu0 0.0
          %3818 = vmatpush1.msra.mxu0 %v3758
          %3819 = vmatprep.subr.mxu0 0.0
          %3820 = vmatpush1.msra.mxu0 %v3759
          %3821 = vmatprep.subr.mxu0 0.0
          %3822 = vmatpush1.msra.mxu0 %v3760
          %3823 = vmatprep.subr.mxu0 0.0
          %3824 = vmatpush1.msra.mxu0 %v3761
          %3825 = vmatprep.subr.mxu0 0.0
          %3826 = vmatpush1.msra.mxu0 %v3762
          %3827 = vmatprep.subr.mxu0 0.0
          %3828 = vmatpush1.msra.mxu0 %v3763
          %3829 = vmatprep.subr.mxu0 0.0
          %3830 = vmatpush1.msra.mxu0 %v3764
          %3831 = vmatprep.subr.mxu0 0.0
          %3832 = vmatpush1.msra.mxu0 %v3765
          %3833 = vmatprep.subr.mxu0 0.0
          %3834 = vmatpush1.msra.mxu0 %v3766
          %3835 = vmatprep.subr.mxu0 0.0
          %3836 = vmatpush1.msra.mxu0 %v3767
          %3837 = vmatprep.subr.mxu0 0.0
          %3838 = vmatpush1.msra.mxu0 %v3768
          %3839 = vmatprep.subr.mxu0 0.0
          %3840 = vmatpush1.msra.mxu0 %v3769
          %3841 = vmatprep.subr.mxu0 0.0
          %3842 = vmatpush1.msra.mxu0 %v3770
          %3843 = vmatprep.subr.mxu0 0.0
          %3844 = vmatpush1.msra.mxu0 %v3771
          %3845 = vmatprep.subr.mxu0 0.0
          %3846 = vmatpush1.msra.mxu0 %v3772
          %3847 = vmatprep.subr.mxu0 0.0
          %3848 = vmatpush1.msra.mxu0 %v3773
          %3849 = vmatprep.subr.mxu0 0.0
          %3850 = vmatpush1.msra.mxu0 %v3774
          %3851 = vmatprep.subr.mxu0 0.0
          %3852 = vmatpush1.msra.mxu0 %v3775
          %3853 = vmatprep.subr.mxu0 0.0
          %3854 = vmatpush1.msra.mxu0 %v3776
          %3855 = vmatprep.subr.mxu0 0.0
          %3856 = vmatpush1.msra.mxu0 %v3777
          %3857 = vmatprep.subr.mxu0 0.0
          %3858 = vmatpush1.msra.mxu0 %v3778
          %3859 = vmatprep.mubr.f32.mxu0 %v3731
          %3860 = vmatmul.mubr.f32.gmra.mrb[0].mxu0 %v3521
          %v3861 = vpop.f32.mrb[0].mxu0
          %v3862 = vadd.f32 %v3779, %v3861
          %v3863 = vpop.f32.mrb[0].mxu0
          %3864 = vmatprep.mubr.f32.mxu0 %v3732
          %3865 = vmatmul.mubr.f32.gmra.mrb[0].mxu0 %v3522
          %v3866 = vpop.f32.mrb[0].mxu0
          %v3867 = vadd.f32 %v3780, %v3866
          %v3868 = vpop.f32.mrb[0].mxu0
          %3869 = vmatprep.mubr.f32.mxu0 %v3733
          %3870 = vmatmul.mubr.f32.gmra.mrb[0].mxu0 %v3523
          %v3871 = vpop.f32.mrb[0].mxu0
          %v3872 = vadd.f32 %v3781, %v3871
          %v3873 = vpop.f32.mrb[0].mxu0
          %3874 = vmatprep.mubr.f32.mxu0 %v3734
          %3875 = vmatmul.mubr.f32.gmra.mrb[0].mxu0 %v3524
          %v3876 = vpop.f32.mrb[0].mxu0
          %v3877 = vadd.f32 %v3782, %v3876
          %v3878 = vpop.f32.mrb[0].mxu0
          %3879 = vmatprep.mubr.f32.mxu0 %v3735
          %3880 = vmatmul.mubr.f32.gmra.mrb[0].mxu0 %v3525
          %v3881 = vpop.f32.mrb[0].mxu0
          %v3882 = vadd.f32 %v3783, %v3881
          %v3883 = vpop.f32.mrb[0].mxu0
          %3884 = vmatprep.mubr.f32.mxu0 %v3736
          %3885 = vmatmul.mubr.f32.gmra.mrb[0].mxu0 %v3526
          %v3886 = vpop.f32.mrb[0].mxu0
          %v3887 = vadd.f32 %v3784, %v3886
          %v3888 = vpop.f32.mrb[0].mxu0
          %3889 = vmatprep.mubr.f32.mxu0 %v3737
          %3890 = vmatmul.mubr.f32.gmra.mrb[0].mxu0 %v3527
          %v3891 = vpop.f32.mrb[0].mxu0
          %v3892 = vadd.f32 %v3785, %v3891
          %v3893 = vpop.f32.mrb[0].mxu0
          %3894 = vmatprep.mubr.f32.mxu0 %v3738
          %3895 = vmatmul.mubr.f32.gmra.mrb[0].mxu0 %v3528
          %v3896 = vpop.f32.mrb[0].mxu0
          %v3897 = vadd.f32 %v3786, %v3896
          %v3898 = vpop.f32.mrb[0].mxu0
          %3899 = vmatprep.mubr.f32.mxu0 %v3739
          %3900 = vmatmul.mubr.f32.gmra.mrb[0].mxu0 %v3529
          %v3901 = vpop.f32.mrb[0].mxu0
          %v3902 = vadd.f32 %v3787, %v3901
          %v3903 = vpop.f32.mrb[0].mxu0
          %3904 = vmatprep.mubr.f32.mxu0 %v3740
          %3905 = vmatmul.mubr.f32.gmra.mrb[0].mxu0 %v3530
          %v3906 = vpop.f32.mrb[0].mxu0
          %v3907 = vadd.f32 %v3788, %v3906
          %v3908 = vpop.f32.mrb[0].mxu0
          %3909 = vmatprep.mubr.f32.mxu0 %v3741
          %3910 = vmatmul.mubr.f32.gmra.mrb[0].mxu0 %v3531
          %v3911 = vpop.f32.mrb[0].mxu0
          %v3912 = vadd.f32 %v3789, %v3911
          %v3913 = vpop.f32.mrb[0].mxu0
          %3914 = vmatprep.mubr.f32.mxu0 %v3742
          %3915 = vmatmul.mubr.f32.gmra.mrb[0].mxu0 %v3532
          %v3916 = vpop.f32.mrb[0].mxu0
          %v3917 = vadd.f32 %v3790, %v3916
          %v3918 = vpop.f32.mrb[0].mxu0
          %3919 = vmatprep.mubr.f32.mxu0 %v3743
          %3920 = vmatmul.mubr.f32.gmra.mrb[0].mxu0 %v3533
          %v3921 = vpop.f32.mrb[0].mxu0
          %v3922 = vadd.f32 %v3791, %v3921
          %v3923 = vpop.f32.mrb[0].mxu0
          %3924 = vmatprep.mubr.f32.mxu0 %v3744
          %3925 = vmatmul.mubr.f32.gmra.mrb[0].mxu0 %v3534
          %v3926 = vpop.f32.mrb[0].mxu0
          %v3927 = vadd.f32 %v3792, %v3926
          %v3928 = vpop.f32.mrb[0].mxu0
          %3929 = vmatprep.mubr.f32.mxu0 %v3745
          %3930 = vmatmul.mubr.f32.gmra.mrb[0].mxu0 %v3535
          %v3931 = vpop.f32.mrb[0].mxu0
          %v3932 = vadd.f32 %v3793, %v3931
          %v3933 = vpop.f32.mrb[0].mxu0
          %3934 = vmatprep.mubr.f32.mxu0 %v3746
          %3935 = vmatmul.mubr.f32.gmra.mrb[0].mxu0 %v3536
          %v3936 = vpop.f32.mrb[0].mxu0
          %v3937 = vadd.f32 %v3794, %v3936
          %v3938 = vpop.f32.mrb[0].mxu0
          %3939 = vdwg.mxu0
          %v3940 = vmul.f32 %v3862, 0.5
          %v3941 = vmul.f32 %v3867, 0.5
          %v3942 = vmul.f32 %v3872, 0.5
          %v3943 = vmul.f32 %v3877, 0.5
          %v3944 = vmul.f32 %v3882, 0.5
          %v3945 = vmul.f32 %v3887, 0.5
          %v3946 = vmul.f32 %v3892, 0.5
          %v3947 = vmul.f32 %v3897, 0.5
          %v3948 = vmul.f32 %v3902, 0.5
          %v3949 = vmul.f32 %v3907, 0.5
          %v3950 = vmul.f32 %v3912, 0.5
          %v3951 = vmul.f32 %v3917, 0.5
          %v3952 = vmul.f32 %v3922, 0.5
          %v3953 = vmul.f32 %v3927, 0.5
          %v3954 = vmul.f32 %v3932, 0.5
          %v3955 = vmul.f32 %v3937, 0.5
          %v3956 = vmul.f32 %v3862, 0.70710677
          %v3957 = vmul.f32 %v3867, 0.70710677
          %v3958 = vmul.f32 %v3872, 0.70710677
          %v3959 = vmul.f32 %v3877, 0.70710677
          %v3960 = vmul.f32 %v3882, 0.70710677
          %v3961 = vmul.f32 %v3887, 0.70710677
          %v3962 = vmul.f32 %v3892, 0.70710677
          %v3963 = vmul.f32 %v3897, 0.70710677
          %v3964 = vmul.f32 %v3902, 0.70710677
          %v3965 = vmul.f32 %v3907, 0.70710677
          %v3966 = vmul.f32 %v3912, 0.70710677
          %v3967 = vmul.f32 %v3917, 0.70710677
          %v3968 = vmul.f32 %v3922, 0.70710677
          %v3969 = vmul.f32 %v3927, 0.70710677
          %v3970 = vmul.f32 %v3932, 0.70710677
          %v3971 = vmul.f32 %v3937, 0.70710677
          %v3972 = verf.f32.pop %v3956
          %v3973 = verf.f32.pop %v3957
          %v3974 = verf.f32.pop %v3958
          %v3975 = verf.f32.pop %v3959
          %v3976 = verf.f32.pop %v3960
          %v3977 = verf.f32.pop %v3961
          %v3978 = verf.f32.pop %v3962
          %v3979 = verf.f32.pop %v3963
          %v3980 = verf.f32.pop %v3964
          %v3981 = verf.f32.pop %v3965
          %v3982 = verf.f32.pop %v3966
          %v3983 = verf.f32.pop %v3967
          %v3984 = verf.f32.pop %v3968
          %v3985 = verf.f32.pop %v3969
          %v3986 = verf.f32.pop %v3970
          %v3987 = verf.f32.pop %v3971
          %v3988 = vadd.f32 %v3972, 1.0
          %v3989 = vadd.f32 %v3973, 1.0
          %v3990 = vadd.f32 %v3974, 1.0
          %v3991 = vadd.f32 %v3975, 1.0
          %v3992 = vadd.f32 %v3976, 1.0
          %v3993 = vadd.f32 %v3977, 1.0
          %v3994 = vadd.f32 %v3978, 1.0
          %v3995 = vadd.f32 %v3979, 1.0
          %v3996 = vadd.f32 %v3980, 1.0
          %v3997 = vadd.f32 %v3981, 1.0
          %v3998 = vadd.f32 %v3982, 1.0
          %v3999 = vadd.f32 %v3983, 1.0
          %v4000 = vadd.f32 %v3984, 1.0
          %v4001 = vadd.f32 %v3985, 1.0
          %v4002 = vadd.f32 %v3986, 1.0
          %v4003 = vadd.f32 %v3987, 1.0
          %v4004 = vmul.f32 %v3940, %v3988
          %v4005 = vmul.f32 %v3941, %v3989
          %v4006 = vmul.f32 %v3942, %v3990
          %v4007 = vmul.f32 %v3943, %v3991
          %v4008 = vmul.f32 %v3944, %v3992
          %v4009 = vmul.f32 %v3945, %v3993
          %v4010 = vmul.f32 %v3946, %v3994
          %v4011 = vmul.f32 %v3947, %v3995
          %v4012 = vmul.f32 %v3948, %v3996
          %v4013 = vmul.f32 %v3949, %v3997
          %v4014 = vmul.f32 %v3950, %v3998
          %v4015 = vmul.f32 %v3951, %v3999
          %v4016 = vmul.f32 %v3952, %v4000
          %v4017 = vmul.f32 %v3953, %v4001
          %v4018 = vmul.f32 %v3954, %v4002
          %v4019 = vmul.f32 %v3955, %v4003
          %4020 = vadd.xlane.f32.xlu0 %v4004
          %v4021 = vpop.xlane.xlu0 %4020
          %4022 = vadd.xlane.f32.xlu0 %v4005
          %v4023 = vpop.xlane.xlu0 %4022
          %4024 = vadd.xlane.f32.xlu0 %v4006
          %v4025 = vpop.xlane.xlu0 %4024
          %4026 = vadd.xlane.f32.xlu0 %v4007
          %v4027 = vpop.xlane.xlu0 %4026
          %4028 = vadd.xlane.f32.xlu0 %v4008
          %v4029 = vpop.xlane.xlu0 %4028
          %4030 = vadd.xlane.f32.xlu0 %v4009
          %v4031 = vpop.xlane.xlu0 %4030
          %4032 = vadd.xlane.f32.xlu0 %v4010
          %v4033 = vpop.xlane.xlu0 %4032
          %4034 = vadd.xlane.f32.xlu0 %v4011
          %v4035 = vpop.xlane.xlu0 %4034
          %4036 = vadd.xlane.f32.xlu0 %v4012
          %v4037 = vpop.xlane.xlu0 %4036
          %4038 = vadd.xlane.f32.xlu0 %v4013
          %v4039 = vpop.xlane.xlu0 %4038
          %4040 = vadd.xlane.f32.xlu0 %v4014
          %v4041 = vpop.xlane.xlu0 %4040
          %4042 = vadd.xlane.f32.xlu0 %v4015
          %v4043 = vpop.xlane.xlu0 %4042
          %4044 = vadd.xlane.f32.xlu0 %v4016
          %v4045 = vpop.xlane.xlu0 %4044
          %4046 = vadd.xlane.f32.xlu0 %v4017
          %v4047 = vpop.xlane.xlu0 %4046
          %4048 = vadd.xlane.f32.xlu0 %v4018
          %v4049 = vpop.xlane.xlu0 %4048
          %4050 = vadd.xlane.f32.xlu0 %v4019
          %v4051 = vpop.xlane.xlu0 %4050
          %v4052 = vmul.f32 %v4021, 0.015625
          %v4053 = vmul.f32 %v4023, 0.015625
          %v4054 = vmul.f32 %v4025, 0.015625
          %v4055 = vmul.f32 %v4027, 0.015625
          %v4056 = vmul.f32 %v4029, 0.015625
          %v4057 = vmul.f32 %v4031, 0.015625
          %v4058 = vmul.f32 %v4033, 0.015625
          %v4059 = vmul.f32 %v4035, 0.015625
          %v4060 = vmul.f32 %v4037, 0.015625
          %v4061 = vmul.f32 %v4039, 0.015625
          %v4062 = vmul.f32 %v4041, 0.015625
          %v4063 = vmul.f32 %v4043, 0.015625
          %v4064 = vmul.f32 %v4045, 0.015625
          %v4065 = vmul.f32 %v4047, 0.015625
          %v4066 = vmul.f32 %v4049, 0.015625
          %v4067 = vmul.f32 %v4051, 0.015625
          %v4068 = vmul.f32 %v4004, %v4004
          %v4069 = vmul.f32 %v4005, %v4005
          %v4070 = vmul.f32 %v4006, %v4006
          %v4071 = vmul.f32 %v4007, %v4007
          %v4072 = vmul.f32 %v4008, %v4008
          %v4073 = vmul.f32 %v4009, %v4009
          %v4074 = vmul.f32 %v4010, %v4010
          %v4075 = vmul.f32 %v4011, %v4011
          %v4076 = vmul.f32 %v4012, %v4012
          %v4077 = vmul.f32 %v4013, %v4013
          %v4078 = vmul.f32 %v4014, %v4014
          %v4079 = vmul.f32 %v4015, %v4015
          %v4080 = vmul.f32 %v4016, %v4016
          %v4081 = vmul.f32 %v4017, %v4017
          %v4082 = vmul.f32 %v4018, %v4018
          %v4083 = vmul.f32 %v4019, %v4019
          %4084 = vadd.xlane.f32.xlu0 %v4068
          %v4085 = vpop.xlane.xlu0 %4084
          %4086 = vadd.xlane.f32.xlu0 %v4069
          %v4087 = vpop.xlane.xlu0 %4086
          %4088 = vadd.xlane.f32.xlu0 %v4070
          %v4089 = vpop.xlane.xlu0 %4088
          %4090 = vadd.xlane.f32.xlu0 %v4071
          %v4091 = vpop.xlane.xlu0 %4090
          %4092 = vadd.xlane.f32.xlu0 %v4072
          %v4093 = vpop.xlane.xlu0 %4092
          %4094 = vadd.xlane.f32.xlu0 %v4073
          %v4095 = vpop.xlane.xlu0 %4094
          %4096 = vadd.xlane.f32.xlu0 %v4074
          %v4097 = vpop.xlane.xlu0 %4096
          %4098 = vadd.xlane.f32.xlu0 %v4075
          %v4099 = vpop.xlane.xlu0 %4098
          %4100 = vadd.xlane.f32.xlu0 %v4076
          %v4101 = vpop.xlane.xlu0 %4100
          %4102 = vadd.xlane.f32.xlu0 %v4077
          %v4103 = vpop.xlane.xlu0 %4102
          %4104 = vadd.xlane.f32.xlu0 %v4078
          %v4105 = vpop.xlane.xlu0 %4104
          %4106 = vadd.xlane.f32.xlu0 %v4079
          %v4107 = vpop.xlane.xlu0 %4106
          %4108 = vadd.xlane.f32.xlu0 %v4080
          %v4109 = vpop.xlane.xlu0 %4108
          %4110 = vadd.xlane.f32.xlu0 %v4081
          %v4111 = vpop.xlane.xlu0 %4110
          %4112 = vadd.xlane.f32.xlu0 %v4082
          %v4113 = vpop.xlane.xlu0 %4112
          %4114 = vadd.xlane.f32.xlu0 %v4083
          %v4115 = vpop.xlane.xlu0 %4114
          %v4116 = vmul.f32 %v4085, 0.015625
          %v4117 = vmul.f32 %v4087, 0.015625
          %v4118 = vmul.f32 %v4089, 0.015625
          %v4119 = vmul.f32 %v4091, 0.015625
          %v4120 = vmul.f32 %v4093, 0.015625
          %v4121 = vmul.f32 %v4095, 0.015625
          %v4122 = vmul.f32 %v4097, 0.015625
          %v4123 = vmul.f32 %v4099, 0.015625
          %v4124 = vmul.f32 %v4101, 0.015625
          %v4125 = vmul.f32 %v4103, 0.015625
          %v4126 = vmul.f32 %v4105, 0.015625
          %v4127 = vmul.f32 %v4107, 0.015625
          %v4128 = vmul.f32 %v4109, 0.015625
          %v4129 = vmul.f32 %v4111, 0.015625
          %v4130 = vmul.f32 %v4113, 0.015625
          %v4131 = vmul.f32 %v4115, 0.015625
          %v4132 = vmul.f32 %v4052, %v4052
          %v4133 = vmul.f32 %v4053, %v4053
          %v4134 = vmul.f32 %v4054, %v4054
          %v4135 = vmul.f32 %v4055, %v4055
          %v4136 = vmul.f32 %v4056, %v4056
          %v4137 = vmul.f32 %v4057, %v4057
          %v4138 = vmul.f32 %v4058, %v4058
          %v4139 = vmul.f32 %v4059, %v4059
          %v4140 = vmul.f32 %v4060, %v4060
          %v4141 = vmul.f32 %v4061, %v4061
          %v4142 = vmul.f32 %v4062, %v4062
          %v4143 = vmul.f32 %v4063, %v4063
          %v4144 = vmul.f32 %v4064, %v4064
          %v4145 = vmul.f32 %v4065, %v4065
          %v4146 = vmul.f32 %v4066, %v4066
          %v4147 = vmul.f32 %v4067, %v4067
          %v4148 = vsub.f32 %v4116, %v4132
          %v4149 = vsub.f32 %v4117, %v4133
          %v4150 = vsub.f32 %v4118, %v4134
          %v4151 = vsub.f32 %v4119, %v4135
          %v4152 = vsub.f32 %v4120, %v4136
          %v4153 = vsub.f32 %v4121, %v4137
          %v4154 = vsub.f32 %v4122, %v4138
          %v4155 = vsub.f32 %v4123, %v4139
          %v4156 = vsub.f32 %v4124, %v4140
          %v4157 = vsub.f32 %v4125, %v4141
          %v4158 = vsub.f32 %v4126, %v4142
          %v4159 = vsub.f32 %v4127, %v4143
          %v4160 = vsub.f32 %v4128, %v4144
          %v4161 = vsub.f32 %v4129, %v4145
          %v4162 = vsub.f32 %v4130, %v4146
          %v4163 = vsub.f32 %v4131, %v4147
          %v4164 = vmax.f32 %v4148, 0.0
          %v4165 = vmax.f32 %v4149, 0.0
          %v4166 = vmax.f32 %v4150, 0.0
          %v4167 = vmax.f32 %v4151, 0.0
          %v4168 = vmax.f32 %v4152, 0.0
          %v4169 = vmax.f32 %v4153, 0.0
          %v4170 = vmax.f32 %v4154, 0.0
          %v4171 = vmax.f32 %v4155, 0.0
          %v4172 = vmax.f32 %v4156, 0.0
          %v4173 = vmax.f32 %v4157, 0.0
          %v4174 = vmax.f32 %v4158, 0.0
          %v4175 = vmax.f32 %v4159, 0.0
          %v4176 = vmax.f32 %v4160, 0.0
          %v4177 = vmax.f32 %v4161, 0.0
          %v4178 = vmax.f32 %v4162, 0.0
          %v4179 = vmax.f32 %v4163, 0.0
          %v4180 = vsub.f32 %v4004, %v4052
          %v4181 = vsub.f32 %v4005, %v4053
          %v4182 = vsub.f32 %v4006, %v4054
          %v4183 = vsub.f32 %v4007, %v4055
          %v4184 = vsub.f32 %v4008, %v4056
          %v4185 = vsub.f32 %v4009, %v4057
          %v4186 = vsub.f32 %v4010, %v4058
          %v4187 = vsub.f32 %v4011, %v4059
          %v4188 = vsub.f32 %v4012, %v4060
          %v4189 = vsub.f32 %v4013, %v4061
          %v4190 = vsub.f32 %v4014, %v4062
          %v4191 = vsub.f32 %v4015, %v4063
          %v4192 = vsub.f32 %v4016, %v4064
          %v4193 = vsub.f32 %v4017, %v4065
          %v4194 = vsub.f32 %v4018, %v4066
          %v4195 = vsub.f32 %v4019, %v4067
          %v4196 = vadd.f32 %v4164, 1e-05
          %v4197 = vadd.f32 %v4165, 1e-05
          %v4198 = vadd.f32 %v4166, 1e-05
          %v4199 = vadd.f32 %v4167, 1e-05
          %v4200 = vadd.f32 %v4168, 1e-05
          %v4201 = vadd.f32 %v4169, 1e-05
          %v4202 = vadd.f32 %v4170, 1e-05
          %v4203 = vadd.f32 %v4171, 1e-05
          %v4204 = vadd.f32 %v4172, 1e-05
          %v4205 = vadd.f32 %v4173, 1e-05
          %v4206 = vadd.f32 %v4174, 1e-05
          %v4207 = vadd.f32 %v4175, 1e-05
          %v4208 = vadd.f32 %v4176, 1e-05
          %v4209 = vadd.f32 %v4177, 1e-05
          %v4210 = vadd.f32 %v4178, 1e-05
          %v4211 = vadd.f32 %v4179, 1e-05
          %v4212 = vrsqrt.pop %v4196
          %v4213 = vrsqrt.pop %v4197
          %v4214 = vrsqrt.pop %v4198
          %v4215 = vrsqrt.pop %v4199
          %v4216 = vrsqrt.pop %v4200
          %v4217 = vrsqrt.pop %v4201
          %v4218 = vrsqrt.pop %v4202
          %v4219 = vrsqrt.pop %v4203
          %v4220 = vrsqrt.pop %v4204
          %v4221 = vrsqrt.pop %v4205
          %v4222 = vrsqrt.pop %v4206
          %v4223 = vrsqrt.pop %v4207
          %v4224 = vrsqrt.pop %v4208
          %v4225 = vrsqrt.pop %v4209
          %v4226 = vrsqrt.pop %v4210
          %v4227 = vrsqrt.pop %v4211
          %v4228 = vmul.f32 %v4180, %v4212
          %v4229 = vmul.f32 %v4181, %v4213
          %v4230 = vmul.f32 %v4182, %v4214
          %v4231 = vmul.f32 %v4183, %v4215
          %v4232 = vmul.f32 %v4184, %v4216
          %v4233 = vmul.f32 %v4185, %v4217
          %v4234 = vmul.f32 %v4186, %v4218
          %v4235 = vmul.f32 %v4187, %v4219
          %v4236 = vmul.f32 %v4188, %v4220
          %v4237 = vmul.f32 %v4189, %v4221
          %v4238 = vmul.f32 %v4190, %v4222
          %v4239 = vmul.f32 %v4191, %v4223
          %v4240 = vmul.f32 %v4192, %v4224
          %v4241 = vmul.f32 %v4193, %v4225
          %v4242 = vmul.f32 %v4194, %v4226
          %v4243 = vmul.f32 %v4195, %v4227
          %v4244 = vld [vmem:[%s8] sm:$0x1]
          %v4246 = vlaneseq
          %v4247 = vshrl.u32 %v4246, 7
          %v4248 = vsub.s32 0, %v4247
          %v4249 = vrot.slane %v4244, %v4248
          %v4251 = vmul.f32 %v4228, %v4249
          %v4252 = vmul.f32 %v4229, %v4249
          %v4253 = vmul.f32 %v4230, %v4249
          %v4254 = vmul.f32 %v4231, %v4249
          %v4255 = vmul.f32 %v4232, %v4249
          %v4256 = vmul.f32 %v4233, %v4249
          %v4257 = vmul.f32 %v4234, %v4249
          %v4258 = vmul.f32 %v4235, %v4249
          %v4259 = vmul.f32 %v4236, %v4249
          %v4260 = vmul.f32 %v4237, %v4249
          %v4261 = vmul.f32 %v4238, %v4249
          %v4262 = vmul.f32 %v4239, %v4249
          %v4263 = vmul.f32 %v4240, %v4249
          %v4264 = vmul.f32 %v4241, %v4249
          %v4265 = vmul.f32 %v4242, %v4249
          %v4266 = vmul.f32 %v4243, %v4249
          %v4267 = vld [vmem:[%s9] sm:$0x1]
          %v4269 = vlaneseq
          %v4270 = vshrl.u32 %v4269, 7
          %v4271 = vsub.s32 0, %v4270
          %v4272 = vrot.slane %v4267, %v4271
          %v4274 = vadd.f32 %v4251, %v4272
          %v4275 = vadd.f32 %v4252, %v4272
          %v4276 = vadd.f32 %v4253, %v4272
          %v4277 = vadd.f32 %v4254, %v4272
          %v4278 = vadd.f32 %v4255, %v4272
          %v4279 = vadd.f32 %v4256, %v4272
          %v4280 = vadd.f32 %v4257, %v4272
          %v4281 = vadd.f32 %v4258, %v4272
          %v4282 = vadd.f32 %v4259, %v4272
          %v4283 = vadd.f32 %v4260, %v4272
          %v4284 = vadd.f32 %v4261, %v4272
          %v4285 = vadd.f32 %v4262, %v4272
          %v4286 = vadd.f32 %v4263, %v4272
          %v4287 = vadd.f32 %v4264, %v4272
          %v4288 = vadd.f32 %v4265, %v4272
          %v4289 = vadd.f32 %v4266, %v4272
          %4290 = vst [vmem:[%s434] sm:$0xff] %v4274
          %4291 = vst [vmem:[%s434 + $0x8] sm:$0xff] %v4275
          %4292 = vst [vmem:[%s434 + $0x10] sm:$0xff] %v4276
          %4293 = vst [vmem:[%s434 + $0x18] sm:$0xff] %v4277
          %4294 = vst [vmem:[%s434 + $0x20] sm:$0xff] %v4278
          %4295 = vst [vmem:[%s434 + $0x28] sm:$0xff] %v4279
          %4296 = vst [vmem:[%s434 + $0x30] sm:$0xff] %v4280
          %4297 = vst [vmem:[%s434 + $0x38] sm:$0xff] %v4281
          %4298 = vst [vmem:[%s434 + $0x40] sm:$0xff] %v4282
          %4299 = vst [vmem:[%s434 + $0x48] sm:$0xff] %v4283
          %4300 = vst [vmem:[%s434 + $0x50] sm:$0xff] %v4284
          %4301 = vst [vmem:[%s434 + $0x58] sm:$0xff] %v4285
          %4302 = vst [vmem:[%s434 + $0x60] sm:$0xff] %v4286
          %4303 = vst [vmem:[%s434 + $0x68] sm:$0xff] %v4287
          %4304 = vst [vmem:[%s434 + $0x70] sm:$0xff] %v4288
          %4305 = vst [vmem:[%s434 + $0x78] sm:$0xff] %v4289
        $region102: #{tpu_custom_call.1} parent=85 // pred_fallthru
          _
        %s4306 = sand.u32 %s251, 1
        %s4307 = scalar_lea.sflag [#allocation14], %s4306
        %s4308 = sand.u32 %s251, 1
        %s4309 = smul.addr %s4308, 128
        %s4310 = scalar_lea.vmem [#allocation13], %s4309
        // Predicated region
        $region103: #{tpu_custom_call.1} parent=85 // pred_check
          %p4311 = pneg %p261
        $region104: #{tpu_custom_call.1} parent=85 // pred_check_branch
          %4313 = sbr.rel (%p4311) target = $region106
        $region105: #{tpu_custom_call.1} parent=85 // pred_region
          %s4314 = smul.u32 16, %s38
          %s4316 = ssub.s32 2048, 2048
          %4317 = vsyncadd %s4307, %s4316
          %s4318 = smul.addr %s4314, 128
          %s4319 = scalar_lea.hbm %s10, %s4318
          %s4320 = sshll.u32 %s4310, 4
          %s4321 = int_to_ptr.vmem [resolvable:$true] %s4320
          %4326 = dma.vmem_to_hbm [thread:$0]  %s4321, 2048, %s4319, %s4307, 128, 128, 8
        $region106: #{tpu_custom_call.1} parent=85 // pred_fallthru
          _
      $region86: #{tpu_custom_call.1} parent=5 // pred_fallthru
        _
      %p4327 = scmp.le.s32.totalorder 2, %s29
      // Predicated region
      $region107: #{tpu_custom_call.1} parent=5 // pred_check
        %p4328 = pneg %p4327
      $region108: #{tpu_custom_call.1} parent=5 // pred_check_branch
        %4330 = sbr.rel (%p4328) target = $region110
      $region109: #{tpu_custom_call.1} parent=5 // pred_region
        %s4331 = ssub.s32 %s29, 2
        // Predicated region
        $region111: #{tpu_custom_call.1} parent=109 // pred_check
          %p4332 = pneg %p267
        $region112: #{tpu_custom_call.1} parent=109 // pred_check_branch
          %4334 = sbr.rel (%p4332) target = $region114
        $region113: #{tpu_custom_call.1} parent=109 // pred_region
          %s4335 = sand.u32 %s252, 1
          %s4336 = scalar_lea.sflag [#allocation14], %s4335
          %s4337 = sand.u32 %s252, 1
          %s4338 = smul.addr %s4337, 128
          %s4339 = scalar_lea.vmem [#allocation13], %s4338
          %4340 = dma.done %s4336, 2048
        $region114: #{tpu_custom_call.1} parent=109 // pred_fallthru
          _
      $region110: #{tpu_custom_call.1} parent=5 // pred_fallthru
        _
    $region6: #{tpu_custom_call.1} parent=1 // loop_footer
      %s33 = sadd.s32 1, %s29
    $region7: #{tpu_custom_call.1} parent=1 // loop_footer_branch
      %28 = sbr.rel target = $region3
    $region8: #{tpu_custom_call.1} parent=1 // loop_exit
      _
    %4341 = vsyncpa [#allocation14], 1
    %s4342 = scalar_lea.sflag [#allocation14], 1
    %4343 = vsyncpa %s4342, 1

</llo_original>
